<compile_context>
chip_gen: v5e
topology: v5e:2x2
jax: 0.10.0
libtpu: 0.0.40
codegen_flags: <defaults>
</compile_context>

<pallas_src>
import functools

import jax
import jax.numpy as jnp
from jax.experimental import pallas as pl
from jax.experimental.pallas import tpu as pltpu

IN_EPS = 1e-3   # InstanceNorm2d eps in the module
BN_EPS = 1e-5   # BatchNorm2d default eps

_COMPILER_PARAMS = pltpu.CompilerParams(
    dimension_semantics=("parallel",),      # shard the batch grid across TCs
    vmem_limit_bytes=40 * 1024 * 1024,      # headroom on v7x's 64 MiB VMEM
)


# -----------------------------------------------------------------------------
# In-kernel helpers
# -----------------------------------------------------------------------------
def _dot(a, b):
    """MXU matmul: bf16 operands (weights are pre-cast), f32 accumulation."""
    return jnp.dot(a.astype(jnp.bfloat16), b.astype(jnp.bfloat16),
                   preferred_element_type=jnp.float32)


def _in_affine_relu(x, scale, shift):
    """InstanceNorm over axis 0 (points) + folded BN affine + ReLU.

    One-pass statistics (E[x^2] - mu^2); all math in f32 (v5e has no bf16 VPU).
    """
    mu = jnp.mean(x, axis=0, keepdims=True)
    ex2 = jnp.mean(x * x, axis=0, keepdims=True)
    var = jnp.maximum(ex2 - mu * mu, 0.0)
    xn = (x - mu) * jax.lax.rsqrt(var + IN_EPS)
    return jnp.maximum(xn * scale + shift, 0.0)


# -----------------------------------------------------------------------------
# BlockSpec helpers
# -----------------------------------------------------------------------------
def _batch_spec(shape):
    """(B, P, C) tensor: one batch element per grid step."""
    nd = len(shape)
    return pl.BlockSpec((1,) + tuple(shape[1:]),
                        lambda i, _n=nd: (i,) + (0,) * (_n - 1))


def _param_spec(arr):
    """Parameter broadcast (full array) to every grid step."""
    nd = arr.ndim
    return pl.BlockSpec(tuple(arr.shape), lambda i, _n=nd: (0,) * _n)


# -----------------------------------------------------------------------------
# Kernel 1: conv1 + l1_1 PointCN stack + diff_pool (activation resident in VMEM)
# -----------------------------------------------------------------------------
def _make_l11_pool_kernel(n_layers):
    def kernel(x_ref, vec_ref, wpre_ref, w_ref, wpool_ref, bpool_ref,
               x11_ref, pool_ref):
        xin = x_ref[0]                                     # (N, Cin) f32, Cin tiny
        cin = wpre_ref.shape[0]
        # Input 1x1 conv as per-input-channel FMAs (Cin ~ 4): stays on the VPU, f32.
        x = xin[:, 0:1] * wpre_ref[0:1, :] + vec_ref[0:1, :]
        for c in range(1, cin):
            x = x + xin[:, c:c + 1] * wpre_ref[c:c + 1, :]

        r = 1
        for l in range(n_layers):                          # PointCN stack
            s1 = vec_ref[r:r + 1, :];     t1 = vec_ref[r + 1:r + 2, :]
            b1 = vec_ref[r + 2:r + 3, :]
            s2 = vec_ref[r + 3:r + 4, :]; t2 = vec_ref[r + 4:r + 5, :]
            b2 = vec_ref[r + 5:r + 6, :]
            r += 6
            h = _dot(_in_affine_relu(x, s1, t1), w_ref[2 * l]) + b1
            o = _dot(_in_affine_relu(h, s2, t2), w_ref[2 * l + 1]) + b2
            x = x + o                                      # residual (no shortcut)
        x11_ref[0] = x.astype(jnp.bfloat16)                # bf16 HBM activation

        # diff_pool fused: embed -> softmax over points (axis 0) -> S^T @ x.
        sp = vec_ref[r:r + 1, :]
        tp = vec_ref[r + 1:r + 2, :]
        e = _dot(_in_affine_relu(x, sp, tp), wpool_ref[...]) + bpool_ref[...]
        m = jnp.max(e, axis=0, keepdims=True)
        p = jnp.exp(e - m)
        sm = p / jnp.sum(p, axis=0, keepdims=True)
        # Single in-VMEM transpose so the pooling contraction is on the lhs last
        # dim and runs in bf16 on the MXU (no f32 multi-pass, no hidden transpose).
        pool_ref[0] = _dot(sm.T, x).astype(jnp.bfloat16)   # (K, C)
    return kernel


def l11_pool_call(data, params):
    conv1_w, conv1_b = params["conv1"]
    l11 = params["l1_1"]
    pool = params["down1"]
    B, N, _ = data.shape
    C = conv1_w.shape[1]
    L = len(l11)
    K = pool["conv"][0].shape[1]

    rows, ws = [conv1_b], []
    for p in l11:
        s1, t1 = p["bn1"]; w1, b1 = p["conv1"]
        s2, t2 = p["bn2"]; w2, b2 = p["conv2"]
        rows += [s1, t1, b1, s2, t2, b2]
        ws += [w1, w2]
    sp, tp = pool["bn"]
    rows += [sp, tp]

    vec_c = jnp.stack(rows, axis=0).astype(jnp.float32)        # (3 + 6L, C)
    w_stack = jnp.stack(ws, axis=0).astype(jnp.bfloat16)       # (2L, C, C)
    wpre = conv1_w.astype(jnp.float32)                         # (Cin, C)
    wpool = pool["conv"][0].astype(jnp.bfloat16)               # (C, K)
    bpool = pool["conv"][1].reshape(1, K).astype(jnp.float32)

    inputs = [data, vec_c, wpre, w_stack, wpool, bpool]
    in_specs = [_batch_spec(data.shape)] + [_param_spec(a) for a in inputs[1:]]
    out_shape = (jax.ShapeDtypeStruct((B, N, C), jnp.bfloat16),
                 jax.ShapeDtypeStruct((B, K, C), jnp.bfloat16))
    out_specs = (_batch_spec((B, N, C)), _batch_spec((B, K, C)))

    return pl.pallas_call(
        _make_l11_pool_kernel(L),
        grid=(B,),
        in_specs=in_specs,
        out_specs=out_specs,
        out_shape=out_shape,
        compiler_params=_COMPILER_PARAMS,
    )(*inputs)


# -----------------------------------------------------------------------------
# Kernel 2: l2 OAFilter stack (transpose-free; conv2 evaluated in (K, C) layout)
# -----------------------------------------------------------------------------
def _make_l2_kernel(n_layers):
    def kernel(x_ref, vecc_ref, veck_ref, wcc_ref, wkk_ref, o_ref):
        x = x_ref[0].astype(jnp.float32)                   # (K, C)
        for l in range(n_layers):
            r = 6 * l
            s1 = vecc_ref[r:r + 1, :];     t1 = vecc_ref[r + 1:r + 2, :]
            b1 = vecc_ref[r + 2:r + 3, :]
            s3 = vecc_ref[r + 3:r + 4, :]; t3 = vecc_ref[r + 4:r + 5, :]
            b3 = vecc_ref[r + 5:r + 6, :]
            s2 = veck_ref[:, 3 * l:3 * l + 1]              # (K, 1) per-point affine
            t2 = veck_ref[:, 3 * l + 1:3 * l + 2]
            b2 = veck_ref[:, 3 * l + 2:3 * l + 3]

            o1 = _dot(_in_affine_relu(x, s1, t1), wcc_ref[2 * l]) + b1
            # conv2 acts on the trans(1,2) view; evaluated directly in (K, C):
            #   y[k, c] = sum_j W2[j, k] * relu(s2[j]*o1[j, c] + t2[j]) + b2[k]
            a = jnp.maximum(o1 * s2 + t2, 0.0)
            o2 = o1 + _dot(wkk_ref[l], a) + b2
            o3 = _dot(_in_affine_relu(o2, s3, t3), wcc_ref[2 * l + 1]) + b3
            x = x + o3                                     # residual
        o_ref[0] = x.astype(jnp.bfloat16)
    return kernel


def l2_call(x_pool, params):
    l2 = params["l2"]
    B, K, C = x_pool.shape
    L = len(l2)

    rows_c, cols_k, wcc, wkk = [], [], [], []
    for p in l2:
        s1, t1 = p["bn1"]; w1, b1 = p["conv1"]
        s2, t2 = p["bn2"]; w2, b2 = p["conv2"]
        s3, t3 = p["bn3"]; w3, b3 = p["conv3"]
        rows_c += [s1, t1, b1, s3, t3, b3]
        cols_k += [s2, t2, b2]
        wcc += [w1, w3]
        wkk += [w2.T]      # y = W2^T @ a in (K, C) layout

    vec_c = jnp.stack(rows_c, axis=0).astype(jnp.float32)      # (6L, C)
    vec_k = jnp.stack(cols_k, axis=1).astype(jnp.float32)      # (K, 3L)
    w_cc = jnp.stack(wcc, axis=0).astype(jnp.bfloat16)         # (2L, C, C)
    w_kk = jnp.stack(wkk, axis=0).astype(jnp.bfloat16)         # (L, K, K)

    inputs = [x_pool, vec_c, vec_k, w_cc, w_kk]
    in_specs = [_batch_spec(x_pool.shape)] + [_param_spec(a) for a in inputs[1:]]

    return pl.pallas_call(
        _make_l2_kernel(L),
        grid=(B,),
        in_specs=in_specs,
        out_specs=_batch_spec((B, K, C)),
        out_shape=jax.ShapeDtypeStruct((B, K, C), jnp.bfloat16),
        compiler_params=_COMPILER_PARAMS,
    )(*inputs)


# -----------------------------------------------------------------------------
# Kernel 3: diff_unpool + l1_2 stack + output conv (only logits hit HBM)
# -----------------------------------------------------------------------------
def _make_unpool_l12_out_kernel(n_layers, C):
    def kernel(xa_ref, x2_ref, vecc_ref, vec2c_ref, wup_ref, bup_ref,
               w1w_ref, wcc_ref, o_ref):
        xa = xa_ref[0].astype(jnp.float32)                 # (N, C) = x1_1
        # diff_unpool: softmax over clusters (axis 1); x_up never leaves VMEM.
        e = _dot(_in_affine_relu(xa, vecc_ref[0:1, :], vecc_ref[1:2, :]),
                 wup_ref[...]) + bup_ref[...]
        m = jnp.max(e, axis=1, keepdims=True)
        p = jnp.exp(e - m)
        sm = p / jnp.sum(p, axis=1, keepdims=True)
        xb = _dot(sm, x2_ref[0])                           # (N, C) x_up, f32

        # l1_2[0]: PointCN(2C -> C) on the virtual concat [x1_1, x_up].
        na = _in_affine_relu(xa, vec2c_ref[0:1, :C], vec2c_ref[1:2, :C])
        nb = _in_affine_relu(xb, vec2c_ref[0:1, C:], vec2c_ref[1:2, C:])
        # VMEM-only concat -> one full-width (P,2C)@(2C,C) MXU pass (v6e/v7x).
        # TODO(synk): on v5e two per-branch (P,C)@(C,C) matmuls would skip this copy.
        ncat = jnp.concatenate([na, nb], axis=1)
        b1 = vecc_ref[2:3, :]
        s2 = vecc_ref[3:4, :]; t2 = vecc_ref[4:5, :]; b2 = vecc_ref[5:6, :]
        bs = vecc_ref[6:7, :]
        h = _dot(ncat, w1w_ref[...]) + b1
        o = _dot(_in_affine_relu(h, s2, t2), wcc_ref[0]) + b2
        res = _dot(xa, wcc_ref[1]) + _dot(xb, wcc_ref[2]) + bs   # split shortcut
        x = o + res

        r, wi = 7, 3
        for _ in range(1, n_layers):                       # remaining PointCNs
            s1 = vecc_ref[r:r + 1, :];     t1 = vecc_ref[r + 1:r + 2, :]
            b1 = vecc_ref[r + 2:r + 3, :]
            s2 = vecc_ref[r + 3:r + 4, :]; t2 = vecc_ref[r + 4:r + 5, :]
            b2 = vecc_ref[r + 5:r + 6, :]
            r += 6
            h = _dot(_in_affine_relu(x, s1, t1), wcc_ref[wi]) + b1
            o = _dot(_in_affine_relu(h, s2, t2), wcc_ref[wi + 1]) + b2
            x = x + o
            wi += 2

        # Output 1x1 conv (Cout=1) fused: lane-dense (1, N) logits row in f32.
        wout = vecc_ref[r:r + 1, :]                        # (1, C)
        bout = vecc_ref[r + 1:r + 2, 0:1]                  # (1, 1)
        y = jax.lax.dot_general(wout, x, (((1,), (1,)), ((), ())),
                                preferred_element_type=jnp.float32)
        o_ref[0] = y + bout
    return kernel


def unpool_l12_out_call(x1_1, x2, params):
    up = params["up1"]
    l12 = params["l1_2"]
    wout, bout = params["output"]
    B, N, C = x1_1.shape
    K = x2.shape[1]
    L = len(l12)

    su, tu = up["bn"]
    wup = up["conv"][0].astype(jnp.bfloat16)                   # (C, K)
    bup = up["conv"][1].reshape(1, K).astype(jnp.float32)

    p0 = l12[0]
    s1_0, t1_0 = p0["bn1"]                                     # (2C,)
    w1_0, b1_0 = p0["conv1"]                                   # (2C, C), (C,)
    s2_0, t2_0 = p0["bn2"]
    w2_0, b2_0 = p0["conv2"]
    ws_0, bs_0 = p0["shortcut"]                                # (2C, C), (C,)

    rows = [su, tu, b1_0, s2_0, t2_0, b2_0, bs_0]
    wcc = [w2_0, ws_0[:C], ws_0[C:]]
    for p in l12[1:]:
        s1, t1 = p["bn1"]; w1, b1 = p["conv1"]
        s2, t2 = p["bn2"]; w2, b2 = p["conv2"]
        rows += [s1, t1, b1, s2, t2, b2]
        wcc += [w1, w2]
    rows += [wout.reshape(-1), jnp.full((C,), bout[0], jnp.float32)]

    vec_c = jnp.stack(rows, axis=0).astype(jnp.float32)        # (9 + 6(L-1), C)
    vec_2c = jnp.stack([s1_0, t1_0], axis=0).astype(jnp.float32)   # (2, 2C)
    w1w = w1_0.astype(jnp.bfloat16)                            # (2C, C)
    w_cc = jnp.stack(wcc, axis=0).astype(jnp.bfloat16)         # (3 + 2(L-1), C, C)

    inputs = [x1_1, x2, vec_c, vec_2c, wup, bup, w1w, w_cc]
    in_specs = ([_batch_spec(x1_1.shape), _batch_spec(x2.shape)]
                + [_param_spec(a) for a in inputs[2:]])

    return pl.pallas_call(
        _make_unpool_l12_out_kernel(L, C),
        grid=(B,),
        in_specs=in_specs,
        out_specs=pl.BlockSpec((1, 1, N), lambda i: (i, 0, 0)),
        out_shape=jax.ShapeDtypeStruct((B, 1, N), jnp.float32),
        compiler_params=_COMPILER_PARAMS,
    )(*inputs)


# -----------------------------------------------------------------------------
# Parameter init (deterministic, synthetic)
# -----------------------------------------------------------------------------
def _init_conv(key, cin, cout):
    k1, k2 = jax.random.split(key)
    w = jax.random.normal(k1, (cin, cout), jnp.float32) * (1.0 / jnp.sqrt(cin))
    b = jax.random.normal(k2, (cout,), jnp.float32) * 0.05
    return w, b


def _init_bn(key, c):
    # BatchNorm2d eval mode, running_mean=0, running_var=1, eps=1e-5,
    # folded to per-channel scale/shift.
    k1, k2 = jax.random.split(key)
    gamma = 1.0 + 0.1 * jax.random.normal(k1, (c,), jnp.float32)
    beta = 0.1 * jax.random.normal(k2, (c,), jnp.float32)
    return gamma / jnp.sqrt(1.0 + BN_EPS), beta


def _init_pointcn(key, cin, cout):
    ks = jax.random.split(key, 5)
    return {
        "bn1": _init_bn(ks[0], cin),
        "conv1": _init_conv(ks[1], cin, cout),
        "bn2": _init_bn(ks[2], cout),
        "conv2": _init_conv(ks[3], cout, cout),
        "shortcut": _init_conv(ks[4], cin, cout) if cin != cout else None,
    }


def _init_oafilter(key, c, k_pts):
    ks = jax.random.split(key, 6)
    return {
        "bn1": _init_bn(ks[0], c),
        "conv1": _init_conv(ks[1], c, c),
        "bn2": _init_bn(ks[2], k_pts),
        "conv2": _init_conv(ks[3], k_pts, k_pts),
        "bn3": _init_bn(ks[4], c),
        "conv3": _init_conv(ks[5], c, c),
    }


def _init_pool(key, cin, k_pts):
    k1, k2 = jax.random.split(key)
    return {"bn": _init_bn(k1, cin), "conv": _init_conv(k2, cin, k_pts)}


def init_oanblock(key, net_channels, input_channel, depth, clusters):
    assert depth >= 2, "OANBlock needs depth >= 2"
    n_half = depth // 2
    keys = iter(jax.random.split(key, 8 + 3 * n_half))
    return {
        "conv1": _init_conv(next(keys), input_channel, net_channels),
        "l1_1": [_init_pointcn(next(keys), net_channels, net_channels)
                 for _ in range(n_half)],
        "down1": _init_pool(next(keys), net_channels, clusters),
        "l2": [_init_oafilter(next(keys), net_channels, clusters)
               for _ in range(n_half)],
        "up1": _init_pool(next(keys), net_channels, clusters),
        "l1_2": [_init_pointcn(next(keys), 2 * net_channels, net_channels)]
                + [_init_pointcn(next(keys), net_channels, net_channels)
                   for _ in range(n_half - 1)],
        "output": _init_conv(next(keys), net_channels, 1),
    }


# -----------------------------------------------------------------------------
# OANBlock forward: three fused Pallas kernels
# -----------------------------------------------------------------------------
def oanblock_forward(params, data):
    """data: (B, N, Cin) in (B, P, C) layout.  Returns logits (B, 1, N)."""
    x1_1, x_pool = l11_pool_call(data, params)        # conv1 + l1_1 + diff_pool
    x2 = l2_call(x_pool, params)                      # l2 OAFilter stack
    return unpool_l12_out_call(x1_1, x2, params)      # unpool + l1_2 + output


# -----------------------------------------------------------------------------
if __name__ == "__main__":
    B, input_channel, num_pts = 2, 4, 16              # B even: balances v7x's 2 TCs
    net_channels, depth, clusters = 32, 4, 8

    key = jax.random.PRNGKey(0)
    pkey, dkey = jax.random.split(key)
    params = init_oanblock(pkey, net_channels, input_channel, depth, clusters)

    # PyTorch input would be (B, input_channel, num_pts, 1); kernel layout (B, N, C).
    data = jax.random.normal(dkey, (B, num_pts, input_channel), jnp.float32)

    fwd = jax.jit(functools.partial(oanblock_forward, params))
    logits = jax.block_until_ready(fwd(data))

    assert logits.shape == (B, 1, num_pts), logits.shape
    assert bool(jnp.all(jnp.isfinite(logits)))
    print("KERNEL_OK")
</pallas_src>

<mosaic_0001>
module attributes {stable_mosaic.version = 11 : i64} {
  func.func @kernel(%arg0: i32, %arg1: memref<1x16x4xf32, #tpu.memory_space<vmem>>, %arg2: memref<15x32xf32, #tpu.memory_space<vmem>>, %arg3: memref<4x32xf32, #tpu.memory_space<vmem>>, %arg4: memref<4x32x32xbf16, #tpu.memory_space<vmem>>, %arg5: memref<32x8xbf16, #tpu.memory_space<vmem>>, %arg6: memref<1x8xf32, #tpu.memory_space<vmem>>, %arg7: memref<1x16x32xbf16, #tpu.memory_space<vmem>>, %arg8: memref<1x8x32xbf16, #tpu.memory_space<vmem>>) attributes {dimension_semantics = [#tpu.dimension_semantics<parallel>], iteration_bounds = array<i64: 2>, scalar_prefetch = 0 : i64, scratch_operands = 0 : i64, tpu.core_type = #tpu.core_type<tc>, window_params = [{transform_indices = @transform_0, window_bounds = array<i64: 1, 16, 4>}, {pipeline_mode = #tpu.pipeline_mode<synchronous>, transform_indices = @transform_1, window_bounds = array<i64: 15, 32>}, {pipeline_mode = #tpu.pipeline_mode<synchronous>, transform_indices = @transform_2, window_bounds = array<i64: 4, 32>}, {pipeline_mode = #tpu.pipeline_mode<synchronous>, transform_indices = @transform_3, window_bounds = array<i64: 4, 32, 32>}, {pipeline_mode = #tpu.pipeline_mode<synchronous>, transform_indices = @transform_4, window_bounds = array<i64: 32, 8>}, {pipeline_mode = #tpu.pipeline_mode<synchronous>, transform_indices = @transform_5, window_bounds = array<i64: 1, 8>}, {transform_indices = @transform_6, window_bounds = array<i64: 1, 16, 32>}, {transform_indices = @transform_7, window_bounds = array<i64: 1, 8, 32>}]} {
    %c0 = arith.constant 0 : index
    %c0_0 = arith.constant 0 : index
    %c0_1 = arith.constant 0 : index
    %0 = vector.load %arg1[%c0, %c0_0, %c0_1] : memref<1x16x4xf32, #tpu.memory_space<vmem>>, vector<1x16x4xf32>
    %1 = vector.shape_cast %0 : vector<1x16x4xf32> to vector<16x4xf32>
    %2 = vector.extract_strided_slice %1 {offsets = [0, 0], sizes = [16, 1], strides = [1, 1]} : vector<16x4xf32> to vector<16x1xf32>
    %c0_2 = arith.constant 0 : index
    %c0_3 = arith.constant 0 : index
    %3 = vector.load %arg3[%c0_2, %c0_3] : memref<4x32xf32, #tpu.memory_space<vmem>>, vector<1x32xf32>
    %4 = vector.broadcast %2 : vector<16x1xf32> to vector<16x32xf32>
    %5 = vector.broadcast %3 : vector<1x32xf32> to vector<16x32xf32>
    %6 = arith.mulf %4, %5 : vector<16x32xf32>
    %c0_4 = arith.constant 0 : index
    %c0_5 = arith.constant 0 : index
    %7 = vector.load %arg2[%c0_4, %c0_5] : memref<15x32xf32, #tpu.memory_space<vmem>>, vector<1x32xf32>
    %8 = vector.broadcast %7 : vector<1x32xf32> to vector<16x32xf32>
    %9 = arith.addf %6, %8 : vector<16x32xf32>
    %10 = vector.extract_strided_slice %1 {offsets = [0, 1], sizes = [16, 1], strides = [1, 1]} : vector<16x4xf32> to vector<16x1xf32>
    %c1 = arith.constant 1 : index
    %c0_6 = arith.constant 0 : index
    %11 = vector.load %arg3[%c1, %c0_6] : memref<4x32xf32, #tpu.memory_space<vmem>>, vector<1x32xf32>
    %12 = vector.broadcast %10 : vector<16x1xf32> to vector<16x32xf32>
    %13 = vector.broadcast %11 : vector<1x32xf32> to vector<16x32xf32>
    %14 = arith.mulf %12, %13 : vector<16x32xf32>
    %15 = arith.addf %9, %14 : vector<16x32xf32>
    %16 = vector.extract_strided_slice %1 {offsets = [0, 2], sizes = [16, 1], strides = [1, 1]} : vector<16x4xf32> to vector<16x1xf32>
    %c2 = arith.constant 2 : index
    %c0_7 = arith.constant 0 : index
    %17 = vector.load %arg3[%c2, %c0_7] : memref<4x32xf32, #tpu.memory_space<vmem>>, vector<1x32xf32>
    %18 = vector.broadcast %16 : vector<16x1xf32> to vector<16x32xf32>
    %19 = vector.broadcast %17 : vector<1x32xf32> to vector<16x32xf32>
    %20 = arith.mulf %18, %19 : vector<16x32xf32>
    %21 = arith.addf %15, %20 : vector<16x32xf32>
    %22 = vector.extract_strided_slice %1 {offsets = [0, 3], sizes = [16, 1], strides = [1, 1]} : vector<16x4xf32> to vector<16x1xf32>
    %c3 = arith.constant 3 : index
    %c0_8 = arith.constant 0 : index
    %23 = vector.load %arg3[%c3, %c0_8] : memref<4x32xf32, #tpu.memory_space<vmem>>, vector<1x32xf32>
    %24 = vector.broadcast %22 : vector<16x1xf32> to vector<16x32xf32>
    %25 = vector.broadcast %23 : vector<1x32xf32> to vector<16x32xf32>
    %26 = arith.mulf %24, %25 : vector<16x32xf32>
    %27 = arith.addf %21, %26 : vector<16x32xf32>
    %c1_9 = arith.constant 1 : index
    %c0_10 = arith.constant 0 : index
    %28 = vector.load %arg2[%c1_9, %c0_10] : memref<15x32xf32, #tpu.memory_space<vmem>>, vector<1x32xf32>
    %c2_11 = arith.constant 2 : index
    %c0_12 = arith.constant 0 : index
    %29 = vector.load %arg2[%c2_11, %c0_12] : memref<15x32xf32, #tpu.memory_space<vmem>>, vector<1x32xf32>
    %c3_13 = arith.constant 3 : index
    %c0_14 = arith.constant 0 : index
    %30 = vector.load %arg2[%c3_13, %c0_14] : memref<15x32xf32, #tpu.memory_space<vmem>>, vector<1x32xf32>
    %c4 = arith.constant 4 : index
    %c0_15 = arith.constant 0 : index
    %31 = vector.load %arg2[%c4, %c0_15] : memref<15x32xf32, #tpu.memory_space<vmem>>, vector<1x32xf32>
    %c5 = arith.constant 5 : index
    %c0_16 = arith.constant 0 : index
    %32 = vector.load %arg2[%c5, %c0_16] : memref<15x32xf32, #tpu.memory_space<vmem>>, vector<1x32xf32>
    %c6 = arith.constant 6 : index
    %c0_17 = arith.constant 0 : index
    %33 = vector.load %arg2[%c6, %c0_17] : memref<15x32xf32, #tpu.memory_space<vmem>>, vector<1x32xf32>
    %cst = arith.constant dense<0.000000e+00> : vector<32xf32>
    %34 = vector.multi_reduction <add>, %27, %cst [0] : vector<16x32xf32> to vector<32xf32>
    %35 = vector.shape_cast %34 : vector<32xf32> to vector<1x32xf32>
    %cst_18 = arith.constant 1.600000e+01 : f32
    %36 = vector.broadcast %cst_18 : f32 to vector<1x32xf32>
    %37 = arith.divf %35, %36 : vector<1x32xf32>
    %38 = arith.mulf %27, %27 : vector<16x32xf32>
    %cst_19 = arith.constant dense<0.000000e+00> : vector<32xf32>
    %39 = vector.multi_reduction <add>, %38, %cst_19 [0] : vector<16x32xf32> to vector<32xf32>
    %40 = vector.shape_cast %39 : vector<32xf32> to vector<1x32xf32>
    %cst_20 = arith.constant 1.600000e+01 : f32
    %41 = vector.broadcast %cst_20 : f32 to vector<1x32xf32>
    %42 = arith.divf %40, %41 : vector<1x32xf32>
    %43 = arith.mulf %37, %37 : vector<1x32xf32>
    %44 = arith.subf %42, %43 : vector<1x32xf32>
    %cst_21 = arith.constant 0.000000e+00 : f32
    %45 = vector.broadcast %cst_21 : f32 to vector<1x32xf32>
    %46 = arith.maximumf %44, %45 : vector<1x32xf32>
    %47 = vector.broadcast %37 : vector<1x32xf32> to vector<16x32xf32>
    %48 = arith.subf %27, %47 : vector<16x32xf32>
    %cst_22 = arith.constant 1.000000e-03 : f32
    %49 = vector.broadcast %cst_22 : f32 to vector<1x32xf32>
    %50 = arith.addf %46, %49 : vector<1x32xf32>
    %51 = math.rsqrt %50 : vector<1x32xf32>
    %52 = vector.broadcast %51 : vector<1x32xf32> to vector<16x32xf32>
    %53 = arith.mulf %48, %52 : vector<16x32xf32>
    %54 = vector.broadcast %28 : vector<1x32xf32> to vector<16x32xf32>
    %55 = arith.mulf %53, %54 : vector<16x32xf32>
    %56 = vector.broadcast %29 : vector<1x32xf32> to vector<16x32xf32>
    %57 = arith.addf %55, %56 : vector<16x32xf32>
    %cst_23 = arith.constant 0.000000e+00 : f32
    %58 = vector.broadcast %cst_23 : f32 to vector<16x32xf32>
    %59 = arith.maximumf %57, %58 : vector<16x32xf32>
    %c0_24 = arith.constant 0 : index
    %c0_25 = arith.constant 0 : index
    %c0_26 = arith.constant 0 : index
    %60 = vector.load %arg4[%c0_24, %c0_25, %c0_26] : memref<4x32x32xbf16, #tpu.memory_space<vmem>>, vector<1x32x32xbf16>
    %61 = vector.shape_cast %60 : vector<1x32x32xbf16> to vector<32x32xbf16>
    %62 = arith.truncf %59 : vector<16x32xf32> to vector<16x32xbf16>
    %cst_27 = arith.constant dense<0.000000e+00> : vector<16x32xf32>
    %63 = tpu.matmul %62, %61, %cst_27 {dimension_numbers = #tpu.dot_dimension_numbers<[1], [0], [0], [1], [0, 0, 1, 1], [], []>} : vector<16x32xbf16>, vector<32x32xbf16>, vector<16x32xf32> -> vector<16x32xf32>
    %64 = vector.broadcast %30 : vector<1x32xf32> to vector<16x32xf32>
    %65 = arith.addf %63, %64 : vector<16x32xf32>
    %cst_28 = arith.constant dense<0.000000e+00> : vector<32xf32>
    %66 = vector.multi_reduction <add>, %65, %cst_28 [0] : vector<16x32xf32> to vector<32xf32>
    %67 = vector.shape_cast %66 : vector<32xf32> to vector<1x32xf32>
    %cst_29 = arith.constant 1.600000e+01 : f32
    %68 = vector.broadcast %cst_29 : f32 to vector<1x32xf32>
    %69 = arith.divf %67, %68 : vector<1x32xf32>
    %70 = arith.mulf %65, %65 : vector<16x32xf32>
    %cst_30 = arith.constant dense<0.000000e+00> : vector<32xf32>
    %71 = vector.multi_reduction <add>, %70, %cst_30 [0] : vector<16x32xf32> to vector<32xf32>
    %72 = vector.shape_cast %71 : vector<32xf32> to vector<1x32xf32>
    %cst_31 = arith.constant 1.600000e+01 : f32
    %73 = vector.broadcast %cst_31 : f32 to vector<1x32xf32>
    %74 = arith.divf %72, %73 : vector<1x32xf32>
    %75 = arith.mulf %69, %69 : vector<1x32xf32>
    %76 = arith.subf %74, %75 : vector<1x32xf32>
    %cst_32 = arith.constant 0.000000e+00 : f32
    %77 = vector.broadcast %cst_32 : f32 to vector<1x32xf32>
    %78 = arith.maximumf %76, %77 : vector<1x32xf32>
    %79 = vector.broadcast %69 : vector<1x32xf32> to vector<16x32xf32>
    %80 = arith.subf %65, %79 : vector<16x32xf32>
    %cst_33 = arith.constant 1.000000e-03 : f32
    %81 = vector.broadcast %cst_33 : f32 to vector<1x32xf32>
    %82 = arith.addf %78, %81 : vector<1x32xf32>
    %83 = math.rsqrt %82 : vector<1x32xf32>
    %84 = vector.broadcast %83 : vector<1x32xf32> to vector<16x32xf32>
    %85 = arith.mulf %80, %84 : vector<16x32xf32>
    %86 = vector.broadcast %31 : vector<1x32xf32> to vector<16x32xf32>
    %87 = arith.mulf %85, %86 : vector<16x32xf32>
    %88 = vector.broadcast %32 : vector<1x32xf32> to vector<16x32xf32>
    %89 = arith.addf %87, %88 : vector<16x32xf32>
    %cst_34 = arith.constant 0.000000e+00 : f32
    %90 = vector.broadcast %cst_34 : f32 to vector<16x32xf32>
    %91 = arith.maximumf %89, %90 : vector<16x32xf32>
    %c1_35 = arith.constant 1 : index
    %c0_36 = arith.constant 0 : index
    %c0_37 = arith.constant 0 : index
    %92 = vector.load %arg4[%c1_35, %c0_36, %c0_37] : memref<4x32x32xbf16, #tpu.memory_space<vmem>>, vector<1x32x32xbf16>
    %93 = vector.shape_cast %92 : vector<1x32x32xbf16> to vector<32x32xbf16>
    %94 = arith.truncf %91 : vector<16x32xf32> to vector<16x32xbf16>
    %cst_38 = arith.constant dense<0.000000e+00> : vector<16x32xf32>
    %95 = tpu.matmul %94, %93, %cst_38 {dimension_numbers = #tpu.dot_dimension_numbers<[1], [0], [0], [1], [0, 0, 1, 1], [], []>} : vector<16x32xbf16>, vector<32x32xbf16>, vector<16x32xf32> -> vector<16x32xf32>
    %96 = vector.broadcast %33 : vector<1x32xf32> to vector<16x32xf32>
    %97 = arith.addf %95, %96 : vector<16x32xf32>
    %98 = arith.addf %27, %97 : vector<16x32xf32>
    %c7 = arith.constant 7 : index
    %c0_39 = arith.constant 0 : index
    %99 = vector.load %arg2[%c7, %c0_39] : memref<15x32xf32, #tpu.memory_space<vmem>>, vector<1x32xf32>
    %c8 = arith.constant 8 : index
    %c0_40 = arith.constant 0 : index
    %100 = vector.load %arg2[%c8, %c0_40] : memref<15x32xf32, #tpu.memory_space<vmem>>, vector<1x32xf32>
    %c9 = arith.constant 9 : index
    %c0_41 = arith.constant 0 : index
    %101 = vector.load %arg2[%c9, %c0_41] : memref<15x32xf32, #tpu.memory_space<vmem>>, vector<1x32xf32>
    %c10 = arith.constant 10 : index
    %c0_42 = arith.constant 0 : index
    %102 = vector.load %arg2[%c10, %c0_42] : memref<15x32xf32, #tpu.memory_space<vmem>>, vector<1x32xf32>
    %c11 = arith.constant 11 : index
    %c0_43 = arith.constant 0 : index
    %103 = vector.load %arg2[%c11, %c0_43] : memref<15x32xf32, #tpu.memory_space<vmem>>, vector<1x32xf32>
    %c12 = arith.constant 12 : index
    %c0_44 = arith.constant 0 : index
    %104 = vector.load %arg2[%c12, %c0_44] : memref<15x32xf32, #tpu.memory_space<vmem>>, vector<1x32xf32>
    %cst_45 = arith.constant dense<0.000000e+00> : vector<32xf32>
    %105 = vector.multi_reduction <add>, %98, %cst_45 [0] : vector<16x32xf32> to vector<32xf32>
    %106 = vector.shape_cast %105 : vector<32xf32> to vector<1x32xf32>
    %cst_46 = arith.constant 1.600000e+01 : f32
    %107 = vector.broadcast %cst_46 : f32 to vector<1x32xf32>
    %108 = arith.divf %106, %107 : vector<1x32xf32>
    %109 = arith.mulf %98, %98 : vector<16x32xf32>
    %cst_47 = arith.constant dense<0.000000e+00> : vector<32xf32>
    %110 = vector.multi_reduction <add>, %109, %cst_47 [0] : vector<16x32xf32> to vector<32xf32>
    %111 = vector.shape_cast %110 : vector<32xf32> to vector<1x32xf32>
    %cst_48 = arith.constant 1.600000e+01 : f32
    %112 = vector.broadcast %cst_48 : f32 to vector<1x32xf32>
    %113 = arith.divf %111, %112 : vector<1x32xf32>
    %114 = arith.mulf %108, %108 : vector<1x32xf32>
    %115 = arith.subf %113, %114 : vector<1x32xf32>
    %cst_49 = arith.constant 0.000000e+00 : f32
    %116 = vector.broadcast %cst_49 : f32 to vector<1x32xf32>
    %117 = arith.maximumf %115, %116 : vector<1x32xf32>
    %118 = vector.broadcast %108 : vector<1x32xf32> to vector<16x32xf32>
    %119 = arith.subf %98, %118 : vector<16x32xf32>
    %cst_50 = arith.constant 1.000000e-03 : f32
    %120 = vector.broadcast %cst_50 : f32 to vector<1x32xf32>
    %121 = arith.addf %117, %120 : vector<1x32xf32>
    %122 = math.rsqrt %121 : vector<1x32xf32>
    %123 = vector.broadcast %122 : vector<1x32xf32> to vector<16x32xf32>
    %124 = arith.mulf %119, %123 : vector<16x32xf32>
    %125 = vector.broadcast %99 : vector<1x32xf32> to vector<16x32xf32>
    %126 = arith.mulf %124, %125 : vector<16x32xf32>
    %127 = vector.broadcast %100 : vector<1x32xf32> to vector<16x32xf32>
    %128 = arith.addf %126, %127 : vector<16x32xf32>
    %cst_51 = arith.constant 0.000000e+00 : f32
    %129 = vector.broadcast %cst_51 : f32 to vector<16x32xf32>
    %130 = arith.maximumf %128, %129 : vector<16x32xf32>
    %c2_52 = arith.constant 2 : index
    %c0_53 = arith.constant 0 : index
    %c0_54 = arith.constant 0 : index
    %131 = vector.load %arg4[%c2_52, %c0_53, %c0_54] : memref<4x32x32xbf16, #tpu.memory_space<vmem>>, vector<1x32x32xbf16>
    %132 = vector.shape_cast %131 : vector<1x32x32xbf16> to vector<32x32xbf16>
    %133 = arith.truncf %130 : vector<16x32xf32> to vector<16x32xbf16>
    %cst_55 = arith.constant dense<0.000000e+00> : vector<16x32xf32>
    %134 = tpu.matmul %133, %132, %cst_55 {dimension_numbers = #tpu.dot_dimension_numbers<[1], [0], [0], [1], [0, 0, 1, 1], [], []>} : vector<16x32xbf16>, vector<32x32xbf16>, vector<16x32xf32> -> vector<16x32xf32>
    %135 = vector.broadcast %101 : vector<1x32xf32> to vector<16x32xf32>
    %136 = arith.addf %134, %135 : vector<16x32xf32>
    %cst_56 = arith.constant dense<0.000000e+00> : vector<32xf32>
    %137 = vector.multi_reduction <add>, %136, %cst_56 [0] : vector<16x32xf32> to vector<32xf32>
    %138 = vector.shape_cast %137 : vector<32xf32> to vector<1x32xf32>
    %cst_57 = arith.constant 1.600000e+01 : f32
    %139 = vector.broadcast %cst_57 : f32 to vector<1x32xf32>
    %140 = arith.divf %138, %139 : vector<1x32xf32>
    %141 = arith.mulf %136, %136 : vector<16x32xf32>
    %cst_58 = arith.constant dense<0.000000e+00> : vector<32xf32>
    %142 = vector.multi_reduction <add>, %141, %cst_58 [0] : vector<16x32xf32> to vector<32xf32>
    %143 = vector.shape_cast %142 : vector<32xf32> to vector<1x32xf32>
    %cst_59 = arith.constant 1.600000e+01 : f32
    %144 = vector.broadcast %cst_59 : f32 to vector<1x32xf32>
    %145 = arith.divf %143, %144 : vector<1x32xf32>
    %146 = arith.mulf %140, %140 : vector<1x32xf32>
    %147 = arith.subf %145, %146 : vector<1x32xf32>
    %cst_60 = arith.constant 0.000000e+00 : f32
    %148 = vector.broadcast %cst_60 : f32 to vector<1x32xf32>
    %149 = arith.maximumf %147, %148 : vector<1x32xf32>
    %150 = vector.broadcast %140 : vector<1x32xf32> to vector<16x32xf32>
    %151 = arith.subf %136, %150 : vector<16x32xf32>
    %cst_61 = arith.constant 1.000000e-03 : f32
    %152 = vector.broadcast %cst_61 : f32 to vector<1x32xf32>
    %153 = arith.addf %149, %152 : vector<1x32xf32>
    %154 = math.rsqrt %153 : vector<1x32xf32>
    %155 = vector.broadcast %154 : vector<1x32xf32> to vector<16x32xf32>
    %156 = arith.mulf %151, %155 : vector<16x32xf32>
    %157 = vector.broadcast %102 : vector<1x32xf32> to vector<16x32xf32>
    %158 = arith.mulf %156, %157 : vector<16x32xf32>
    %159 = vector.broadcast %103 : vector<1x32xf32> to vector<16x32xf32>
    %160 = arith.addf %158, %159 : vector<16x32xf32>
    %cst_62 = arith.constant 0.000000e+00 : f32
    %161 = vector.broadcast %cst_62 : f32 to vector<16x32xf32>
    %162 = arith.maximumf %160, %161 : vector<16x32xf32>
    %c3_63 = arith.constant 3 : index
    %c0_64 = arith.constant 0 : index
    %c0_65 = arith.constant 0 : index
    %163 = vector.load %arg4[%c3_63, %c0_64, %c0_65] : memref<4x32x32xbf16, #tpu.memory_space<vmem>>, vector<1x32x32xbf16>
    %164 = vector.shape_cast %163 : vector<1x32x32xbf16> to vector<32x32xbf16>
    %165 = arith.truncf %162 : vector<16x32xf32> to vector<16x32xbf16>
    %cst_66 = arith.constant dense<0.000000e+00> : vector<16x32xf32>
    %166 = tpu.matmul %165, %164, %cst_66 {dimension_numbers = #tpu.dot_dimension_numbers<[1], [0], [0], [1], [0, 0, 1, 1], [], []>} : vector<16x32xbf16>, vector<32x32xbf16>, vector<16x32xf32> -> vector<16x32xf32>
    %167 = vector.broadcast %104 : vector<1x32xf32> to vector<16x32xf32>
    %168 = arith.addf %166, %167 : vector<16x32xf32>
    %169 = arith.addf %98, %168 : vector<16x32xf32>
    %170 = arith.truncf %169 : vector<16x32xf32> to vector<16x32xbf16>
    %c0_67 = arith.constant 0 : index
    %c0_68 = arith.constant 0 : index
    %c0_69 = arith.constant 0 : index
    %171 = vector.load %arg7[%c0_67, %c0_68, %c0_69] : memref<1x16x32xbf16, #tpu.memory_space<vmem>>, vector<1x16x32xbf16>
    %172 = vector.shape_cast %171 : vector<1x16x32xbf16> to vector<16x32xbf16>
    %173 = vector.shape_cast %170 : vector<16x32xbf16> to vector<1x16x32xbf16>
    tpu.vector_store %arg7[%c0_67, %c0_68, %c0_69], %173 {strides = array<i32>} : memref<1x16x32xbf16, #tpu.memory_space<vmem>>, vector<1x16x32xbf16>,
    %c13 = arith.constant 13 : index
    %c0_70 = arith.constant 0 : index
    %174 = vector.load %arg2[%c13, %c0_70] : memref<15x32xf32, #tpu.memory_space<vmem>>, vector<1x32xf32>
    %c14 = arith.constant 14 : index
    %c0_71 = arith.constant 0 : index
    %175 = vector.load %arg2[%c14, %c0_71] : memref<15x32xf32, #tpu.memory_space<vmem>>, vector<1x32xf32>
    %cst_72 = arith.constant dense<0.000000e+00> : vector<32xf32>
    %176 = vector.multi_reduction <add>, %169, %cst_72 [0] : vector<16x32xf32> to vector<32xf32>
    %177 = vector.shape_cast %176 : vector<32xf32> to vector<1x32xf32>
    %cst_73 = arith.constant 1.600000e+01 : f32
    %178 = vector.broadcast %cst_73 : f32 to vector<1x32xf32>
    %179 = arith.divf %177, %178 : vector<1x32xf32>
    %180 = arith.mulf %169, %169 : vector<16x32xf32>
    %cst_74 = arith.constant dense<0.000000e+00> : vector<32xf32>
    %181 = vector.multi_reduction <add>, %180, %cst_74 [0] : vector<16x32xf32> to vector<32xf32>
    %182 = vector.shape_cast %181 : vector<32xf32> to vector<1x32xf32>
    %cst_75 = arith.constant 1.600000e+01 : f32
    %183 = vector.broadcast %cst_75 : f32 to vector<1x32xf32>
    %184 = arith.divf %182, %183 : vector<1x32xf32>
    %185 = arith.mulf %179, %179 : vector<1x32xf32>
    %186 = arith.subf %184, %185 : vector<1x32xf32>
    %cst_76 = arith.constant 0.000000e+00 : f32
    %187 = vector.broadcast %cst_76 : f32 to vector<1x32xf32>
    %188 = arith.maximumf %186, %187 : vector<1x32xf32>
    %189 = vector.broadcast %179 : vector<1x32xf32> to vector<16x32xf32>
    %190 = arith.subf %169, %189 : vector<16x32xf32>
    %cst_77 = arith.constant 1.000000e-03 : f32
    %191 = vector.broadcast %cst_77 : f32 to vector<1x32xf32>
    %192 = arith.addf %188, %191 : vector<1x32xf32>
    %193 = math.rsqrt %192 : vector<1x32xf32>
    %194 = vector.broadcast %193 : vector<1x32xf32> to vector<16x32xf32>
    %195 = arith.mulf %190, %194 : vector<16x32xf32>
    %196 = vector.broadcast %174 : vector<1x32xf32> to vector<16x32xf32>
    %197 = arith.mulf %195, %196 : vector<16x32xf32>
    %198 = vector.broadcast %175 : vector<1x32xf32> to vector<16x32xf32>
    %199 = arith.addf %197, %198 : vector<16x32xf32>
    %cst_78 = arith.constant 0.000000e+00 : f32
    %200 = vector.broadcast %cst_78 : f32 to vector<16x32xf32>
    %201 = arith.maximumf %199, %200 : vector<16x32xf32>
    %c0_79 = arith.constant 0 : index
    %c0_80 = arith.constant 0 : index
    %202 = vector.load %arg5[%c0_79, %c0_80] : memref<32x8xbf16, #tpu.memory_space<vmem>>, vector<32x8xbf16>
    %203 = arith.truncf %201 : vector<16x32xf32> to vector<16x32xbf16>
    %cst_81 = arith.constant dense<0.000000e+00> : vector<16x8xf32>
    %204 = tpu.matmul %203, %202, %cst_81 {dimension_numbers = #tpu.dot_dimension_numbers<[1], [0], [0], [1], [0, 0, 1, 1], [], []>} : vector<16x32xbf16>, vector<32x8xbf16>, vector<16x8xf32> -> vector<16x8xf32>
    %c0_82 = arith.constant 0 : index
    %c0_83 = arith.constant 0 : index
    %205 = vector.load %arg6[%c0_82, %c0_83] : memref<1x8xf32, #tpu.memory_space<vmem>>, vector<1x8xf32>
    %206 = vector.broadcast %205 : vector<1x8xf32> to vector<16x8xf32>
    %207 = arith.addf %204, %206 : vector<16x8xf32>
    %cst_84 = arith.constant dense<0xFF800000> : vector<8xf32>
    %208 = vector.multi_reduction <maximumf>, %207, %cst_84 [0] : vector<16x8xf32> to vector<8xf32>
    %209 = vector.shape_cast %208 : vector<8xf32> to vector<1x8xf32>
    %210 = vector.broadcast %209 : vector<1x8xf32> to vector<16x8xf32>
    %211 = arith.subf %207, %210 : vector<16x8xf32>
    %212 = math.exp %211 : vector<16x8xf32>
    %cst_85 = arith.constant dense<0.000000e+00> : vector<8xf32>
    %213 = vector.multi_reduction <add>, %212, %cst_85 [0] : vector<16x8xf32> to vector<8xf32>
    %214 = vector.shape_cast %213 : vector<8xf32> to vector<1x8xf32>
    %215 = vector.broadcast %214 : vector<1x8xf32> to vector<16x8xf32>
    %216 = arith.divf %212, %215 : vector<16x8xf32>
    %217 = tpu.transpose %216, [1, 0] : vector<16x8xf32> -> vector<8x16xf32>
    %218 = arith.truncf %217 : vector<8x16xf32> to vector<8x16xbf16>
    %219 = arith.truncf %169 : vector<16x32xf32> to vector<16x32xbf16>
    %cst_86 = arith.constant dense<0.000000e+00> : vector<8x32xf32>
    %220 = tpu.matmul %218, %219, %cst_86 {dimension_numbers = #tpu.dot_dimension_numbers<[1], [0], [0], [1], [0, 0, 1, 1], [], []>} : vector<8x16xbf16>, vector<16x32xbf16>, vector<8x32xf32> -> vector<8x32xf32>
    %221 = arith.truncf %220 : vector<8x32xf32> to vector<8x32xbf16>
    %c0_87 = arith.constant 0 : index
    %c0_88 = arith.constant 0 : index
    %c0_89 = arith.constant 0 : index
    %222 = vector.load %arg8[%c0_87, %c0_88, %c0_89] : memref<1x8x32xbf16, #tpu.memory_space<vmem>>, vector<1x8x32xbf16>
    %223 = vector.shape_cast %222 : vector<1x8x32xbf16> to vector<8x32xbf16>
    %224 = vector.shape_cast %221 : vector<8x32xbf16> to vector<1x8x32xbf16>
    tpu.vector_store %arg8[%c0_87, %c0_88, %c0_89], %224 {strides = array<i32>} : memref<1x8x32xbf16, #tpu.memory_space<vmem>>, vector<1x8x32xbf16>,
    return
  }
  func.func @transform_0(%arg0: i32) -> (i32, i32, i32) {
    %c0_i32 = arith.constant 0 : i32
    %c0_i32_0 = arith.constant 0 : i32
    %c0_i32_1 = arith.constant 0 : i32
    return %arg0, %c0_i32, %c0_i32_0 : i32, i32, i32
  }
  func.func @transform_1(%arg0: i32) -> (i32, i32) {
    %c0_i32 = arith.constant 0 : i32
    %c0_i32_0 = arith.constant 0 : i32
    %c0_i32_1 = arith.constant 0 : i32
    return %c0_i32, %c0_i32_0 : i32, i32
  }
  func.func @transform_2(%arg0: i32) -> (i32, i32) {
    %c0_i32 = arith.constant 0 : i32
    %c0_i32_0 = arith.constant 0 : i32
    %c0_i32_1 = arith.constant 0 : i32
    return %c0_i32, %c0_i32_0 : i32, i32
  }
  func.func @transform_3(%arg0: i32) -> (i32, i32, i32) {
    %c0_i32 = arith.constant 0 : i32
    %c0_i32_0 = arith.constant 0 : i32
    %c0_i32_1 = arith.constant 0 : i32
    %c0_i32_2 = arith.constant 0 : i32
    return %c0_i32, %c0_i32_0, %c0_i32_1 : i32, i32, i32
  }
  func.func @transform_4(%arg0: i32) -> (i32, i32) {
    %c0_i32 = arith.constant 0 : i32
    %c0_i32_0 = arith.constant 0 : i32
    %c0_i32_1 = arith.constant 0 : i32
    return %c0_i32, %c0_i32_0 : i32, i32
  }
  func.func @transform_5(%arg0: i32) -> (i32, i32) {
    %c0_i32 = arith.constant 0 : i32
    %c0_i32_0 = arith.constant 0 : i32
    %c0_i32_1 = arith.constant 0 : i32
    return %c0_i32, %c0_i32_0 : i32, i32
  }
  func.func @transform_6(%arg0: i32) -> (i32, i32, i32) {
    %c0_i32 = arith.constant 0 : i32
    %c0_i32_0 = arith.constant 0 : i32
    %c0_i32_1 = arith.constant 0 : i32
    return %arg0, %c0_i32, %c0_i32_0 : i32, i32, i32
  }
  func.func @transform_7(%arg0: i32) -> (i32, i32, i32) {
    %c0_i32 = arith.constant 0 : i32
    %c0_i32_0 = arith.constant 0 : i32
    %c0_i32_1 = arith.constant 0 : i32
    return %arg0, %c0_i32, %c0_i32_0 : i32, i32, i32
  }
}

module attributes {stable_mosaic.version = 11 : i64} {
  func.func @kernel(%arg0: i32, %arg1: memref<1x16x32xbf16, #tpu.memory_space<vmem>>, %arg2: memref<1x8x32xbf16, #tpu.memory_space<vmem>>, %arg3: memref<15x32xf32, #tpu.memory_space<vmem>>, %arg4: memref<2x64xf32, #tpu.memory_space<vmem>>, %arg5: memref<32x8xbf16, #tpu.memory_space<vmem>>, %arg6: memref<1x8xf32, #tpu.memory_space<vmem>>, %arg7: memref<64x32xbf16, #tpu.memory_space<vmem>>, %arg8: memref<5x32x32xbf16, #tpu.memory_space<vmem>>, %arg9: memref<1x1x16xf32, #tpu.memory_space<vmem>>) attributes {dimension_semantics = [#tpu.dimension_semantics<parallel>], iteration_bounds = array<i64: 2>, scalar_prefetch = 0 : i64, scratch_operands = 0 : i64, tpu.core_type = #tpu.core_type<tc>, window_params = [{transform_indices = @transform_0, window_bounds = array<i64: 1, 16, 32>}, {transform_indices = @transform_1, window_bounds = array<i64: 1, 8, 32>}, {pipeline_mode = #tpu.pipeline_mode<synchronous>, transform_indices = @transform_2, window_bounds = array<i64: 15, 32>}, {pipeline_mode = #tpu.pipeline_mode<synchronous>, transform_indices = @transform_3, window_bounds = array<i64: 2, 64>}, {pipeline_mode = #tpu.pipeline_mode<synchronous>, transform_indices = @transform_4, window_bounds = array<i64: 32, 8>}, {pipeline_mode = #tpu.pipeline_mode<synchronous>, transform_indices = @transform_5, window_bounds = array<i64: 1, 8>}, {pipeline_mode = #tpu.pipeline_mode<synchronous>, transform_indices = @transform_6, window_bounds = array<i64: 64, 32>}, {pipeline_mode = #tpu.pipeline_mode<synchronous>, transform_indices = @transform_7, window_bounds = array<i64: 5, 32, 32>}, {transform_indices = @transform_8, window_bounds = array<i64: 1, 1, 16>}]} {
    %c0 = arith.constant 0 : index
    %c0_0 = arith.constant 0 : index
    %c0_1 = arith.constant 0 : index
    %0 = vector.load %arg1[%c0, %c0_0, %c0_1] : memref<1x16x32xbf16, #tpu.memory_space<vmem>>, vector<1x16x32xbf16>
    %1 = vector.shape_cast %0 : vector<1x16x32xbf16> to vector<16x32xbf16>
    %2 = arith.extf %1 : vector<16x32xbf16> to vector<16x32xf32>
    %c0_2 = arith.constant 0 : index
    %c0_3 = arith.constant 0 : index
    %3 = vector.load %arg3[%c0_2, %c0_3] : memref<15x32xf32, #tpu.memory_space<vmem>>, vector<1x32xf32>
    %c1 = arith.constant 1 : index
    %c0_4 = arith.constant 0 : index
    %4 = vector.load %arg3[%c1, %c0_4] : memref<15x32xf32, #tpu.memory_space<vmem>>, vector<1x32xf32>
    %cst = arith.constant dense<0.000000e+00> : vector<32xf32>
    %5 = vector.multi_reduction <add>, %2, %cst [0] : vector<16x32xf32> to vector<32xf32>
    %6 = vector.shape_cast %5 : vector<32xf32> to vector<1x32xf32>
    %cst_5 = arith.constant 1.600000e+01 : f32
    %7 = vector.broadcast %cst_5 : f32 to vector<1x32xf32>
    %8 = arith.divf %6, %7 : vector<1x32xf32>
    %9 = arith.mulf %2, %2 : vector<16x32xf32>
    %cst_6 = arith.constant dense<0.000000e+00> : vector<32xf32>
    %10 = vector.multi_reduction <add>, %9, %cst_6 [0] : vector<16x32xf32> to vector<32xf32>
    %11 = vector.shape_cast %10 : vector<32xf32> to vector<1x32xf32>
    %cst_7 = arith.constant 1.600000e+01 : f32
    %12 = vector.broadcast %cst_7 : f32 to vector<1x32xf32>
    %13 = arith.divf %11, %12 : vector<1x32xf32>
    %14 = arith.mulf %8, %8 : vector<1x32xf32>
    %15 = arith.subf %13, %14 : vector<1x32xf32>
    %cst_8 = arith.constant 0.000000e+00 : f32
    %16 = vector.broadcast %cst_8 : f32 to vector<1x32xf32>
    %17 = arith.maximumf %15, %16 : vector<1x32xf32>
    %18 = vector.broadcast %8 : vector<1x32xf32> to vector<16x32xf32>
    %19 = arith.subf %2, %18 : vector<16x32xf32>
    %cst_9 = arith.constant 1.000000e-03 : f32
    %20 = vector.broadcast %cst_9 : f32 to vector<1x32xf32>
    %21 = arith.addf %17, %20 : vector<1x32xf32>
    %22 = math.rsqrt %21 : vector<1x32xf32>
    %23 = vector.broadcast %22 : vector<1x32xf32> to vector<16x32xf32>
    %24 = arith.mulf %19, %23 : vector<16x32xf32>
    %25 = vector.broadcast %3 : vector<1x32xf32> to vector<16x32xf32>
    %26 = arith.mulf %24, %25 : vector<16x32xf32>
    %27 = vector.broadcast %4 : vector<1x32xf32> to vector<16x32xf32>
    %28 = arith.addf %26, %27 : vector<16x32xf32>
    %cst_10 = arith.constant 0.000000e+00 : f32
    %29 = vector.broadcast %cst_10 : f32 to vector<16x32xf32>
    %30 = arith.maximumf %28, %29 : vector<16x32xf32>
    %c0_11 = arith.constant 0 : index
    %c0_12 = arith.constant 0 : index
    %31 = vector.load %arg5[%c0_11, %c0_12] : memref<32x8xbf16, #tpu.memory_space<vmem>>, vector<32x8xbf16>
    %32 = arith.truncf %30 : vector<16x32xf32> to vector<16x32xbf16>
    %cst_13 = arith.constant dense<0.000000e+00> : vector<16x8xf32>
    %33 = tpu.matmul %32, %31, %cst_13 {dimension_numbers = #tpu.dot_dimension_numbers<[1], [0], [0], [1], [0, 0, 1, 1], [], []>} : vector<16x32xbf16>, vector<32x8xbf16>, vector<16x8xf32> -> vector<16x8xf32>
    %c0_14 = arith.constant 0 : index
    %c0_15 = arith.constant 0 : index
    %34 = vector.load %arg6[%c0_14, %c0_15] : memref<1x8xf32, #tpu.memory_space<vmem>>, vector<1x8xf32>
    %35 = vector.broadcast %34 : vector<1x8xf32> to vector<16x8xf32>
    %36 = arith.addf %33, %35 : vector<16x8xf32>
    %cst_16 = arith.constant dense<0xFF800000> : vector<16xf32>
    %37 = vector.multi_reduction <maximumf>, %36, %cst_16 [1] : vector<16x8xf32> to vector<16xf32>
    %38 = vector.shape_cast %37 : vector<16xf32> to vector<16x1xf32>
    %39 = vector.broadcast %38 : vector<16x1xf32> to vector<16x8xf32>
    %40 = arith.subf %36, %39 : vector<16x8xf32>
    %41 = math.exp %40 : vector<16x8xf32>
    %cst_17 = arith.constant dense<0.000000e+00> : vector<16xf32>
    %42 = vector.multi_reduction <add>, %41, %cst_17 [1] : vector<16x8xf32> to vector<16xf32>
    %43 = vector.shape_cast %42 : vector<16xf32> to vector<16x1xf32>
    %44 = vector.broadcast %43 : vector<16x1xf32> to vector<16x8xf32>
    %45 = arith.divf %41, %44 : vector<16x8xf32>
    %c0_18 = arith.constant 0 : index
    %c0_19 = arith.constant 0 : index
    %c0_20 = arith.constant 0 : index
    %46 = vector.load %arg2[%c0_18, %c0_19, %c0_20] : memref<1x8x32xbf16, #tpu.memory_space<vmem>>, vector<1x8x32xbf16>
    %47 = vector.shape_cast %46 : vector<1x8x32xbf16> to vector<8x32xbf16>
    %48 = arith.truncf %45 : vector<16x8xf32> to vector<16x8xbf16>
    %cst_21 = arith.constant dense<0.000000e+00> : vector<16x32xf32>
    %49 = tpu.matmul %48, %47, %cst_21 {dimension_numbers = #tpu.dot_dimension_numbers<[1], [0], [0], [1], [0, 0, 1, 1], [], []>} : vector<16x8xbf16>, vector<8x32xbf16>, vector<16x32xf32> -> vector<16x32xf32>
    %c0_22 = arith.constant 0 : index
    %c0_23 = arith.constant 0 : index
    %50 = vector.load %arg4[%c0_22, %c0_23] : memref<2x64xf32, #tpu.memory_space<vmem>>, vector<1x32xf32>
    %c1_24 = arith.constant 1 : index
    %c0_25 = arith.constant 0 : index
    %51 = vector.load %arg4[%c1_24, %c0_25] : memref<2x64xf32, #tpu.memory_space<vmem>>, vector<1x32xf32>
    %cst_26 = arith.constant dense<0.000000e+00> : vector<32xf32>
    %52 = vector.multi_reduction <add>, %2, %cst_26 [0] : vector<16x32xf32> to vector<32xf32>
    %53 = vector.shape_cast %52 : vector<32xf32> to vector<1x32xf32>
    %cst_27 = arith.constant 1.600000e+01 : f32
    %54 = vector.broadcast %cst_27 : f32 to vector<1x32xf32>
    %55 = arith.divf %53, %54 : vector<1x32xf32>
    %56 = arith.mulf %2, %2 : vector<16x32xf32>
    %cst_28 = arith.constant dense<0.000000e+00> : vector<32xf32>
    %57 = vector.multi_reduction <add>, %56, %cst_28 [0] : vector<16x32xf32> to vector<32xf32>
    %58 = vector.shape_cast %57 : vector<32xf32> to vector<1x32xf32>
    %cst_29 = arith.constant 1.600000e+01 : f32
    %59 = vector.broadcast %cst_29 : f32 to vector<1x32xf32>
    %60 = arith.divf %58, %59 : vector<1x32xf32>
    %61 = arith.mulf %55, %55 : vector<1x32xf32>
    %62 = arith.subf %60, %61 : vector<1x32xf32>
    %cst_30 = arith.constant 0.000000e+00 : f32
    %63 = vector.broadcast %cst_30 : f32 to vector<1x32xf32>
    %64 = arith.maximumf %62, %63 : vector<1x32xf32>
    %65 = vector.broadcast %55 : vector<1x32xf32> to vector<16x32xf32>
    %66 = arith.subf %2, %65 : vector<16x32xf32>
    %cst_31 = arith.constant 1.000000e-03 : f32
    %67 = vector.broadcast %cst_31 : f32 to vector<1x32xf32>
    %68 = arith.addf %64, %67 : vector<1x32xf32>
    %69 = math.rsqrt %68 : vector<1x32xf32>
    %70 = vector.broadcast %69 : vector<1x32xf32> to vector<16x32xf32>
    %71 = arith.mulf %66, %70 : vector<16x32xf32>
    %72 = vector.broadcast %50 : vector<1x32xf32> to vector<16x32xf32>
    %73 = arith.mulf %71, %72 : vector<16x32xf32>
    %74 = vector.broadcast %51 : vector<1x32xf32> to vector<16x32xf32>
    %75 = arith.addf %73, %74 : vector<16x32xf32>
    %cst_32 = arith.constant 0.000000e+00 : f32
    %76 = vector.broadcast %cst_32 : f32 to vector<16x32xf32>
    %77 = arith.maximumf %75, %76 : vector<16x32xf32>
    %c0_33 = arith.constant 0 : index
    %c32 = arith.constant 32 : index
    %78 = vector.load %arg4[%c0_33, %c32] : memref<2x64xf32, #tpu.memory_space<vmem>>, vector<1x32xf32>
    %c1_34 = arith.constant 1 : index
    %c32_35 = arith.constant 32 : index
    %79 = vector.load %arg4[%c1_34, %c32_35] : memref<2x64xf32, #tpu.memory_space<vmem>>, vector<1x32xf32>
    %cst_36 = arith.constant dense<0.000000e+00> : vector<32xf32>
    %80 = vector.multi_reduction <add>, %49, %cst_36 [0] : vector<16x32xf32> to vector<32xf32>
    %81 = vector.shape_cast %80 : vector<32xf32> to vector<1x32xf32>
    %cst_37 = arith.constant 1.600000e+01 : f32
    %82 = vector.broadcast %cst_37 : f32 to vector<1x32xf32>
    %83 = arith.divf %81, %82 : vector<1x32xf32>
    %84 = arith.mulf %49, %49 : vector<16x32xf32>
    %cst_38 = arith.constant dense<0.000000e+00> : vector<32xf32>
    %85 = vector.multi_reduction <add>, %84, %cst_38 [0] : vector<16x32xf32> to vector<32xf32>
    %86 = vector.shape_cast %85 : vector<32xf32> to vector<1x32xf32>
    %cst_39 = arith.constant 1.600000e+01 : f32
    %87 = vector.broadcast %cst_39 : f32 to vector<1x32xf32>
    %88 = arith.divf %86, %87 : vector<1x32xf32>
    %89 = arith.mulf %83, %83 : vector<1x32xf32>
    %90 = arith.subf %88, %89 : vector<1x32xf32>
    %cst_40 = arith.constant 0.000000e+00 : f32
    %91 = vector.broadcast %cst_40 : f32 to vector<1x32xf32>
    %92 = arith.maximumf %90, %91 : vector<1x32xf32>
    %93 = vector.broadcast %83 : vector<1x32xf32> to vector<16x32xf32>
    %94 = arith.subf %49, %93 : vector<16x32xf32>
    %cst_41 = arith.constant 1.000000e-03 : f32
    %95 = vector.broadcast %cst_41 : f32 to vector<1x32xf32>
    %96 = arith.addf %92, %95 : vector<1x32xf32>
    %97 = math.rsqrt %96 : vector<1x32xf32>
    %98 = vector.broadcast %97 : vector<1x32xf32> to vector<16x32xf32>
    %99 = arith.mulf %94, %98 : vector<16x32xf32>
    %100 = vector.broadcast %78 : vector<1x32xf32> to vector<16x32xf32>
    %101 = arith.mulf %99, %100 : vector<16x32xf32>
    %102 = vector.broadcast %79 : vector<1x32xf32> to vector<16x32xf32>
    %103 = arith.addf %101, %102 : vector<16x32xf32>
    %cst_42 = arith.constant 0.000000e+00 : f32
    %104 = vector.broadcast %cst_42 : f32 to vector<16x32xf32>
    %105 = arith.maximumf %103, %104 : vector<16x32xf32>
    %106 = tpu.concatenate %77, %105 in 1 : vector<16x32xf32>, vector<16x32xf32> -> vector<16x64xf32>
    %c2 = arith.constant 2 : index
    %c0_43 = arith.constant 0 : index
    %107 = vector.load %arg3[%c2, %c0_43] : memref<15x32xf32, #tpu.memory_space<vmem>>, vector<1x32xf32>
    %c3 = arith.constant 3 : index
    %c0_44 = arith.constant 0 : index
    %108 = vector.load %arg3[%c3, %c0_44] : memref<15x32xf32, #tpu.memory_space<vmem>>, vector<1x32xf32>
    %c4 = arith.constant 4 : index
    %c0_45 = arith.constant 0 : index
    %109 = vector.load %arg3[%c4, %c0_45] : memref<15x32xf32, #tpu.memory_space<vmem>>, vector<1x32xf32>
    %c5 = arith.constant 5 : index
    %c0_46 = arith.constant 0 : index
    %110 = vector.load %arg3[%c5, %c0_46] : memref<15x32xf32, #tpu.memory_space<vmem>>, vector<1x32xf32>
    %c6 = arith.constant 6 : index
    %c0_47 = arith.constant 0 : index
    %111 = vector.load %arg3[%c6, %c0_47] : memref<15x32xf32, #tpu.memory_space<vmem>>, vector<1x32xf32>
    %c0_48 = arith.constant 0 : index
    %c0_49 = arith.constant 0 : index
    %112 = vector.load %arg7[%c0_48, %c0_49] : memref<64x32xbf16, #tpu.memory_space<vmem>>, vector<64x32xbf16>
    %113 = arith.truncf %106 : vector<16x64xf32> to vector<16x64xbf16>
    %cst_50 = arith.constant dense<0.000000e+00> : vector<16x32xf32>
    %114 = tpu.matmul %113, %112, %cst_50 {dimension_numbers = #tpu.dot_dimension_numbers<[1], [0], [0], [1], [0, 0, 1, 1], [], []>} : vector<16x64xbf16>, vector<64x32xbf16>, vector<16x32xf32> -> vector<16x32xf32>
    %115 = vector.broadcast %107 : vector<1x32xf32> to vector<16x32xf32>
    %116 = arith.addf %114, %115 : vector<16x32xf32>
    %cst_51 = arith.constant dense<0.000000e+00> : vector<32xf32>
    %117 = vector.multi_reduction <add>, %116, %cst_51 [0] : vector<16x32xf32> to vector<32xf32>
    %118 = vector.shape_cast %117 : vector<32xf32> to vector<1x32xf32>
    %cst_52 = arith.constant 1.600000e+01 : f32
    %119 = vector.broadcast %cst_52 : f32 to vector<1x32xf32>
    %120 = arith.divf %118, %119 : vector<1x32xf32>
    %121 = arith.mulf %116, %116 : vector<16x32xf32>
    %cst_53 = arith.constant dense<0.000000e+00> : vector<32xf32>
    %122 = vector.multi_reduction <add>, %121, %cst_53 [0] : vector<16x32xf32> to vector<32xf32>
    %123 = vector.shape_cast %122 : vector<32xf32> to vector<1x32xf32>
    %cst_54 = arith.constant 1.600000e+01 : f32
    %124 = vector.broadcast %cst_54 : f32 to vector<1x32xf32>
    %125 = arith.divf %123, %124 : vector<1x32xf32>
    %126 = arith.mulf %120, %120 : vector<1x32xf32>
    %127 = arith.subf %125, %126 : vector<1x32xf32>
    %cst_55 = arith.constant 0.000000e+00 : f32
    %128 = vector.broadcast %cst_55 : f32 to vector<1x32xf32>
    %129 = arith.maximumf %127, %128 : vector<1x32xf32>
    %130 = vector.broadcast %120 : vector<1x32xf32> to vector<16x32xf32>
    %131 = arith.subf %116, %130 : vector<16x32xf32>
    %cst_56 = arith.constant 1.000000e-03 : f32
    %132 = vector.broadcast %cst_56 : f32 to vector<1x32xf32>
    %133 = arith.addf %129, %132 : vector<1x32xf32>
    %134 = math.rsqrt %133 : vector<1x32xf32>
    %135 = vector.broadcast %134 : vector<1x32xf32> to vector<16x32xf32>
    %136 = arith.mulf %131, %135 : vector<16x32xf32>
    %137 = vector.broadcast %108 : vector<1x32xf32> to vector<16x32xf32>
    %138 = arith.mulf %136, %137 : vector<16x32xf32>
    %139 = vector.broadcast %109 : vector<1x32xf32> to vector<16x32xf32>
    %140 = arith.addf %138, %139 : vector<16x32xf32>
    %cst_57 = arith.constant 0.000000e+00 : f32
    %141 = vector.broadcast %cst_57 : f32 to vector<16x32xf32>
    %142 = arith.maximumf %140, %141 : vector<16x32xf32>
    %c0_58 = arith.constant 0 : index
    %c0_59 = arith.constant 0 : index
    %c0_60 = arith.constant 0 : index
    %143 = vector.load %arg8[%c0_58, %c0_59, %c0_60] : memref<5x32x32xbf16, #tpu.memory_space<vmem>>, vector<1x32x32xbf16>
    %144 = vector.shape_cast %143 : vector<1x32x32xbf16> to vector<32x32xbf16>
    %145 = arith.truncf %142 : vector<16x32xf32> to vector<16x32xbf16>
    %cst_61 = arith.constant dense<0.000000e+00> : vector<16x32xf32>
    %146 = tpu.matmul %145, %144, %cst_61 {dimension_numbers = #tpu.dot_dimension_numbers<[1], [0], [0], [1], [0, 0, 1, 1], [], []>} : vector<16x32xbf16>, vector<32x32xbf16>, vector<16x32xf32> -> vector<16x32xf32>
    %147 = vector.broadcast %110 : vector<1x32xf32> to vector<16x32xf32>
    %148 = arith.addf %146, %147 : vector<16x32xf32>
    %c1_62 = arith.constant 1 : index
    %c0_63 = arith.constant 0 : index
    %c0_64 = arith.constant 0 : index
    %149 = vector.load %arg8[%c1_62, %c0_63, %c0_64] : memref<5x32x32xbf16, #tpu.memory_space<vmem>>, vector<1x32x32xbf16>
    %150 = vector.shape_cast %149 : vector<1x32x32xbf16> to vector<32x32xbf16>
    %151 = arith.truncf %2 : vector<16x32xf32> to vector<16x32xbf16>
    %cst_65 = arith.constant dense<0.000000e+00> : vector<16x32xf32>
    %152 = tpu.matmul %151, %150, %cst_65 {dimension_numbers = #tpu.dot_dimension_numbers<[1], [0], [0], [1], [0, 0, 1, 1], [], []>} : vector<16x32xbf16>, vector<32x32xbf16>, vector<16x32xf32> -> vector<16x32xf32>
    %c2_66 = arith.constant 2 : index
    %c0_67 = arith.constant 0 : index
    %c0_68 = arith.constant 0 : index
    %153 = vector.load %arg8[%c2_66, %c0_67, %c0_68] : memref<5x32x32xbf16, #tpu.memory_space<vmem>>, vector<1x32x32xbf16>
    %154 = vector.shape_cast %153 : vector<1x32x32xbf16> to vector<32x32xbf16>
    %155 = arith.truncf %49 : vector<16x32xf32> to vector<16x32xbf16>
    %cst_69 = arith.constant dense<0.000000e+00> : vector<16x32xf32>
    %156 = tpu.matmul %155, %154, %cst_69 {dimension_numbers = #tpu.dot_dimension_numbers<[1], [0], [0], [1], [0, 0, 1, 1], [], []>} : vector<16x32xbf16>, vector<32x32xbf16>, vector<16x32xf32> -> vector<16x32xf32>
    %157 = arith.addf %152, %156 : vector<16x32xf32>
    %158 = vector.broadcast %111 : vector<1x32xf32> to vector<16x32xf32>
    %159 = arith.addf %157, %158 : vector<16x32xf32>
    %160 = arith.addf %148, %159 : vector<16x32xf32>
    %c7 = arith.constant 7 : index
    %c0_70 = arith.constant 0 : index
    %161 = vector.load %arg3[%c7, %c0_70] : memref<15x32xf32, #tpu.memory_space<vmem>>, vector<1x32xf32>
    %c8 = arith.constant 8 : index
    %c0_71 = arith.constant 0 : index
    %162 = vector.load %arg3[%c8, %c0_71] : memref<15x32xf32, #tpu.memory_space<vmem>>, vector<1x32xf32>
    %c9 = arith.constant 9 : index
    %c0_72 = arith.constant 0 : index
    %163 = vector.load %arg3[%c9, %c0_72] : memref<15x32xf32, #tpu.memory_space<vmem>>, vector<1x32xf32>
    %c10 = arith.constant 10 : index
    %c0_73 = arith.constant 0 : index
    %164 = vector.load %arg3[%c10, %c0_73] : memref<15x32xf32, #tpu.memory_space<vmem>>, vector<1x32xf32>
    %c11 = arith.constant 11 : index
    %c0_74 = arith.constant 0 : index
    %165 = vector.load %arg3[%c11, %c0_74] : memref<15x32xf32, #tpu.memory_space<vmem>>, vector<1x32xf32>
    %c12 = arith.constant 12 : index
    %c0_75 = arith.constant 0 : index
    %166 = vector.load %arg3[%c12, %c0_75] : memref<15x32xf32, #tpu.memory_space<vmem>>, vector<1x32xf32>
    %cst_76 = arith.constant dense<0.000000e+00> : vector<32xf32>
    %167 = vector.multi_reduction <add>, %160, %cst_76 [0] : vector<16x32xf32> to vector<32xf32>
    %168 = vector.shape_cast %167 : vector<32xf32> to vector<1x32xf32>
    %cst_77 = arith.constant 1.600000e+01 : f32
    %169 = vector.broadcast %cst_77 : f32 to vector<1x32xf32>
    %170 = arith.divf %168, %169 : vector<1x32xf32>
    %171 = arith.mulf %160, %160 : vector<16x32xf32>
    %cst_78 = arith.constant dense<0.000000e+00> : vector<32xf32>
    %172 = vector.multi_reduction <add>, %171, %cst_78 [0] : vector<16x32xf32> to vector<32xf32>
    %173 = vector.shape_cast %172 : vector<32xf32> to vector<1x32xf32>
    %cst_79 = arith.constant 1.600000e+01 : f32
    %174 = vector.broadcast %cst_79 : f32 to vector<1x32xf32>
    %175 = arith.divf %173, %174 : vector<1x32xf32>
    %176 = arith.mulf %170, %170 : vector<1x32xf32>
    %177 = arith.subf %175, %176 : vector<1x32xf32>
    %cst_80 = arith.constant 0.000000e+00 : f32
    %178 = vector.broadcast %cst_80 : f32 to vector<1x32xf32>
    %179 = arith.maximumf %177, %178 : vector<1x32xf32>
    %180 = vector.broadcast %170 : vector<1x32xf32> to vector<16x32xf32>
    %181 = arith.subf %160, %180 : vector<16x32xf32>
    %cst_81 = arith.constant 1.000000e-03 : f32
    %182 = vector.broadcast %cst_81 : f32 to vector<1x32xf32>
    %183 = arith.addf %179, %182 : vector<1x32xf32>
    %184 = math.rsqrt %183 : vector<1x32xf32>
    %185 = vector.broadcast %184 : vector<1x32xf32> to vector<16x32xf32>
    %186 = arith.mulf %181, %185 : vector<16x32xf32>
    %187 = vector.broadcast %161 : vector<1x32xf32> to vector<16x32xf32>
    %188 = arith.mulf %186, %187 : vector<16x32xf32>
    %189 = vector.broadcast %162 : vector<1x32xf32> to vector<16x32xf32>
    %190 = arith.addf %188, %189 : vector<16x32xf32>
    %cst_82 = arith.constant 0.000000e+00 : f32
    %191 = vector.broadcast %cst_82 : f32 to vector<16x32xf32>
    %192 = arith.maximumf %190, %191 : vector<16x32xf32>
    %c3_83 = arith.constant 3 : index
    %c0_84 = arith.constant 0 : index
    %c0_85 = arith.constant 0 : index
    %193 = vector.load %arg8[%c3_83, %c0_84, %c0_85] : memref<5x32x32xbf16, #tpu.memory_space<vmem>>, vector<1x32x32xbf16>
    %194 = vector.shape_cast %193 : vector<1x32x32xbf16> to vector<32x32xbf16>
    %195 = arith.truncf %192 : vector<16x32xf32> to vector<16x32xbf16>
    %cst_86 = arith.constant dense<0.000000e+00> : vector<16x32xf32>
    %196 = tpu.matmul %195, %194, %cst_86 {dimension_numbers = #tpu.dot_dimension_numbers<[1], [0], [0], [1], [0, 0, 1, 1], [], []>} : vector<16x32xbf16>, vector<32x32xbf16>, vector<16x32xf32> -> vector<16x32xf32>
    %197 = vector.broadcast %163 : vector<1x32xf32> to vector<16x32xf32>
    %198 = arith.addf %196, %197 : vector<16x32xf32>
    %cst_87 = arith.constant dense<0.000000e+00> : vector<32xf32>
    %199 = vector.multi_reduction <add>, %198, %cst_87 [0] : vector<16x32xf32> to vector<32xf32>
    %200 = vector.shape_cast %199 : vector<32xf32> to vector<1x32xf32>
    %cst_88 = arith.constant 1.600000e+01 : f32
    %201 = vector.broadcast %cst_88 : f32 to vector<1x32xf32>
    %202 = arith.divf %200, %201 : vector<1x32xf32>
    %203 = arith.mulf %198, %198 : vector<16x32xf32>
    %cst_89 = arith.constant dense<0.000000e+00> : vector<32xf32>
    %204 = vector.multi_reduction <add>, %203, %cst_89 [0] : vector<16x32xf32> to vector<32xf32>
    %205 = vector.shape_cast %204 : vector<32xf32> to vector<1x32xf32>
    %cst_90 = arith.constant 1.600000e+01 : f32
    %206 = vector.broadcast %cst_90 : f32 to vector<1x32xf32>
    %207 = arith.divf %205, %206 : vector<1x32xf32>
    %208 = arith.mulf %202, %202 : vector<1x32xf32>
    %209 = arith.subf %207, %208 : vector<1x32xf32>
    %cst_91 = arith.constant 0.000000e+00 : f32
    %210 = vector.broadcast %cst_91 : f32 to vector<1x32xf32>
    %211 = arith.maximumf %209, %210 : vector<1x32xf32>
    %212 = vector.broadcast %202 : vector<1x32xf32> to vector<16x32xf32>
    %213 = arith.subf %198, %212 : vector<16x32xf32>
    %cst_92 = arith.constant 1.000000e-03 : f32
    %214 = vector.broadcast %cst_92 : f32 to vector<1x32xf32>
    %215 = arith.addf %211, %214 : vector<1x32xf32>
    %216 = math.rsqrt %215 : vector<1x32xf32>
    %217 = vector.broadcast %216 : vector<1x32xf32> to vector<16x32xf32>
    %218 = arith.mulf %213, %217 : vector<16x32xf32>
    %219 = vector.broadcast %164 : vector<1x32xf32> to vector<16x32xf32>
    %220 = arith.mulf %218, %219 : vector<16x32xf32>
    %221 = vector.broadcast %165 : vector<1x32xf32> to vector<16x32xf32>
    %222 = arith.addf %220, %221 : vector<16x32xf32>
    %cst_93 = arith.constant 0.000000e+00 : f32
    %223 = vector.broadcast %cst_93 : f32 to vector<16x32xf32>
    %224 = arith.maximumf %222, %223 : vector<16x32xf32>
    %c4_94 = arith.constant 4 : index
    %c0_95 = arith.constant 0 : index
    %c0_96 = arith.constant 0 : index
    %225 = vector.load %arg8[%c4_94, %c0_95, %c0_96] : memref<5x32x32xbf16, #tpu.memory_space<vmem>>, vector<1x32x32xbf16>
    %226 = vector.shape_cast %225 : vector<1x32x32xbf16> to vector<32x32xbf16>
    %227 = arith.truncf %224 : vector<16x32xf32> to vector<16x32xbf16>
    %cst_97 = arith.constant dense<0.000000e+00> : vector<16x32xf32>
    %228 = tpu.matmul %227, %226, %cst_97 {dimension_numbers = #tpu.dot_dimension_numbers<[1], [0], [0], [1], [0, 0, 1, 1], [], []>} : vector<16x32xbf16>, vector<32x32xbf16>, vector<16x32xf32> -> vector<16x32xf32>
    %229 = vector.broadcast %166 : vector<1x32xf32> to vector<16x32xf32>
    %230 = arith.addf %228, %229 : vector<16x32xf32>
    %231 = arith.addf %160, %230 : vector<16x32xf32>
    %c13 = arith.constant 13 : index
    %c0_98 = arith.constant 0 : index
    %232 = vector.load %arg3[%c13, %c0_98] : memref<15x32xf32, #tpu.memory_space<vmem>>, vector<1x32xf32>
    %c14 = arith.constant 14 : index
    %c0_99 = arith.constant 0 : index
    %233 = vector.load %arg3[%c14, %c0_99] : memref<15x32xf32, #tpu.memory_space<vmem>>, vector<1x1xf32>
    %cst_100 = arith.constant dense<0.000000e+00> : vector<1x16xf32>
    %234 = tpu.matmul %232, %231, %cst_100 {dimension_numbers = #tpu.dot_dimension_numbers<[1], [1], [0], [0], [0, 0, 1, 0], [], []>} : vector<1x32xf32>, vector<16x32xf32>, vector<1x16xf32> -> vector<1x16xf32>
    %235 = vector.broadcast %233 : vector<1x1xf32> to vector<1x16xf32>
    %236 = arith.addf %234, %235 : vector<1x16xf32>
    %c0_101 = arith.constant 0 : index
    %c0_102 = arith.constant 0 : index
    %c0_103 = arith.constant 0 : index
    %237 = vector.load %arg9[%c0_101, %c0_102, %c0_103] : memref<1x1x16xf32, #tpu.memory_space<vmem>>, vector<1x1x16xf32>
    %238 = vector.shape_cast %237 : vector<1x1x16xf32> to vector<1x16xf32>
    %239 = vector.shape_cast %236 : vector<1x16xf32> to vector<1x1x16xf32>
    tpu.vector_store %arg9[%c0_101, %c0_102, %c0_103], %239 {strides = array<i32>} : memref<1x1x16xf32, #tpu.memory_space<vmem>>, vector<1x1x16xf32>,
    return
  }
  func.func @transform_0(%arg0: i32) -> (i32, i32, i32) {
    %c0_i32 = arith.constant 0 : i32
    %c0_i32_0 = arith.constant 0 : i32
    %c0_i32_1 = arith.constant 0 : i32
    return %arg0, %c0_i32, %c0_i32_0 : i32, i32, i32
  }
  func.func @transform_1(%arg0: i32) -> (i32, i32, i32) {
    %c0_i32 = arith.constant 0 : i32
    %c0_i32_0 = arith.constant 0 : i32
    %c0_i32_1 = arith.constant 0 : i32
    return %arg0, %c0_i32, %c0_i32_0 : i32, i32, i32
  }
  func.func @transform_2(%arg0: i32) -> (i32, i32) {
    %c0_i32 = arith.constant 0 : i32
    %c0_i32_0 = arith.constant 0 : i32
    %c0_i32_1 = arith.constant 0 : i32
    return %c0_i32, %c0_i32_0 : i32, i32
  }
  func.func @transform_3(%arg0: i32) -> (i32, i32) {
    %c0_i32 = arith.constant 0 : i32
    %c0_i32_0 = arith.constant 0 : i32
    %c0_i32_1 = arith.constant 0 : i32
    return %c0_i32, %c0_i32_0 : i32, i32
  }
  func.func @transform_4(%arg0: i32) -> (i32, i32) {
    %c0_i32 = arith.constant 0 : i32
    %c0_i32_0 = arith.constant 0 : i32
    %c0_i32_1 = arith.constant 0 : i32
    return %c0_i32, %c0_i32_0 : i32, i32
  }
  func.func @transform_5(%arg0: i32) -> (i32, i32) {
    %c0_i32 = arith.constant 0 : i32
    %c0_i32_0 = arith.constant 0 : i32
    %c0_i32_1 = arith.constant 0 : i32
    return %c0_i32, %c0_i32_0 : i32, i32
  }
  func.func @transform_6(%arg0: i32) -> (i32, i32) {
    %c0_i32 = arith.constant 0 : i32
    %c0_i32_0 = arith.constant 0 : i32
    %c0_i32_1 = arith.constant 0 : i32
    return %c0_i32, %c0_i32_0 : i32, i32
  }
  func.func @transform_7(%arg0: i32) -> (i32, i32, i32) {
    %c0_i32 = arith.constant 0 : i32
    %c0_i32_0 = arith.constant 0 : i32
    %c0_i32_1 = arith.constant 0 : i32
    %c0_i32_2 = arith.constant 0 : i32
    return %c0_i32, %c0_i32_0, %c0_i32_1 : i32, i32, i32
  }
  func.func @transform_8(%arg0: i32) -> (i32, i32, i32) {
    %c0_i32 = arith.constant 0 : i32
    %c0_i32_0 = arith.constant 0 : i32
    %c0_i32_1 = arith.constant 0 : i32
    return %arg0, %c0_i32, %c0_i32_0 : i32, i32, i32
  }
}

module attributes {stable_mosaic.version = 11 : i64} {
  func.func @kernel(%arg0: i32, %arg1: memref<1x8x32xbf16, #tpu.memory_space<vmem>>, %arg2: memref<12x32xf32, #tpu.memory_space<vmem>>, %arg3: memref<8x6xf32, #tpu.memory_space<vmem>>, %arg4: memref<4x32x32xbf16, #tpu.memory_space<vmem>>, %arg5: memref<2x8x8xbf16, #tpu.memory_space<vmem>>, %arg6: memref<1x8x32xbf16, #tpu.memory_space<vmem>>) attributes {dimension_semantics = [#tpu.dimension_semantics<parallel>], iteration_bounds = array<i64: 2>, scalar_prefetch = 0 : i64, scratch_operands = 0 : i64, tpu.core_type = #tpu.core_type<tc>, window_params = [{transform_indices = @transform_0, window_bounds = array<i64: 1, 8, 32>}, {pipeline_mode = #tpu.pipeline_mode<synchronous>, transform_indices = @transform_1, window_bounds = array<i64: 12, 32>}, {pipeline_mode = #tpu.pipeline_mode<synchronous>, transform_indices = @transform_2, window_bounds = array<i64: 8, 6>}, {pipeline_mode = #tpu.pipeline_mode<synchronous>, transform_indices = @transform_3, window_bounds = array<i64: 4, 32, 32>}, {pipeline_mode = #tpu.pipeline_mode<synchronous>, transform_indices = @transform_4, window_bounds = array<i64: 2, 8, 8>}, {transform_indices = @transform_5, window_bounds = array<i64: 1, 8, 32>}]} {
    %c0 = arith.constant 0 : index
    %c0_0 = arith.constant 0 : index
    %c0_1 = arith.constant 0 : index
    %0 = vector.load %arg1[%c0, %c0_0, %c0_1] : memref<1x8x32xbf16, #tpu.memory_space<vmem>>, vector<1x8x32xbf16>
    %1 = vector.shape_cast %0 : vector<1x8x32xbf16> to vector<8x32xbf16>
    %2 = arith.extf %1 : vector<8x32xbf16> to vector<8x32xf32>
    %c0_2 = arith.constant 0 : index
    %c0_3 = arith.constant 0 : index
    %3 = vector.load %arg2[%c0_2, %c0_3] : memref<12x32xf32, #tpu.memory_space<vmem>>, vector<1x32xf32>
    %c1 = arith.constant 1 : index
    %c0_4 = arith.constant 0 : index
    %4 = vector.load %arg2[%c1, %c0_4] : memref<12x32xf32, #tpu.memory_space<vmem>>, vector<1x32xf32>
    %c2 = arith.constant 2 : index
    %c0_5 = arith.constant 0 : index
    %5 = vector.load %arg2[%c2, %c0_5] : memref<12x32xf32, #tpu.memory_space<vmem>>, vector<1x32xf32>
    %c3 = arith.constant 3 : index
    %c0_6 = arith.constant 0 : index
    %6 = vector.load %arg2[%c3, %c0_6] : memref<12x32xf32, #tpu.memory_space<vmem>>, vector<1x32xf32>
    %c4 = arith.constant 4 : index
    %c0_7 = arith.constant 0 : index
    %7 = vector.load %arg2[%c4, %c0_7] : memref<12x32xf32, #tpu.memory_space<vmem>>, vector<1x32xf32>
    %c5 = arith.constant 5 : index
    %c0_8 = arith.constant 0 : index
    %8 = vector.load %arg2[%c5, %c0_8] : memref<12x32xf32, #tpu.memory_space<vmem>>, vector<1x32xf32>
    %c0_9 = arith.constant 0 : index
    %c0_10 = arith.constant 0 : index
    %9 = vector.load %arg3[%c0_9, %c0_10] : memref<8x6xf32, #tpu.memory_space<vmem>>, vector<8x1xf32>
    %c0_11 = arith.constant 0 : index
    %c1_12 = arith.constant 1 : index
    %10 = vector.load %arg3[%c0_11, %c1_12] : memref<8x6xf32, #tpu.memory_space<vmem>>, vector<8x1xf32>
    %c0_13 = arith.constant 0 : index
    %c2_14 = arith.constant 2 : index
    %11 = vector.load %arg3[%c0_13, %c2_14] : memref<8x6xf32, #tpu.memory_space<vmem>>, vector<8x1xf32>
    %cst = arith.constant dense<0.000000e+00> : vector<32xf32>
    %12 = vector.multi_reduction <add>, %2, %cst [0] : vector<8x32xf32> to vector<32xf32>
    %13 = vector.shape_cast %12 : vector<32xf32> to vector<1x32xf32>
    %cst_15 = arith.constant 8.000000e+00 : f32
    %14 = vector.broadcast %cst_15 : f32 to vector<1x32xf32>
    %15 = arith.divf %13, %14 : vector<1x32xf32>
    %16 = arith.mulf %2, %2 : vector<8x32xf32>
    %cst_16 = arith.constant dense<0.000000e+00> : vector<32xf32>
    %17 = vector.multi_reduction <add>, %16, %cst_16 [0] : vector<8x32xf32> to vector<32xf32>
    %18 = vector.shape_cast %17 : vector<32xf32> to vector<1x32xf32>
    %cst_17 = arith.constant 8.000000e+00 : f32
    %19 = vector.broadcast %cst_17 : f32 to vector<1x32xf32>
    %20 = arith.divf %18, %19 : vector<1x32xf32>
    %21 = arith.mulf %15, %15 : vector<1x32xf32>
    %22 = arith.subf %20, %21 : vector<1x32xf32>
    %cst_18 = arith.constant 0.000000e+00 : f32
    %23 = vector.broadcast %cst_18 : f32 to vector<1x32xf32>
    %24 = arith.maximumf %22, %23 : vector<1x32xf32>
    %25 = vector.broadcast %15 : vector<1x32xf32> to vector<8x32xf32>
    %26 = arith.subf %2, %25 : vector<8x32xf32>
    %cst_19 = arith.constant 1.000000e-03 : f32
    %27 = vector.broadcast %cst_19 : f32 to vector<1x32xf32>
    %28 = arith.addf %24, %27 : vector<1x32xf32>
    %29 = math.rsqrt %28 : vector<1x32xf32>
    %30 = vector.broadcast %29 : vector<1x32xf32> to vector<8x32xf32>
    %31 = arith.mulf %26, %30 : vector<8x32xf32>
    %32 = vector.broadcast %3 : vector<1x32xf32> to vector<8x32xf32>
    %33 = arith.mulf %31, %32 : vector<8x32xf32>
    %34 = vector.broadcast %4 : vector<1x32xf32> to vector<8x32xf32>
    %35 = arith.addf %33, %34 : vector<8x32xf32>
    %cst_20 = arith.constant 0.000000e+00 : f32
    %36 = vector.broadcast %cst_20 : f32 to vector<8x32xf32>
    %37 = arith.maximumf %35, %36 : vector<8x32xf32>
    %c0_21 = arith.constant 0 : index
    %c0_22 = arith.constant 0 : index
    %c0_23 = arith.constant 0 : index
    %38 = vector.load %arg4[%c0_21, %c0_22, %c0_23] : memref<4x32x32xbf16, #tpu.memory_space<vmem>>, vector<1x32x32xbf16>
    %39 = vector.shape_cast %38 : vector<1x32x32xbf16> to vector<32x32xbf16>
    %40 = arith.truncf %37 : vector<8x32xf32> to vector<8x32xbf16>
    %cst_24 = arith.constant dense<0.000000e+00> : vector<8x32xf32>
    %41 = tpu.matmul %40, %39, %cst_24 {dimension_numbers = #tpu.dot_dimension_numbers<[1], [0], [0], [1], [0, 0, 1, 1], [], []>} : vector<8x32xbf16>, vector<32x32xbf16>, vector<8x32xf32> -> vector<8x32xf32>
    %42 = vector.broadcast %5 : vector<1x32xf32> to vector<8x32xf32>
    %43 = arith.addf %41, %42 : vector<8x32xf32>
    %44 = vector.broadcast %9 : vector<8x1xf32> to vector<8x32xf32>
    %45 = arith.mulf %43, %44 : vector<8x32xf32>
    %46 = vector.broadcast %10 : vector<8x1xf32> to vector<8x32xf32>
    %47 = arith.addf %45, %46 : vector<8x32xf32>
    %cst_25 = arith.constant 0.000000e+00 : f32
    %48 = vector.broadcast %cst_25 : f32 to vector<8x32xf32>
    %49 = arith.maximumf %47, %48 : vector<8x32xf32>
    %c0_26 = arith.constant 0 : index
    %c0_27 = arith.constant 0 : index
    %c0_28 = arith.constant 0 : index
    %50 = vector.load %arg5[%c0_26, %c0_27, %c0_28] : memref<2x8x8xbf16, #tpu.memory_space<vmem>>, vector<1x8x8xbf16>
    %51 = vector.shape_cast %50 : vector<1x8x8xbf16> to vector<8x8xbf16>
    %52 = arith.truncf %49 : vector<8x32xf32> to vector<8x32xbf16>
    %cst_29 = arith.constant dense<0.000000e+00> : vector<8x32xf32>
    %53 = tpu.matmul %51, %52, %cst_29 {dimension_numbers = #tpu.dot_dimension_numbers<[1], [0], [0], [1], [0, 0, 1, 1], [], []>} : vector<8x8xbf16>, vector<8x32xbf16>, vector<8x32xf32> -> vector<8x32xf32>
    %54 = arith.addf %43, %53 : vector<8x32xf32>
    %55 = vector.broadcast %11 : vector<8x1xf32> to vector<8x32xf32>
    %56 = arith.addf %54, %55 : vector<8x32xf32>
    %cst_30 = arith.constant dense<0.000000e+00> : vector<32xf32>
    %57 = vector.multi_reduction <add>, %56, %cst_30 [0] : vector<8x32xf32> to vector<32xf32>
    %58 = vector.shape_cast %57 : vector<32xf32> to vector<1x32xf32>
    %cst_31 = arith.constant 8.000000e+00 : f32
    %59 = vector.broadcast %cst_31 : f32 to vector<1x32xf32>
    %60 = arith.divf %58, %59 : vector<1x32xf32>
    %61 = arith.mulf %56, %56 : vector<8x32xf32>
    %cst_32 = arith.constant dense<0.000000e+00> : vector<32xf32>
    %62 = vector.multi_reduction <add>, %61, %cst_32 [0] : vector<8x32xf32> to vector<32xf32>
    %63 = vector.shape_cast %62 : vector<32xf32> to vector<1x32xf32>
    %cst_33 = arith.constant 8.000000e+00 : f32
    %64 = vector.broadcast %cst_33 : f32 to vector<1x32xf32>
    %65 = arith.divf %63, %64 : vector<1x32xf32>
    %66 = arith.mulf %60, %60 : vector<1x32xf32>
    %67 = arith.subf %65, %66 : vector<1x32xf32>
    %cst_34 = arith.constant 0.000000e+00 : f32
    %68 = vector.broadcast %cst_34 : f32 to vector<1x32xf32>
    %69 = arith.maximumf %67, %68 : vector<1x32xf32>
    %70 = vector.broadcast %60 : vector<1x32xf32> to vector<8x32xf32>
    %71 = arith.subf %56, %70 : vector<8x32xf32>
    %cst_35 = arith.constant 1.000000e-03 : f32
    %72 = vector.broadcast %cst_35 : f32 to vector<1x32xf32>
    %73 = arith.addf %69, %72 : vector<1x32xf32>
    %74 = math.rsqrt %73 : vector<1x32xf32>
    %75 = vector.broadcast %74 : vector<1x32xf32> to vector<8x32xf32>
    %76 = arith.mulf %71, %75 : vector<8x32xf32>
    %77 = vector.broadcast %6 : vector<1x32xf32> to vector<8x32xf32>
    %78 = arith.mulf %76, %77 : vector<8x32xf32>
    %79 = vector.broadcast %7 : vector<1x32xf32> to vector<8x32xf32>
    %80 = arith.addf %78, %79 : vector<8x32xf32>
    %cst_36 = arith.constant 0.000000e+00 : f32
    %81 = vector.broadcast %cst_36 : f32 to vector<8x32xf32>
    %82 = arith.maximumf %80, %81 : vector<8x32xf32>
    %c1_37 = arith.constant 1 : index
    %c0_38 = arith.constant 0 : index
    %c0_39 = arith.constant 0 : index
    %83 = vector.load %arg4[%c1_37, %c0_38, %c0_39] : memref<4x32x32xbf16, #tpu.memory_space<vmem>>, vector<1x32x32xbf16>
    %84 = vector.shape_cast %83 : vector<1x32x32xbf16> to vector<32x32xbf16>
    %85 = arith.truncf %82 : vector<8x32xf32> to vector<8x32xbf16>
    %cst_40 = arith.constant dense<0.000000e+00> : vector<8x32xf32>
    %86 = tpu.matmul %85, %84, %cst_40 {dimension_numbers = #tpu.dot_dimension_numbers<[1], [0], [0], [1], [0, 0, 1, 1], [], []>} : vector<8x32xbf16>, vector<32x32xbf16>, vector<8x32xf32> -> vector<8x32xf32>
    %87 = vector.broadcast %8 : vector<1x32xf32> to vector<8x32xf32>
    %88 = arith.addf %86, %87 : vector<8x32xf32>
    %89 = arith.addf %2, %88 : vector<8x32xf32>
    %c6 = arith.constant 6 : index
    %c0_41 = arith.constant 0 : index
    %90 = vector.load %arg2[%c6, %c0_41] : memref<12x32xf32, #tpu.memory_space<vmem>>, vector<1x32xf32>
    %c7 = arith.constant 7 : index
    %c0_42 = arith.constant 0 : index
    %91 = vector.load %arg2[%c7, %c0_42] : memref<12x32xf32, #tpu.memory_space<vmem>>, vector<1x32xf32>
    %c8 = arith.constant 8 : index
    %c0_43 = arith.constant 0 : index
    %92 = vector.load %arg2[%c8, %c0_43] : memref<12x32xf32, #tpu.memory_space<vmem>>, vector<1x32xf32>
    %c9 = arith.constant 9 : index
    %c0_44 = arith.constant 0 : index
    %93 = vector.load %arg2[%c9, %c0_44] : memref<12x32xf32, #tpu.memory_space<vmem>>, vector<1x32xf32>
    %c10 = arith.constant 10 : index
    %c0_45 = arith.constant 0 : index
    %94 = vector.load %arg2[%c10, %c0_45] : memref<12x32xf32, #tpu.memory_space<vmem>>, vector<1x32xf32>
    %c11 = arith.constant 11 : index
    %c0_46 = arith.constant 0 : index
    %95 = vector.load %arg2[%c11, %c0_46] : memref<12x32xf32, #tpu.memory_space<vmem>>, vector<1x32xf32>
    %c0_47 = arith.constant 0 : index
    %c3_48 = arith.constant 3 : index
    %96 = vector.load %arg3[%c0_47, %c3_48] : memref<8x6xf32, #tpu.memory_space<vmem>>, vector<8x1xf32>
    %c0_49 = arith.constant 0 : index
    %c4_50 = arith.constant 4 : index
    %97 = vector.load %arg3[%c0_49, %c4_50] : memref<8x6xf32, #tpu.memory_space<vmem>>, vector<8x1xf32>
    %c0_51 = arith.constant 0 : index
    %c5_52 = arith.constant 5 : index
    %98 = vector.load %arg3[%c0_51, %c5_52] : memref<8x6xf32, #tpu.memory_space<vmem>>, vector<8x1xf32>
    %cst_53 = arith.constant dense<0.000000e+00> : vector<32xf32>
    %99 = vector.multi_reduction <add>, %89, %cst_53 [0] : vector<8x32xf32> to vector<32xf32>
    %100 = vector.shape_cast %99 : vector<32xf32> to vector<1x32xf32>
    %cst_54 = arith.constant 8.000000e+00 : f32
    %101 = vector.broadcast %cst_54 : f32 to vector<1x32xf32>
    %102 = arith.divf %100, %101 : vector<1x32xf32>
    %103 = arith.mulf %89, %89 : vector<8x32xf32>
    %cst_55 = arith.constant dense<0.000000e+00> : vector<32xf32>
    %104 = vector.multi_reduction <add>, %103, %cst_55 [0] : vector<8x32xf32> to vector<32xf32>
    %105 = vector.shape_cast %104 : vector<32xf32> to vector<1x32xf32>
    %cst_56 = arith.constant 8.000000e+00 : f32
    %106 = vector.broadcast %cst_56 : f32 to vector<1x32xf32>
    %107 = arith.divf %105, %106 : vector<1x32xf32>
    %108 = arith.mulf %102, %102 : vector<1x32xf32>
    %109 = arith.subf %107, %108 : vector<1x32xf32>
    %cst_57 = arith.constant 0.000000e+00 : f32
    %110 = vector.broadcast %cst_57 : f32 to vector<1x32xf32>
    %111 = arith.maximumf %109, %110 : vector<1x32xf32>
    %112 = vector.broadcast %102 : vector<1x32xf32> to vector<8x32xf32>
    %113 = arith.subf %89, %112 : vector<8x32xf32>
    %cst_58 = arith.constant 1.000000e-03 : f32
    %114 = vector.broadcast %cst_58 : f32 to vector<1x32xf32>
    %115 = arith.addf %111, %114 : vector<1x32xf32>
    %116 = math.rsqrt %115 : vector<1x32xf32>
    %117 = vector.broadcast %116 : vector<1x32xf32> to vector<8x32xf32>
    %118 = arith.mulf %113, %117 : vector<8x32xf32>
    %119 = vector.broadcast %90 : vector<1x32xf32> to vector<8x32xf32>
    %120 = arith.mulf %118, %119 : vector<8x32xf32>
    %121 = vector.broadcast %91 : vector<1x32xf32> to vector<8x32xf32>
    %122 = arith.addf %120, %121 : vector<8x32xf32>
    %cst_59 = arith.constant 0.000000e+00 : f32
    %123 = vector.broadcast %cst_59 : f32 to vector<8x32xf32>
    %124 = arith.maximumf %122, %123 : vector<8x32xf32>
    %c2_60 = arith.constant 2 : index
    %c0_61 = arith.constant 0 : index
    %c0_62 = arith.constant 0 : index
    %125 = vector.load %arg4[%c2_60, %c0_61, %c0_62] : memref<4x32x32xbf16, #tpu.memory_space<vmem>>, vector<1x32x32xbf16>
    %126 = vector.shape_cast %125 : vector<1x32x32xbf16> to vector<32x32xbf16>
    %127 = arith.truncf %124 : vector<8x32xf32> to vector<8x32xbf16>
    %cst_63 = arith.constant dense<0.000000e+00> : vector<8x32xf32>
    %128 = tpu.matmul %127, %126, %cst_63 {dimension_numbers = #tpu.dot_dimension_numbers<[1], [0], [0], [1], [0, 0, 1, 1], [], []>} : vector<8x32xbf16>, vector<32x32xbf16>, vector<8x32xf32> -> vector<8x32xf32>
    %129 = vector.broadcast %92 : vector<1x32xf32> to vector<8x32xf32>
    %130 = arith.addf %128, %129 : vector<8x32xf32>
    %131 = vector.broadcast %96 : vector<8x1xf32> to vector<8x32xf32>
    %132 = arith.mulf %130, %131 : vector<8x32xf32>
    %133 = vector.broadcast %97 : vector<8x1xf32> to vector<8x32xf32>
    %134 = arith.addf %132, %133 : vector<8x32xf32>
    %cst_64 = arith.constant 0.000000e+00 : f32
    %135 = vector.broadcast %cst_64 : f32 to vector<8x32xf32>
    %136 = arith.maximumf %134, %135 : vector<8x32xf32>
    %c1_65 = arith.constant 1 : index
    %c0_66 = arith.constant 0 : index
    %c0_67 = arith.constant 0 : index
    %137 = vector.load %arg5[%c1_65, %c0_66, %c0_67] : memref<2x8x8xbf16, #tpu.memory_space<vmem>>, vector<1x8x8xbf16>
    %138 = vector.shape_cast %137 : vector<1x8x8xbf16> to vector<8x8xbf16>
    %139 = arith.truncf %136 : vector<8x32xf32> to vector<8x32xbf16>
    %cst_68 = arith.constant dense<0.000000e+00> : vector<8x32xf32>
    %140 = tpu.matmul %138, %139, %cst_68 {dimension_numbers = #tpu.dot_dimension_numbers<[1], [0], [0], [1], [0, 0, 1, 1], [], []>} : vector<8x8xbf16>, vector<8x32xbf16>, vector<8x32xf32> -> vector<8x32xf32>
    %141 = arith.addf %130, %140 : vector<8x32xf32>
    %142 = vector.broadcast %98 : vector<8x1xf32> to vector<8x32xf32>
    %143 = arith.addf %141, %142 : vector<8x32xf32>
    %cst_69 = arith.constant dense<0.000000e+00> : vector<32xf32>
    %144 = vector.multi_reduction <add>, %143, %cst_69 [0] : vector<8x32xf32> to vector<32xf32>
    %145 = vector.shape_cast %144 : vector<32xf32> to vector<1x32xf32>
    %cst_70 = arith.constant 8.000000e+00 : f32
    %146 = vector.broadcast %cst_70 : f32 to vector<1x32xf32>
    %147 = arith.divf %145, %146 : vector<1x32xf32>
    %148 = arith.mulf %143, %143 : vector<8x32xf32>
    %cst_71 = arith.constant dense<0.000000e+00> : vector<32xf32>
    %149 = vector.multi_reduction <add>, %148, %cst_71 [0] : vector<8x32xf32> to vector<32xf32>
    %150 = vector.shape_cast %149 : vector<32xf32> to vector<1x32xf32>
    %cst_72 = arith.constant 8.000000e+00 : f32
    %151 = vector.broadcast %cst_72 : f32 to vector<1x32xf32>
    %152 = arith.divf %150, %151 : vector<1x32xf32>
    %153 = arith.mulf %147, %147 : vector<1x32xf32>
    %154 = arith.subf %152, %153 : vector<1x32xf32>
    %cst_73 = arith.constant 0.000000e+00 : f32
    %155 = vector.broadcast %cst_73 : f32 to vector<1x32xf32>
    %156 = arith.maximumf %154, %155 : vector<1x32xf32>
    %157 = vector.broadcast %147 : vector<1x32xf32> to vector<8x32xf32>
    %158 = arith.subf %143, %157 : vector<8x32xf32>
    %cst_74 = arith.constant 1.000000e-03 : f32
    %159 = vector.broadcast %cst_74 : f32 to vector<1x32xf32>
    %160 = arith.addf %156, %159 : vector<1x32xf32>
    %161 = math.rsqrt %160 : vector<1x32xf32>
    %162 = vector.broadcast %161 : vector<1x32xf32> to vector<8x32xf32>
    %163 = arith.mulf %158, %162 : vector<8x32xf32>
    %164 = vector.broadcast %93 : vector<1x32xf32> to vector<8x32xf32>
    %165 = arith.mulf %163, %164 : vector<8x32xf32>
    %166 = vector.broadcast %94 : vector<1x32xf32> to vector<8x32xf32>
    %167 = arith.addf %165, %166 : vector<8x32xf32>
    %cst_75 = arith.constant 0.000000e+00 : f32
    %168 = vector.broadcast %cst_75 : f32 to vector<8x32xf32>
    %169 = arith.maximumf %167, %168 : vector<8x32xf32>
    %c3_76 = arith.constant 3 : index
    %c0_77 = arith.constant 0 : index
    %c0_78 = arith.constant 0 : index
    %170 = vector.load %arg4[%c3_76, %c0_77, %c0_78] : memref<4x32x32xbf16, #tpu.memory_space<vmem>>, vector<1x32x32xbf16>
    %171 = vector.shape_cast %170 : vector<1x32x32xbf16> to vector<32x32xbf16>
    %172 = arith.truncf %169 : vector<8x32xf32> to vector<8x32xbf16>
    %cst_79 = arith.constant dense<0.000000e+00> : vector<8x32xf32>
    %173 = tpu.matmul %172, %171, %cst_79 {dimension_numbers = #tpu.dot_dimension_numbers<[1], [0], [0], [1], [0, 0, 1, 1], [], []>} : vector<8x32xbf16>, vector<32x32xbf16>, vector<8x32xf32> -> vector<8x32xf32>
    %174 = vector.broadcast %95 : vector<1x32xf32> to vector<8x32xf32>
    %175 = arith.addf %173, %174 : vector<8x32xf32>
    %176 = arith.addf %89, %175 : vector<8x32xf32>
    %177 = arith.truncf %176 : vector<8x32xf32> to vector<8x32xbf16>
    %c0_80 = arith.constant 0 : index
    %c0_81 = arith.constant 0 : index
    %c0_82 = arith.constant 0 : index
    %178 = vector.load %arg6[%c0_80, %c0_81, %c0_82] : memref<1x8x32xbf16, #tpu.memory_space<vmem>>, vector<1x8x32xbf16>
    %179 = vector.shape_cast %178 : vector<1x8x32xbf16> to vector<8x32xbf16>
    %180 = vector.shape_cast %177 : vector<8x32xbf16> to vector<1x8x32xbf16>
    tpu.vector_store %arg6[%c0_80, %c0_81, %c0_82], %180 {strides = array<i32>} : memref<1x8x32xbf16, #tpu.memory_space<vmem>>, vector<1x8x32xbf16>,
    return
  }
  func.func @transform_0(%arg0: i32) -> (i32, i32, i32) {
    %c0_i32 = arith.constant 0 : i32
    %c0_i32_0 = arith.constant 0 : i32
    %c0_i32_1 = arith.constant 0 : i32
    return %arg0, %c0_i32, %c0_i32_0 : i32, i32, i32
  }
  func.func @transform_1(%arg0: i32) -> (i32, i32) {
    %c0_i32 = arith.constant 0 : i32
    %c0_i32_0 = arith.constant 0 : i32
    %c0_i32_1 = arith.constant 0 : i32
    return %c0_i32, %c0_i32_0 : i32, i32
  }
  func.func @transform_2(%arg0: i32) -> (i32, i32) {
    %c0_i32 = arith.constant 0 : i32
    %c0_i32_0 = arith.constant 0 : i32
    %c0_i32_1 = arith.constant 0 : i32
    return %c0_i32, %c0_i32_0 : i32, i32
  }
  func.func @transform_3(%arg0: i32) -> (i32, i32, i32) {
    %c0_i32 = arith.constant 0 : i32
    %c0_i32_0 = arith.constant 0 : i32
    %c0_i32_1 = arith.constant 0 : i32
    %c0_i32_2 = arith.constant 0 : i32
    return %c0_i32, %c0_i32_0, %c0_i32_1 : i32, i32, i32
  }
  func.func @transform_4(%arg0: i32) -> (i32, i32, i32) {
    %c0_i32 = arith.constant 0 : i32
    %c0_i32_0 = arith.constant 0 : i32
    %c0_i32_1 = arith.constant 0 : i32
    %c0_i32_2 = arith.constant 0 : i32
    return %c0_i32, %c0_i32_0, %c0_i32_1 : i32, i32, i32
  }
  func.func @transform_5(%arg0: i32) -> (i32, i32, i32) {
    %c0_i32 = arith.constant 0 : i32
    %c0_i32_0 = arith.constant 0 : i32
    %c0_i32_1 = arith.constant 0 : i32
    return %arg0, %c0_i32, %c0_i32_0 : i32, i32, i32
  }
}

</mosaic_0001>

<llo_original>
// kernel: oanblock_forward.3
$region0: #{oanblock_forward.3}
  #allocation0 [shape = 'u32[]', space=smem, size = 0x4, offset = 0x4, fixed_abs, tag = 'smem constant byte address 0x4 - core index']
  #allocation1 [shape = 'u32[72,128]{1,0:T(1,128)}', space=vmem, size = 0x9000, scoped, tag = 'internal scratch']
  %s0 = inlined_call_operand.vmem [shape: f32[2,16,4], index: 0, kind: input, shape index: {}]
  %s1 = inlined_call_operand.hbm [shape: f32[15,32], index: 1, kind: input, shape index: {}]
  %s2 = inlined_call_operand.vmem [shape: f32[4,32], index: 2, kind: input, shape index: {}]
  %s3 = inlined_call_operand.hbm [shape: bf16[4,32,32], index: 3, kind: input, shape index: {}]
  %s4 = inlined_call_operand.hbm [shape: bf16[32,8], index: 4, kind: input, shape index: {}]
  %s5 = inlined_call_operand.vmem [shape: f32[1,8], index: 5, kind: input, shape index: {}]
  %s6 = inlined_call_operand.vmem [shape: bf16[2,16,32], index: 6, kind: output, shape index: {0}]
  %s7 = inlined_call_operand.vmem [shape: bf16[2,8,32], index: 7, kind: output, shape index: {1}]
  %8 = xla_tuple %s6, %s7
  %s9 = sld [smem:[#allocation0]]
  $region77: #{oanblock_forward.3} parent=0
    _
  %s11 = ssub.s32 1, %s9
  %s12 = scalar_select 0, %s11, %s9
  $region1: #{oanblock_forward.3} parent=0
    #allocation2 [shape = 'u8[8192]{0}', space=vmem, size = 0x2000, scoped, tag = 'input window, operand 1, single buffered']
    #allocation3 [shape = 's32[2]{0}', space=sflag, size = 0x8, scoped, tag = 'scoped memory for oanblock_forward.3']
    #allocation4 [shape = 'u8[32768]{0}', space=vmem, size = 0x8000, scoped, tag = 'input window, operand 3, single buffered']
    #allocation5 [shape = 's32[1]{0}', space=sflag, size = 0x4, scoped, tag = 'scoped memory for oanblock_forward.3']
    #allocation6 [shape = 'u8[8192]{0}', space=vmem, size = 0x2000, scoped, tag = 'input window, operand 4, single buffered']
    %13 = vsyncpa [#allocation3], 0
    %14 = vsyncpa [#allocation5], 0
    loop: start=0, step=1, limit=4
    $region2: #{oanblock_forward.3} parent=1 // loop_pre_header
      _
    $region3: #{oanblock_forward.3} parent=1 // loop_header
      %s16 = sphi 0, %s20
      %p17 = scmp.ge.s32.totalorder %s16, 4
      %s26 = sphi 0, %s28
      %s29 = sphi 0, %s26
      %s30 = sphi 0, %s29
      %s46 = sphi 0, %s30
      %s50 = sphi 0, %s50
      %s52 = sphi 0, %s50
      %s53 = sphi 0, %s52
      %s67 = sphi 0, %s53
      %s71 = sphi 0, %s71
      %s73 = sphi 0, %s71
      %s74 = sphi 0, %s73
      %s88 = sphi 0, %s74
      %s92 = sphi 0, %s92
      %s94 = sphi 0, %s92
      %s95 = sphi 0, %s94
      %s109 = sphi 0, %s95
      %s113 = sphi 0, %s113
      %s115 = sphi 0, %s113
      %s116 = sphi 0, %s115
      %s130 = sphi 0, %s116
      %s134 = sphi 0, %s134
      %s136 = sphi 0, %s134
      %s137 = sphi 0, %s136
      %s151 = sphi 0, %s137
      %s157 = sphi 0, %s159
      %s160 = sphi 0, %s157
      %s161 = sphi 0, %s160
      %s177 = sphi 0, %s161
      %s183 = sphi 0, %s185
      %s186 = sphi 0, %s183
      %s187 = sphi 0, %s186
      %s203 = sphi 0, %s187
    $region4: #{oanblock_forward.3} parent=1 // loop_header_branch
      %19 = sbr.rel (%p17) target = $region8
    $region5: #{oanblock_forward.3} parent=1 // loop_body
      %s21 = ssub.s32 %s16, 1
      %s22 = ssub.s32 %s16, 2
      %s23 = sadd.s32 %s16, 1
      %s24 = ssub.s32 %s16, %s23
      %p25 = scmp.eq.s32.totalorder %s24, 0
      %s27 = sadd.s32 %s26, 1
      %s28 = scalar_select %p25, %s26, %s27
      %p31 = pneg %p25
      %p32 = scmp.eq.s32.totalorder %s16, 1
      %p33 = por %p31, %p32
      %p34 = scmp.ne.s32.totalorder %s26, %s29
      %p35 = scmp.eq.s32.totalorder %s16, 0
      %p36 = por %p34, %p35
      %p37 = scmp.ne.s32.totalorder %s26, %s29
      %p38 = scmp.eq.s32.totalorder %s21, 1
      %p39 = por %p37, %p38
      %p40 = scmp.ne.s32.totalorder %s29, %s30
      %p41 = scmp.eq.s32.totalorder %s21, 0
      %p42 = por %p40, %p41
      %p43 = scmp.ne.s32.totalorder %s29, %s30
      %p44 = scmp.eq.s32.totalorder %s22, 1
      %p45 = por %p43, %p44
      %p47 = scmp.ne.s32.totalorder %s30, %s46
      %p48 = scmp.eq.s32.totalorder %s22, 0
      %p49 = por %p47, %p48
      %s51 = sadd.s32 %s50, 1
      %p54 = scmp.eq.s32.totalorder %s16, 1
      %p55 = scmp.ne.s32.totalorder %s50, %s52
      %p56 = scmp.eq.s32.totalorder %s16, 0
      %p57 = por %p55, %p56
      %p58 = scmp.ne.s32.totalorder %s50, %s52
      %p59 = scmp.eq.s32.totalorder %s21, 1
      %p60 = por %p58, %p59
      %p61 = scmp.ne.s32.totalorder %s52, %s53
      %p62 = scmp.eq.s32.totalorder %s21, 0
      %p63 = por %p61, %p62
      %p64 = scmp.ne.s32.totalorder %s52, %s53
      %p65 = scmp.eq.s32.totalorder %s22, 1
      %p66 = por %p64, %p65
      %p68 = scmp.ne.s32.totalorder %s53, %s67
      %p69 = scmp.eq.s32.totalorder %s22, 0
      %p70 = por %p68, %p69
      %s72 = sadd.s32 %s71, 1
      %p75 = scmp.eq.s32.totalorder %s16, 1
      %p76 = scmp.ne.s32.totalorder %s71, %s73
      %p77 = scmp.eq.s32.totalorder %s16, 0
      %p78 = por %p76, %p77
      %p79 = scmp.ne.s32.totalorder %s71, %s73
      %p80 = scmp.eq.s32.totalorder %s21, 1
      %p81 = por %p79, %p80
      %p82 = scmp.ne.s32.totalorder %s73, %s74
      %p83 = scmp.eq.s32.totalorder %s21, 0
      %p84 = por %p82, %p83
      %p85 = scmp.ne.s32.totalorder %s73, %s74
      %p86 = scmp.eq.s32.totalorder %s22, 1
      %p87 = por %p85, %p86
      %p89 = scmp.ne.s32.totalorder %s74, %s88
      %p90 = scmp.eq.s32.totalorder %s22, 0
      %p91 = por %p89, %p90
      %s93 = sadd.s32 %s92, 1
      %p96 = scmp.eq.s32.totalorder %s16, 1
      %p97 = scmp.ne.s32.totalorder %s92, %s94
      %p98 = scmp.eq.s32.totalorder %s16, 0
      %p99 = por %p97, %p98
      %p100 = scmp.ne.s32.totalorder %s92, %s94
      %p101 = scmp.eq.s32.totalorder %s21, 1
      %p102 = por %p100, %p101
      %p103 = scmp.ne.s32.totalorder %s94, %s95
      %p104 = scmp.eq.s32.totalorder %s21, 0
      %p105 = por %p103, %p104
      %p106 = scmp.ne.s32.totalorder %s94, %s95
      %p107 = scmp.eq.s32.totalorder %s22, 1
      %p108 = por %p106, %p107
      %p110 = scmp.ne.s32.totalorder %s95, %s109
      %p111 = scmp.eq.s32.totalorder %s22, 0
      %p112 = por %p110, %p111
      %s114 = sadd.s32 %s113, 1
      %p117 = scmp.eq.s32.totalorder %s16, 1
      %p118 = scmp.ne.s32.totalorder %s113, %s115
      %p119 = scmp.eq.s32.totalorder %s16, 0
      %p120 = por %p118, %p119
      %p121 = scmp.ne.s32.totalorder %s113, %s115
      %p122 = scmp.eq.s32.totalorder %s21, 1
      %p123 = por %p121, %p122
      %p124 = scmp.ne.s32.totalorder %s115, %s116
      %p125 = scmp.eq.s32.totalorder %s21, 0
      %p126 = por %p124, %p125
      %p127 = scmp.ne.s32.totalorder %s115, %s116
      %p128 = scmp.eq.s32.totalorder %s22, 1
      %p129 = por %p127, %p128
      %p131 = scmp.ne.s32.totalorder %s116, %s130
      %p132 = scmp.eq.s32.totalorder %s22, 0
      %p133 = por %p131, %p132
      %s135 = sadd.s32 %s134, 1
      %p138 = scmp.eq.s32.totalorder %s16, 1
      %p139 = scmp.ne.s32.totalorder %s134, %s136
      %p140 = scmp.eq.s32.totalorder %s16, 0
      %p141 = por %p139, %p140
      %p142 = scmp.ne.s32.totalorder %s134, %s136
      %p143 = scmp.eq.s32.totalorder %s21, 1
      %p144 = por %p142, %p143
      %p145 = scmp.ne.s32.totalorder %s136, %s137
      %p146 = scmp.eq.s32.totalorder %s21, 0
      %p147 = por %p145, %p146
      %p148 = scmp.ne.s32.totalorder %s136, %s137
      %p149 = scmp.eq.s32.totalorder %s22, 1
      %p150 = por %p148, %p149
      %p152 = scmp.ne.s32.totalorder %s137, %s151
      %p153 = scmp.eq.s32.totalorder %s22, 0
      %p154 = por %p152, %p153
      %s155 = ssub.s32 %s16, %s23
      %p156 = scmp.eq.s32.totalorder %s155, 0
      %s158 = sadd.s32 %s157, 1
      %s159 = scalar_select %p156, %s157, %s158
      %p162 = pneg %p156
      %p163 = scmp.eq.s32.totalorder %s16, 1
      %p164 = por %p162, %p163
      %p165 = scmp.ne.s32.totalorder %s157, %s160
      %p166 = scmp.eq.s32.totalorder %s16, 0
      %p167 = por %p165, %p166
      %p168 = scmp.ne.s32.totalorder %s157, %s160
      %p169 = scmp.eq.s32.totalorder %s21, 1
      %p170 = por %p168, %p169
      %p171 = scmp.ne.s32.totalorder %s160, %s161
      %p172 = scmp.eq.s32.totalorder %s21, 0
      %p173 = por %p171, %p172
      %p174 = scmp.ne.s32.totalorder %s160, %s161
      %p175 = scmp.eq.s32.totalorder %s22, 1
      %p176 = por %p174, %p175
      %p178 = scmp.ne.s32.totalorder %s161, %s177
      %p179 = scmp.eq.s32.totalorder %s22, 0
      %p180 = por %p178, %p179
      %s181 = ssub.s32 %s16, %s23
      %p182 = scmp.eq.s32.totalorder %s181, 0
      %s184 = sadd.s32 %s183, 1
      %s185 = scalar_select %p182, %s183, %s184
      %p188 = pneg %p182
      %p189 = scmp.eq.s32.totalorder %s16, 1
      %p190 = por %p188, %p189
      %p191 = scmp.ne.s32.totalorder %s183, %s186
      %p192 = scmp.eq.s32.totalorder %s16, 0
      %p193 = por %p191, %p192
      %p194 = scmp.ne.s32.totalorder %s183, %s186
      %p195 = scmp.eq.s32.totalorder %s21, 1
      %p196 = por %p194, %p195
      %p197 = scmp.ne.s32.totalorder %s186, %s187
      %p198 = scmp.eq.s32.totalorder %s21, 0
      %p199 = por %p197, %p198
      %p200 = scmp.ne.s32.totalorder %s186, %s187
      %p201 = scmp.eq.s32.totalorder %s22, 1
      %p202 = por %p200, %p201
      %p204 = scmp.ne.s32.totalorder %s187, %s203
      %p205 = scmp.eq.s32.totalorder %s22, 0
      %p206 = por %p204, %p205
      %p207 = scmp.le.s32.totalorder 1, %s16
      %p208 = scmp.lt.s32.totalorder %s16, 3
      %p209 = pnand %p207, %p208
      %p210 = pneg %p209
      // Predicated region
      $region9: #{oanblock_forward.3} parent=5 // pred_check
        _
      $region10: #{oanblock_forward.3} parent=5 // pred_check_branch
        %212 = sbr.rel (%p209) target = $region12
      $region11: #{oanblock_forward.3} parent=5 // pred_region
        %s213 = ssub.s32 %s16, 1
        // Predicated region
        $region13: #{oanblock_forward.3} parent=11 // pred_check
          %p214 = pneg %p63
        $region14: #{oanblock_forward.3} parent=11 // pred_check_branch
          %216 = sbr.rel (%p214) target = $region16
        $region15: #{oanblock_forward.3} parent=11 // pred_region
          %218 = vsyncadd [#allocation3], 0
          %s219 = sshll.u32 %s1, 4
          %s220 = int_to_ptr.hbm [resolvable:$true] %s219
          %s221 = sshll.u32 [#allocation2], 4
          %s222 = int_to_ptr.vmem [resolvable:$true] %s221
          %227 = dma.hbm_to_vmem [thread:$0]  %s220, 256, %s222, [#allocation3], 128, 128, 8
        $region16: #{oanblock_forward.3} parent=11 // pred_fallthru
          _
        // Predicated region
        $region17: #{oanblock_forward.3} parent=11 // pred_check
          %p228 = pneg %p84
        $region18: #{oanblock_forward.3} parent=11 // pred_check_branch
          %230 = sbr.rel (%p228) target = $region20
        $region19: #{oanblock_forward.3} parent=11 // pred_region
          _
        $region20: #{oanblock_forward.3} parent=11 // pred_fallthru
          _
        // Predicated region
        $region21: #{oanblock_forward.3} parent=11 // pred_check
          %p231 = pneg %p105
        $region22: #{oanblock_forward.3} parent=11 // pred_check_branch
          %233 = sbr.rel (%p231) target = $region24
        $region23: #{oanblock_forward.3} parent=11 // pred_region
          %235 = vsyncadd [#allocation5], 0
          %s236 = sshll.u32 %s3, 4
          %s237 = int_to_ptr.hbm [resolvable:$true] %s236
          %s238 = sshll.u32 [#allocation4], 4
          %s239 = int_to_ptr.vmem [resolvable:$true] %s238
          %244 = dma.hbm_to_vmem [thread:$0]  %s237, 1024, %s239, [#allocation5], 64, 64, 4
        $region24: #{oanblock_forward.3} parent=11 // pred_fallthru
          _
        // Predicated region
        $region25: #{oanblock_forward.3} parent=11 // pred_check
          %p245 = pneg %p126
        $region26: #{oanblock_forward.3} parent=11 // pred_check_branch
          %247 = sbr.rel (%p245) target = $region28
        $region27: #{oanblock_forward.3} parent=11 // pred_region
          %249 = vsyncadd [#allocation5], 0
          %s250 = sshll.u32 %s4, 4
          %s251 = int_to_ptr.hbm [resolvable:$true] %s250
          %s252 = sshll.u32 [#allocation6], 4
          %s253 = int_to_ptr.vmem [resolvable:$true] %s252
          %258 = dma.hbm_to_vmem [thread:$0]  %s251, 256, %s253, [#allocation5], 64, 64, 4
        $region28: #{oanblock_forward.3} parent=11 // pred_fallthru
          _
        // Predicated region
        $region29: #{oanblock_forward.3} parent=11 // pred_check
          %p259 = pneg %p147
        $region30: #{oanblock_forward.3} parent=11 // pred_check_branch
          %261 = sbr.rel (%p259) target = $region32
        $region31: #{oanblock_forward.3} parent=11 // pred_region
          _
        $region32: #{oanblock_forward.3} parent=11 // pred_fallthru
          _
      $region12: #{oanblock_forward.3} parent=5 // pred_fallthru
        _
      %p262 = scmp.lt.s32.totalorder %s16, 2
      // Predicated region
      $region33: #{oanblock_forward.3} parent=5 // pred_check
        %p263 = pneg %p262
      $region34: #{oanblock_forward.3} parent=5 // pred_check_branch
        %265 = sbr.rel (%p263) target = $region36
      $region35: #{oanblock_forward.3} parent=5 // pred_region
        // Predicated region
        $region37: #{oanblock_forward.3} parent=35 // pred_check
          %p266 = pneg %p36
        $region38: #{oanblock_forward.3} parent=35 // pred_check_branch
          %268 = sbr.rel (%p266) target = $region40
        $region39: #{oanblock_forward.3} parent=35 // pred_region
          %p269 = scmp.lt.s32.totalorder %s16, 1
          %s270 = scalar_select %p269, %s16, 1
          %s271 = smul.addr %s270, 2
          %s272 = smul.addr %s271, 8
          %s273 = scalar_lea.vmem %s0, %s272
        $region40: #{oanblock_forward.3} parent=35 // pred_fallthru
          _
      $region36: #{oanblock_forward.3} parent=5 // pred_fallthru
        _
      %p274 = scmp.le.s32.totalorder 1, %s16
      %p275 = scmp.lt.s32.totalorder %s16, 3
      %p276 = pnand %p274, %p275
      %p277 = pneg %p276
      // Predicated region
      $region41: #{oanblock_forward.3} parent=5 // pred_check
        _
      $region42: #{oanblock_forward.3} parent=5 // pred_check_branch
        %279 = sbr.rel (%p276) target = $region44
      $region43: #{oanblock_forward.3} parent=5 // pred_region
        %s280 = ssub.s32 %s16, 1
        // Predicated region
        $region45: #{oanblock_forward.3} parent=43 // pred_check
          %p281 = pneg %p63
        $region46: #{oanblock_forward.3} parent=43 // pred_check_branch
          %283 = sbr.rel (%p281) target = $region48
        $region47: #{oanblock_forward.3} parent=43 // pred_region
          %285 = dma.done [#allocation3], 256
        $region48: #{oanblock_forward.3} parent=43 // pred_fallthru
          _
        // Predicated region
        $region49: #{oanblock_forward.3} parent=43 // pred_check
          %p286 = pneg %p105
        $region50: #{oanblock_forward.3} parent=43 // pred_check_branch
          %288 = sbr.rel (%p286) target = $region52
        $region51: #{oanblock_forward.3} parent=43 // pred_region
          %290 = dma.done [#allocation5], 1024
        $region52: #{oanblock_forward.3} parent=43 // pred_fallthru
          _
        // Predicated region
        $region53: #{oanblock_forward.3} parent=43 // pred_check
          %p291 = pneg %p126
        $region54: #{oanblock_forward.3} parent=43 // pred_check_branch
          %293 = sbr.rel (%p291) target = $region56
        $region55: #{oanblock_forward.3} parent=43 // pred_region
          %295 = dma.done [#allocation5], 256
        $region56: #{oanblock_forward.3} parent=43 // pred_fallthru
          _
        %p296 = scmp.lt.s32.totalorder %s21, 1
        %s297 = scalar_select %p296, %s21, 1
        %s298 = smul.addr %s297, 2
        %s299 = smul.addr %s298, 8
        %s300 = scalar_lea.vmem %s0, %s299
        %p301 = pneg %p42
        %p302 = pneg %p39
        %p303 = pneg %p63
        %p304 = pneg %p60
        %p305 = pneg %p84
        %p306 = pneg %p81
        %p307 = pneg %p105
        %p308 = pneg %p102
        %p309 = pneg %p126
        %p310 = pneg %p123
        %p311 = pneg %p147
        %p312 = pneg %p144
        %p313 = pneg %p173
        %p314 = pneg %p170
        %p315 = scmp.lt.s32.totalorder %s21, 1
        %s316 = scalar_select %p315, %s21, 1
        %s317 = smul.addr %s316, 2
        %s318 = smul.addr %s317, 4
        %s319 = scalar_lea.vmem %s6, %s318
        %p320 = pneg %p199
        %p321 = pneg %p196
        %p322 = scmp.lt.s32.totalorder %s21, 1
        %s323 = scalar_select %p322, %s21, 1
        %s324 = smul.addr %s323, 4
        %s325 = scalar_lea.vmem %s7, %s324
        %p326 = scmp.lt.s32.totalorder %s21, 1
        %s327 = scalar_select %p326, %s21, 1
        %s328 = smul.addr %s327, 2
        %s329 = smul.addr %s328, 8
        %s330 = scalar_lea.vmem %s0, %s329
        %p331 = scmp.lt.s32.totalorder %s21, 1
        %s332 = scalar_select %p331, %s21, 1
        %s333 = smul.addr %s332, 2
        %s334 = smul.addr %s333, 4
        %s335 = scalar_lea.vmem %s6, %s334
        %p336 = scmp.lt.s32.totalorder %s21, 1
        %s337 = scalar_select %p336, %s21, 1
        %s338 = smul.addr %s337, 4
        %s339 = scalar_lea.vmem %s7, %s338
        %v341 = vld [vmem:[%s330] sm:$0xff]
        %v342 = vld [vmem:[%s330 + $0x8] sm:$0xff]
        %v343 = vld [vmem:[%s2] sm:$0x1]
        %345 = vset.pattern.permute.xlu0 0
        %346 = vperm.xlu0 %345, %v341
        %v347 = vpop.permute.xlu0 %346
        %350 = vset.pattern.permute.xlu0 0
        %351 = vperm.xlu0 %350, %v342
        %v352 = vpop.permute.xlu0 %351
        %v354 = vperm.slane %v343, 0
        %v355 = vmul.f32 %v347, %v354
        %v356 = vmul.f32 %v352, %v354
        %v357 = vld [vmem:[#allocation2] sm:$0x1]
        %v358 = vperm.slane %v357, 0
        %v359 = vadd.f32 %v355, %v358
        %v360 = vadd.f32 %v356, %v358
        %v361 = vld [vmem:[%s2 + $0x1] sm:$0x1]
        %362 = vset.pattern.permute.xlu0 1
        %363 = vperm.xlu0 %362, %v341
        %v364 = vpop.permute.xlu0 %363
        %366 = vset.pattern.permute.xlu0 1
        %367 = vperm.xlu0 %366, %v342
        %v368 = vpop.permute.xlu0 %367
        %v370 = vperm.slane %v361, 0
        %v371 = vmul.f32 %v364, %v370
        %v372 = vmul.f32 %v368, %v370
        %v373 = vadd.f32 %v359, %v371
        %v374 = vadd.f32 %v360, %v372
        %v375 = vld [vmem:[%s2 + $0x2] sm:$0x1]
        %376 = vset.pattern.permute.xlu0 2
        %377 = vperm.xlu0 %376, %v341
        %v378 = vpop.permute.xlu0 %377
        %380 = vset.pattern.permute.xlu0 2
        %381 = vperm.xlu0 %380, %v342
        %v382 = vpop.permute.xlu0 %381
        %v384 = vperm.slane %v375, 0
        %v385 = vmul.f32 %v378, %v384
        %v386 = vmul.f32 %v382, %v384
        %v387 = vadd.f32 %v373, %v385
        %v388 = vadd.f32 %v374, %v386
        %v389 = vld [vmem:[%s2 + $0x3] sm:$0x1]
        %390 = vset.pattern.permute.xlu0 3
        %391 = vperm.xlu0 %390, %v341
        %v392 = vpop.permute.xlu0 %391
        %394 = vset.pattern.permute.xlu0 3
        %395 = vperm.xlu0 %394, %v342
        %v396 = vpop.permute.xlu0 %395
        %v398 = vperm.slane %v389, 0
        %v399 = vmul.f32 %v392, %v398
        %v400 = vmul.f32 %v396, %v398
        %v401 = vadd.f32 %v387, %v399
        %v402 = vadd.f32 %v388, %v400
        %v403 = vld [vmem:[#allocation2 + $0x1] sm:$0x1]
        %v404 = vld [vmem:[#allocation2 + $0x2] sm:$0x1]
        %v405 = vld [vmem:[#allocation2 + $0x3] sm:$0x1]
        %v406 = vld [vmem:[#allocation2 + $0x4] sm:$0x1]
        %v407 = vld [vmem:[#allocation2 + $0x5] sm:$0x1]
        %v408 = vld [vmem:[#allocation2 + $0x6] sm:$0x1]
        %vm409 = vcmask 261120
        %v410 = vsel %vm409, %v401, 0.0
        %v411 = vsel %vm409, %v402, 0.0
        %v412 = vadd.f32 %v410, %v411
        %v413 = vrot.slane %v412, 4
        %v414 = vadd.f32 %v412, %v413
        %v415 = vrot.slane %v414, 2
        %v416 = vadd.f32 %v414, %v415
        %v417 = vrot.slane %v416, 1
        %v418 = vadd.f32 %v416, %v417
        %v419 = vrcp.pop 16.0
        %v420 = vmul.f32 16.0, %v419
        %v421 = vsub.f32 1.0, %v420
        %v422 = vmul.f32 %v419, %v421
        %v423 = vadd.f32 %v419, %v422
        %vm424 = vweird.f32 %v419
        %v425 = vsel %vm424, %v419, %v423
        %v426 = vmul.f32 %v418, %v425
        %v427 = vmul.f32 %v401, %v401
        %v428 = vmul.f32 %v402, %v402
        %v429 = vsel %vm409, %v427, 0.0
        %v430 = vsel %vm409, %v428, 0.0
        %v431 = vadd.f32 %v429, %v430
        %v432 = vrot.slane %v431, 4
        %v433 = vadd.f32 %v431, %v432
        %v434 = vrot.slane %v433, 2
        %v435 = vadd.f32 %v433, %v434
        %v436 = vrot.slane %v435, 1
        %v437 = vadd.f32 %v435, %v436
        %v438 = vmul.f32 %v437, %v425
        %v439 = vmul.f32 %v426, %v426
        %v440 = vsub.f32 %v438, %v439
        %v441 = vmax.f32 %v440, 0.0
        %v442 = vsub.f32 %v401, %v426
        %v443 = vsub.f32 %v402, %v426
        %v444 = vadd.f32 %v441, 0.001
        %v445 = vrsqrt.pop %v444
        %v446 = vmul.f32 %v445, %v444
        %v447 = vmul.f32 %v446, %v445
        %v448 = vmul.f32 0.5, %v447
        %v449 = vsub.f32 1.5, %v448
        %v450 = vmul.f32 %v445, %v449
        %vm451 = vweird.f32 %v444
        %vm452 = vweird.f32 %v445
        %vm453 = vmor %vm451, %vm452
        %v454 = vsel %vm453, %v445, %v450
        %v455 = vmul.f32 %v442, %v454
        %v456 = vmul.f32 %v443, %v454
        %v457 = vperm.slane %v403, 0
        %v458 = vmul.f32 %v455, %v457
        %v459 = vmul.f32 %v456, %v457
        %v460 = vperm.slane %v404, 0
        %v461 = vadd.f32 %v458, %v460
        %v462 = vadd.f32 %v459, %v460
        %v463 = vmax.f32 %v461, 0.0
        %v464 = vmax.f32 %v462, 0.0
        %v465 = vld [vmem:[#allocation4] sm:$0xf]
        %v466 = vld [vmem:[#allocation4 + $0x4] sm:$0xf]
        %v467 = vld [vmem:[#allocation4 + $0x8] sm:$0xf]
        %v468 = vld [vmem:[#allocation4 + $0xc] sm:$0xf]
        %v469 = vpack.c.bf16 %v464, %v463
        %v470 = vperm.slane %v405, 0
        %v475 = vunpack.c.l.b16 %v465
        %v476 = vunpack.c.l.b16 %v466
        %v477 = vunpack.c.l.b16 %v467
        %v478 = vunpack.c.l.b16 %v468
        %v479 = vpack.c.b16 %v476, %v475
        %v480 = vpack.c.b16 %v478, %v477
        %v484 = vsel %vm409, %v469, 0
        %486 = vmatpush.bf16.msra.mxu0 0
        %487 = vmatpush.bf16.msra.mxu0 0
        %488 = vmatpush.bf16.msra.mxu0 0
        %489 = vmatpush.bf16.msra.mxu0 0
        %490 = vmatpush.bf16.msra.mxu0 0
        %491 = vmatpush.bf16.msra.mxu0 0
        %492 = vmatpush.bf16.msra.mxu0 %v480
        %493 = vmatpush.bf16.msra.mxu0 %v479
        %494 = vmatmul.bf16.gmra.mxu0 %v484
        %v495 = vpop.f32.mrf.mxu0
        %v496 = vadd.f32 %v470, %v495
        %v497 = vpop.f32.mrf.mxu0
        %v498 = vadd.f32 %v470, %v497
        %499 = vdwg.mxu0
        %v500 = vsel %vm409, %v496, 0.0
        %v501 = vsel %vm409, %v498, 0.0
        %v502 = vadd.f32 %v500, %v501
        %v503 = vrot.slane %v502, 4
        %v504 = vadd.f32 %v502, %v503
        %v505 = vrot.slane %v504, 2
        %v506 = vadd.f32 %v504, %v505
        %v507 = vrot.slane %v506, 1
        %v508 = vadd.f32 %v506, %v507
        %v509 = vmul.f32 %v508, %v425
        %v510 = vmul.f32 %v496, %v496
        %v511 = vmul.f32 %v498, %v498
        %v512 = vsel %vm409, %v510, 0.0
        %v513 = vsel %vm409, %v511, 0.0
        %v514 = vadd.f32 %v512, %v513
        %v515 = vrot.slane %v514, 4
        %v516 = vadd.f32 %v514, %v515
        %v517 = vrot.slane %v516, 2
        %v518 = vadd.f32 %v516, %v517
        %v519 = vrot.slane %v518, 1
        %v520 = vadd.f32 %v518, %v519
        %v521 = vmul.f32 %v520, %v425
        %v522 = vmul.f32 %v509, %v509
        %v523 = vsub.f32 %v521, %v522
        %v524 = vmax.f32 %v523, 0.0
        %v525 = vsub.f32 %v496, %v509
        %v526 = vsub.f32 %v498, %v509
        %v527 = vadd.f32 %v524, 0.001
        %v528 = vrsqrt.pop %v527
        %v529 = vmul.f32 %v528, %v527
        %v530 = vmul.f32 %v529, %v528
        %v531 = vmul.f32 0.5, %v530
        %v532 = vsub.f32 1.5, %v531
        %v533 = vmul.f32 %v528, %v532
        %vm534 = vweird.f32 %v527
        %vm535 = vweird.f32 %v528
        %vm536 = vmor %vm534, %vm535
        %v537 = vsel %vm536, %v528, %v533
        %v538 = vmul.f32 %v525, %v537
        %v539 = vmul.f32 %v526, %v537
        %v540 = vperm.slane %v406, 0
        %v541 = vmul.f32 %v538, %v540
        %v542 = vmul.f32 %v539, %v540
        %v543 = vperm.slane %v407, 0
        %v544 = vadd.f32 %v541, %v543
        %v545 = vadd.f32 %v542, %v543
        %v546 = vmax.f32 %v544, 0.0
        %v547 = vmax.f32 %v545, 0.0
        %s548 = scalar_lea.vmem [#allocation4], 16
        %v549 = vld [vmem:[%s548] sm:$0xf]
        %v550 = vld [vmem:[%s548 + $0x4] sm:$0xf]
        %v551 = vld [vmem:[%s548 + $0x8] sm:$0xf]
        %v552 = vld [vmem:[%s548 + $0xc] sm:$0xf]
        %v553 = vpack.c.bf16 %v547, %v546
        %v554 = vperm.slane %v408, 0
        %v559 = vunpack.c.l.b16 %v549
        %v560 = vunpack.c.l.b16 %v550
        %v561 = vunpack.c.l.b16 %v551
        %v562 = vunpack.c.l.b16 %v552
        %v563 = vpack.c.b16 %v560, %v559
        %v564 = vpack.c.b16 %v562, %v561
        %v568 = vsel %vm409, %v553, 0
        %570 = vmatpush.bf16.msra.mxu0 0
        %571 = vmatpush.bf16.msra.mxu0 0
        %572 = vmatpush.bf16.msra.mxu0 0
        %573 = vmatpush.bf16.msra.mxu0 0
        %574 = vmatpush.bf16.msra.mxu0 0
        %575 = vmatpush.bf16.msra.mxu0 0
        %576 = vmatpush.bf16.msra.mxu0 %v564
        %577 = vmatpush.bf16.msra.mxu0 %v563
        %578 = vmatmul.bf16.gmra.mxu0 %v568
        %v579 = vpop.f32.mrf.mxu0
        %v580 = vadd.f32 %v554, %v579
        %v581 = vpop.f32.mrf.mxu0
        %v582 = vadd.f32 %v554, %v581
        %583 = vdwg.mxu0
        %v584 = vadd.f32 %v401, %v580
        %v585 = vadd.f32 %v402, %v582
        %v586 = vld [vmem:[#allocation2 + $0x7] sm:$0x1]
        %v587 = vld [vmem:[#allocation2 + $0x8] sm:$0x1]
        %v588 = vld [vmem:[#allocation2 + $0x9] sm:$0x1]
        %v589 = vld [vmem:[#allocation2 + $0xa] sm:$0x1]
        %v590 = vld [vmem:[#allocation2 + $0xb] sm:$0x1]
        %v591 = vld [vmem:[#allocation2 + $0xc] sm:$0x1]
        %v592 = vsel %vm409, %v584, 0.0
        %v593 = vsel %vm409, %v585, 0.0
        %v594 = vadd.f32 %v592, %v593
        %v595 = vrot.slane %v594, 4
        %v596 = vadd.f32 %v594, %v595
        %v597 = vrot.slane %v596, 2
        %v598 = vadd.f32 %v596, %v597
        %v599 = vrot.slane %v598, 1
        %v600 = vadd.f32 %v598, %v599
        %v601 = vmul.f32 %v600, %v425
        %v602 = vmul.f32 %v584, %v584
        %v603 = vmul.f32 %v585, %v585
        %v604 = vsel %vm409, %v602, 0.0
        %v605 = vsel %vm409, %v603, 0.0
        %v606 = vadd.f32 %v604, %v605
        %v607 = vrot.slane %v606, 4
        %v608 = vadd.f32 %v606, %v607
        %v609 = vrot.slane %v608, 2
        %v610 = vadd.f32 %v608, %v609
        %v611 = vrot.slane %v610, 1
        %v612 = vadd.f32 %v610, %v611
        %v613 = vmul.f32 %v612, %v425
        %v614 = vmul.f32 %v601, %v601
        %v615 = vsub.f32 %v613, %v614
        %v616 = vmax.f32 %v615, 0.0
        %v617 = vsub.f32 %v584, %v601
        %v618 = vsub.f32 %v585, %v601
        %v619 = vadd.f32 %v616, 0.001
        %v620 = vrsqrt.pop %v619
        %v621 = vmul.f32 %v620, %v619
        %v622 = vmul.f32 %v621, %v620
        %v623 = vmul.f32 0.5, %v622
        %v624 = vsub.f32 1.5, %v623
        %v625 = vmul.f32 %v620, %v624
        %vm626 = vweird.f32 %v619
        %vm627 = vweird.f32 %v620
        %vm628 = vmor %vm626, %vm627
        %v629 = vsel %vm628, %v620, %v625
        %v630 = vmul.f32 %v617, %v629
        %v631 = vmul.f32 %v618, %v629
        %v632 = vperm.slane %v586, 0
        %v633 = vmul.f32 %v630, %v632
        %v634 = vmul.f32 %v631, %v632
        %v635 = vperm.slane %v587, 0
        %v636 = vadd.f32 %v633, %v635
        %v637 = vadd.f32 %v634, %v635
        %v638 = vmax.f32 %v636, 0.0
        %v639 = vmax.f32 %v637, 0.0
        %s640 = scalar_lea.vmem [#allocation4], 32
        %v641 = vld [vmem:[%s640] sm:$0xf]
        %v642 = vld [vmem:[%s640 + $0x4] sm:$0xf]
        %v643 = vld [vmem:[%s640 + $0x8] sm:$0xf]
        %v644 = vld [vmem:[%s640 + $0xc] sm:$0xf]
        %v645 = vpack.c.bf16 %v639, %v638
        %v646 = vperm.slane %v588, 0
        %v651 = vunpack.c.l.b16 %v641
        %v652 = vunpack.c.l.b16 %v642
        %v653 = vunpack.c.l.b16 %v643
        %v654 = vunpack.c.l.b16 %v644
        %v655 = vpack.c.b16 %v652, %v651
        %v656 = vpack.c.b16 %v654, %v653
        %v660 = vsel %vm409, %v645, 0
        %662 = vmatpush.bf16.msra.mxu0 0
        %663 = vmatpush.bf16.msra.mxu0 0
        %664 = vmatpush.bf16.msra.mxu0 0
        %665 = vmatpush.bf16.msra.mxu0 0
        %666 = vmatpush.bf16.msra.mxu0 0
        %667 = vmatpush.bf16.msra.mxu0 0
        %668 = vmatpush.bf16.msra.mxu0 %v656
        %669 = vmatpush.bf16.msra.mxu0 %v655
        %670 = vmatmul.bf16.gmra.mxu0 %v660
        %v671 = vpop.f32.mrf.mxu0
        %v672 = vadd.f32 %v646, %v671
        %v673 = vpop.f32.mrf.mxu0
        %v674 = vadd.f32 %v646, %v673
        %675 = vdwg.mxu0
        %v676 = vsel %vm409, %v672, 0.0
        %v677 = vsel %vm409, %v674, 0.0
        %v678 = vadd.f32 %v676, %v677
        %v679 = vrot.slane %v678, 4
        %v680 = vadd.f32 %v678, %v679
        %v681 = vrot.slane %v680, 2
        %v682 = vadd.f32 %v680, %v681
        %v683 = vrot.slane %v682, 1
        %v684 = vadd.f32 %v682, %v683
        %v685 = vmul.f32 %v684, %v425
        %v686 = vmul.f32 %v672, %v672
        %v687 = vmul.f32 %v674, %v674
        %v688 = vsel %vm409, %v686, 0.0
        %v689 = vsel %vm409, %v687, 0.0
        %v690 = vadd.f32 %v688, %v689
        %v691 = vrot.slane %v690, 4
        %v692 = vadd.f32 %v690, %v691
        %v693 = vrot.slane %v692, 2
        %v694 = vadd.f32 %v692, %v693
        %v695 = vrot.slane %v694, 1
        %v696 = vadd.f32 %v694, %v695
        %v697 = vmul.f32 %v696, %v425
        %v698 = vmul.f32 %v685, %v685
        %v699 = vsub.f32 %v697, %v698
        %v700 = vmax.f32 %v699, 0.0
        %v701 = vsub.f32 %v672, %v685
        %v702 = vsub.f32 %v674, %v685
        %v703 = vadd.f32 %v700, 0.001
        %v704 = vrsqrt.pop %v703
        %v705 = vmul.f32 %v704, %v703
        %v706 = vmul.f32 %v705, %v704
        %v707 = vmul.f32 0.5, %v706
        %v708 = vsub.f32 1.5, %v707
        %v709 = vmul.f32 %v704, %v708
        %vm710 = vweird.f32 %v703
        %vm711 = vweird.f32 %v704
        %vm712 = vmor %vm710, %vm711
        %v713 = vsel %vm712, %v704, %v709
        %v714 = vmul.f32 %v701, %v713
        %v715 = vmul.f32 %v702, %v713
        %v716 = vperm.slane %v589, 0
        %v717 = vmul.f32 %v714, %v716
        %v718 = vmul.f32 %v715, %v716
        %v719 = vperm.slane %v590, 0
        %v720 = vadd.f32 %v717, %v719
        %v721 = vadd.f32 %v718, %v719
        %v722 = vmax.f32 %v720, 0.0
        %v723 = vmax.f32 %v721, 0.0
        %s724 = scalar_lea.vmem [#allocation4], 48
        %v725 = vld [vmem:[%s724] sm:$0xf]
        %v726 = vld [vmem:[%s724 + $0x4] sm:$0xf]
        %v727 = vld [vmem:[%s724 + $0x8] sm:$0xf]
        %v728 = vld [vmem:[%s724 + $0xc] sm:$0xf]
        %v729 = vpack.c.bf16 %v723, %v722
        %v730 = vperm.slane %v591, 0
        %v735 = vunpack.c.l.b16 %v725
        %v736 = vunpack.c.l.b16 %v726
        %v737 = vunpack.c.l.b16 %v727
        %v738 = vunpack.c.l.b16 %v728
        %v739 = vpack.c.b16 %v736, %v735
        %v740 = vpack.c.b16 %v738, %v737
        %v744 = vsel %vm409, %v729, 0
        %746 = vmatpush.bf16.msra.mxu0 0
        %747 = vmatpush.bf16.msra.mxu0 0
        %748 = vmatpush.bf16.msra.mxu0 0
        %749 = vmatpush.bf16.msra.mxu0 0
        %750 = vmatpush.bf16.msra.mxu0 0
        %751 = vmatpush.bf16.msra.mxu0 0
        %752 = vmatpush.bf16.msra.mxu0 %v740
        %753 = vmatpush.bf16.msra.mxu0 %v739
        %754 = vmatmul.bf16.gmra.mxu0 %v744
        %v755 = vpop.f32.mrf.mxu0
        %v756 = vadd.f32 %v730, %v755
        %v757 = vpop.f32.mrf.mxu0
        %v758 = vadd.f32 %v730, %v757
        %759 = vdwg.mxu0
        %v760 = vadd.f32 %v584, %v756
        %v761 = vadd.f32 %v585, %v758
        %v762 = vpack.c.bf16 %v760, %v760
        %v763 = vpack.c.bf16 %v761, %v761
        %vm764 = vcmask 257024
        %765 = vst.msk [vmem:[%s335] sm:$0xf] %vm764, %v762
        %766 = vst.msk [vmem:[%s335 + $0x4] sm:$0xf] %vm764, %v763
        %v767 = vld [vmem:[#allocation2 + $0xd] sm:$0x1]
        %v768 = vld [vmem:[#allocation2 + $0xe] sm:$0x1]
        %v769 = vsel %vm409, %v760, 0.0
        %v770 = vsel %vm409, %v761, 0.0
        %v771 = vadd.f32 %v769, %v770
        %v772 = vrot.slane %v771, 4
        %v773 = vadd.f32 %v771, %v772
        %v774 = vrot.slane %v773, 2
        %v775 = vadd.f32 %v773, %v774
        %v776 = vrot.slane %v775, 1
        %v777 = vadd.f32 %v775, %v776
        %v778 = vmul.f32 %v777, %v425
        %v779 = vmul.f32 %v760, %v760
        %v780 = vmul.f32 %v761, %v761
        %v781 = vsel %vm409, %v779, 0.0
        %v782 = vsel %vm409, %v780, 0.0
        %v783 = vadd.f32 %v781, %v782
        %v784 = vrot.slane %v783, 4
        %v785 = vadd.f32 %v783, %v784
        %v786 = vrot.slane %v785, 2
        %v787 = vadd.f32 %v785, %v786
        %v788 = vrot.slane %v787, 1
        %v789 = vadd.f32 %v787, %v788
        %v790 = vmul.f32 %v789, %v425
        %v791 = vmul.f32 %v778, %v778
        %v792 = vsub.f32 %v790, %v791
        %v793 = vmax.f32 %v792, 0.0
        %v794 = vsub.f32 %v760, %v778
        %v795 = vsub.f32 %v761, %v778
        %v796 = vadd.f32 %v793, 0.001
        %v797 = vrsqrt.pop %v796
        %v798 = vmul.f32 %v797, %v796
        %v799 = vmul.f32 %v798, %v797
        %v800 = vmul.f32 0.5, %v799
        %v801 = vsub.f32 1.5, %v800
        %v802 = vmul.f32 %v797, %v801
        %vm803 = vweird.f32 %v796
        %vm804 = vweird.f32 %v797
        %vm805 = vmor %vm803, %vm804
        %v806 = vsel %vm805, %v797, %v802
        %v807 = vmul.f32 %v794, %v806
        %v808 = vmul.f32 %v795, %v806
        %v809 = vperm.slane %v767, 0
        %v810 = vmul.f32 %v807, %v809
        %v811 = vmul.f32 %v808, %v809
        %v812 = vperm.slane %v768, 0
        %v813 = vadd.f32 %v810, %v812
        %v814 = vadd.f32 %v811, %v812
        %v815 = vmax.f32 %v813, 0.0
        %v816 = vmax.f32 %v814, 0.0
        %v817 = vld [vmem:[#allocation6] sm:$0xf]
        %v818 = vld [vmem:[#allocation6 + $0x4] sm:$0xf]
        %v819 = vld [vmem:[#allocation6 + $0x8] sm:$0xf]
        %v820 = vld [vmem:[#allocation6 + $0xc] sm:$0xf]
        %v821 = vpack.c.bf16 %v816, %v815
        %v822 = vld [vmem:[%s5] sm:$0x1]
        %v824 = vperm.slane %v822, 0
        %v830 = vunpack.c.l.b16 %v817
        %v831 = vunpack.c.l.b16 %v818
        %v832 = vunpack.c.l.b16 %v819
        %v833 = vunpack.c.l.b16 %v820
        %v834 = vpack.c.b16 %v831, %v830
        %v835 = vpack.c.b16 %v833, %v832
        %v839 = vsel %vm409, %v821, 0
        %841 = vmatpush.bf16.msra.mxu0 0
        %842 = vmatpush.bf16.msra.mxu0 0
        %843 = vmatpush.bf16.msra.mxu0 0
        %844 = vmatpush.bf16.msra.mxu0 0
        %845 = vmatpush.bf16.msra.mxu0 0
        %846 = vmatpush.bf16.msra.mxu0 0
        %847 = vmatpush.bf16.msra.mxu0 %v835
        %848 = vmatpush.bf16.msra.mxu0 %v834
        %849 = vmatmul.bf16.gmra.mxu0 %v839
        %v850 = vpop.f32.mrf.mxu0
        %v851 = vadd.f32 %v824, %v850
        %v852 = vpop.f32.mrf.mxu0
        %v853 = vadd.f32 %v824, %v852
        %854 = vdwg.mxu0
        %vm855 = vcmask 64512
        %v856 = vsel %vm855, %v851, -inf
        %v857 = vsel %vm855, %v853, -inf
        %v858 = vmax.f32 %v856, %v857
        %v859 = vrot.slane %v858, 4
        %v860 = vmax.f32 %v858, %v859
        %v861 = vrot.slane %v860, 2
        %v862 = vmax.f32 %v860, %v861
        %v863 = vrot.slane %v862, 1
        %v864 = vmax.f32 %v862, %v863
        %v865 = vsub.f32 %v851, %v864
        %v866 = vsub.f32 %v853, %v864
        %v867 = vmul.f32 %v865, 1.442695
        %v868 = vpow.pop %v867
        %v869 = vmul.f32 %v866, 1.442695
        %v870 = vpow.pop %v869
        %v871 = vsel %vm855, %v868, 0.0
        %v872 = vsel %vm855, %v870, 0.0
        %v873 = vadd.f32 %v871, %v872
        %v874 = vrot.slane %v873, 4
        %v875 = vadd.f32 %v873, %v874
        %v876 = vrot.slane %v875, 2
        %v877 = vadd.f32 %v875, %v876
        %v878 = vrot.slane %v877, 1
        %v879 = vadd.f32 %v877, %v878
        %v880 = vrcp.pop %v879
        %v881 = vmul.f32 %v879, %v880
        %v882 = vsub.f32 1.0, %v881
        %v883 = vmul.f32 %v880, %v882
        %v884 = vadd.f32 %v880, %v883
        %vm885 = vweird.f32 %v879
        %vm886 = vweird.f32 %v880
        %vm887 = vmor %vm885, %vm886
        %v888 = vsel %vm887, %v880, %v884
        %v889 = vand.u32 2147483647, %v879
        %vm890 = vcmp.eq.f32.partialorder %v889, 8.507059e+37
        %v891 = vand.u32 %v879, 2147483648
        %v892 = vor.u32 1.1754944e-38, %v891
        %v893 = vsel %vm890, %v892, %v888
        %v894 = vmul.f32 %v868, %v893
        %v895 = vmul.f32 %v870, %v893
        %896 = vxpose.xlu0.b32.start [1/16] %v894, 128
        %897 = vxpose.xlu0.b32.cont [2/16] %v895, 128
        %898 = vxpose.xlu0.b32.cont [3/16] 0.0, 128
        %899 = vxpose.xlu0.b32.cont [4/16] 0.0, 128
        %900 = vxpose.xlu0.b32.cont [5/16] 0.0, 128
        %901 = vxpose.xlu0.b32.cont [6/16] 0.0, 128
        %902 = vxpose.xlu0.b32.cont [7/16] 0.0, 128
        %903 = vxpose.xlu0.b32.cont [8/16] 0.0, 128
        %904 = vxpose.xlu0.b32.cont [9/16] 0.0, 128
        %905 = vxpose.xlu0.b32.cont [10/16] 0.0, 128
        %906 = vxpose.xlu0.b32.cont [11/16] 0.0, 128
        %907 = vxpose.xlu0.b32.cont [12/16] 0.0, 128
        %908 = vxpose.xlu0.b32.cont [13/16] 0.0, 128
        %909 = vxpose.xlu0.b32.cont [14/16] 0.0, 128
        %910 = vxpose.xlu0.b32.cont [15/16] 0.0, 128
        %911 = vxpose.xlu0.b32.end [16/16] 0.0, 128
        %v912 = vpop.trf.xlu0
        %v913 = vpop.trf.xlu0
        %v914 = vpop.trf.xlu0
        %v915 = vpop.trf.xlu0
        %v916 = vpop.trf.xlu0
        %v917 = vpop.trf.xlu0
        %v918 = vpop.trf.xlu0
        %v919 = vpop.trf.xlu0
        %v920 = vpop.trf.xlu0
        %v921 = vpop.trf.xlu0
        %v922 = vpop.trf.xlu0
        %v923 = vpop.trf.xlu0
        %v924 = vpop.trf.xlu0
        %v925 = vpop.trf.xlu0
        %v926 = vpop.trf.xlu0
        %v927 = vpop.trf.xlu0
        %v928 = vpack.c.bf16 %v912, %v912
        %v931 = vunpack.c.l.b16 %v762
        %v932 = vunpack.c.l.b16 %v763
        %v933 = vpack.c.b16 %v932, %v931
        %vm935 = vcmask 130048
        %v937 = vsel %vm935, %v928, 0
        %939 = vmatpush.bf16.msra.mxu0 0
        %940 = vmatpush.bf16.msra.mxu0 0
        %941 = vmatpush.bf16.msra.mxu0 0
        %942 = vmatpush.bf16.msra.mxu0 0
        %943 = vmatpush.bf16.msra.mxu0 0
        %944 = vmatpush.bf16.msra.mxu0 0
        %945 = vmatpush.bf16.msra.mxu0 0
        %946 = vmatpush.bf16.msra.mxu0 %v933
        %947 = vmatmul.bf16.gmra.mxu0 %v937
        %v948 = vpop.f32.mrf.mxu0
        %v949 = vadd.f32 0.0, %v948
        %v950 = vpop.f32.mrf.mxu0
        %951 = vdwg.mxu0
        %v952 = vpack.c.bf16 %v949, %v949
        %953 = vst.msk [vmem:[%s339] sm:$0xf] %vm764, %v952
        %p954 = scmp.lt.s32.totalorder %s21, 1
        %s955 = scalar_select %p954, %s21, 1
        %s956 = smul.addr %s955, 2
        %s957 = smul.addr %s956, 4
        %s958 = scalar_lea.vmem %s6, %s957
        %p959 = scmp.lt.s32.totalorder %s21, 1
        %s960 = scalar_select %p959, %s21, 1
        %s961 = smul.addr %s960, 4
        %s962 = scalar_lea.vmem %s7, %s961
        // Predicated region
        $region57: #{oanblock_forward.3} parent=43 // pred_check
          %p963 = pneg %p170
        $region58: #{oanblock_forward.3} parent=43 // pred_check_branch
          %965 = sbr.rel (%p963) target = $region60
        $region59: #{oanblock_forward.3} parent=43 // pred_region
          _
        $region60: #{oanblock_forward.3} parent=43 // pred_fallthru
          _
        // Predicated region
        $region61: #{oanblock_forward.3} parent=43 // pred_check
          %p966 = pneg %p196
        $region62: #{oanblock_forward.3} parent=43 // pred_check_branch
          %968 = sbr.rel (%p966) target = $region64
        $region63: #{oanblock_forward.3} parent=43 // pred_region
          _
        $region64: #{oanblock_forward.3} parent=43 // pred_fallthru
          _
      $region44: #{oanblock_forward.3} parent=5 // pred_fallthru
        _
      %p969 = scmp.le.s32.totalorder 2, %s16
      // Predicated region
      $region65: #{oanblock_forward.3} parent=5 // pred_check
        %p970 = pneg %p969
      $region66: #{oanblock_forward.3} parent=5 // pred_check_branch
        %972 = sbr.rel (%p970) target = $region68
      $region67: #{oanblock_forward.3} parent=5 // pred_region
        %s973 = ssub.s32 %s16, 2
        // Predicated region
        $region69: #{oanblock_forward.3} parent=67 // pred_check
          %p974 = pneg %p176
        $region70: #{oanblock_forward.3} parent=67 // pred_check_branch
          %976 = sbr.rel (%p974) target = $region72
        $region71: #{oanblock_forward.3} parent=67 // pred_region
          %p977 = scmp.lt.s32.totalorder %s22, 1
          %s978 = scalar_select %p977, %s22, 1
          %s979 = smul.addr %s978, 2
          %s980 = smul.addr %s979, 4
          %s981 = scalar_lea.vmem %s6, %s980
        $region72: #{oanblock_forward.3} parent=67 // pred_fallthru
          _
        // Predicated region
        $region73: #{oanblock_forward.3} parent=67 // pred_check
          %p982 = pneg %p202
        $region74: #{oanblock_forward.3} parent=67 // pred_check_branch
          %984 = sbr.rel (%p982) target = $region76
        $region75: #{oanblock_forward.3} parent=67 // pred_region
          %p985 = scmp.lt.s32.totalorder %s22, 1
          %s986 = scalar_select %p985, %s22, 1
          %s987 = smul.addr %s986, 4
          %s988 = scalar_lea.vmem %s7, %s987
        $region76: #{oanblock_forward.3} parent=67 // pred_fallthru
          _
      $region68: #{oanblock_forward.3} parent=5 // pred_fallthru
        _
    $region6: #{oanblock_forward.3} parent=1 // loop_footer
      %s20 = sadd.s32 1, %s16
    $region7: #{oanblock_forward.3} parent=1 // loop_footer_branch
      %15 = sbr.rel target = $region3
    $region8: #{oanblock_forward.3} parent=1 // loop_exit
      _
    %989 = vsyncpa [#allocation3], 1
    %s990 = scalar_lea.sflag [#allocation3], 1
    %991 = vsyncpa %s990, 1
    %992 = vsyncpa [#allocation5], 1

// kernel: oanblock_forward.4
$region0: #{oanblock_forward.4}
  #allocation0 [shape = 'u32[]', space=smem, size = 0x4, offset = 0x4, fixed_abs, tag = 'smem constant byte address 0x4 - core index']
  #allocation1 [shape = 'u32[72,128]{1,0:T(1,128)}', space=vmem, size = 0x9000, scoped, tag = 'internal scratch']
  %s0 = inlined_call_operand.vmem [shape: bf16[2,8,32], index: 0, kind: input, shape index: {}]
  %s1 = inlined_call_operand.hbm [shape: f32[12,32], index: 1, kind: input, shape index: {}]
  %s2 = inlined_call_operand.hbm [shape: f32[8,6], index: 2, kind: input, shape index: {}]
  %s3 = inlined_call_operand.hbm [shape: bf16[4,32,32], index: 3, kind: input, shape index: {}]
  %s4 = inlined_call_operand.hbm [shape: bf16[2,8,8], index: 4, kind: input, shape index: {}]
  %s5 = inlined_call_operand.vmem [shape: bf16[2,8,32], index: 5, kind: output, shape index: {}]
  %s6 = sld [smem:[#allocation0]]
  $region69: #{oanblock_forward.4} parent=0
    _
  %s8 = ssub.s32 1, %s6
  %s9 = scalar_select 0, %s8, %s6
  $region1: #{oanblock_forward.4} parent=0
    #allocation2 [shape = 'u8[8192]{0}', space=vmem, size = 0x2000, scoped, tag = 'input window, operand 1, single buffered']
    #allocation3 [shape = 's32[2]{0}', space=sflag, size = 0x8, scoped, tag = 'scoped memory for oanblock_forward.4']
    #allocation4 [shape = 'u8[4096]{0}', space=vmem, size = 0x1000, scoped, tag = 'input window, operand 2, single buffered']
    #allocation5 [shape = 's32[1]{0}', space=sflag, size = 0x4, scoped, tag = 'scoped memory for oanblock_forward.4']
    #allocation6 [shape = 'u8[32768]{0}', space=vmem, size = 0x8000, scoped, tag = 'input window, operand 3, single buffered']
    #allocation7 [shape = 'u8[4096]{0}', space=vmem, size = 0x1000, scoped, tag = 'input window, operand 4, single buffered']
    #allocation8 [shape = 's32[1]{0}', space=sflag, size = 0x4, scoped, tag = 'scoped memory for oanblock_forward.4']
    %10 = vsyncpa [#allocation3], 0
    %11 = vsyncpa [#allocation5], 0
    %12 = vsyncpa [#allocation8], 0
    loop: start=0, step=1, limit=4
    $region2: #{oanblock_forward.4} parent=1 // loop_pre_header
      _
    $region3: #{oanblock_forward.4} parent=1 // loop_header
      %s14 = sphi 0, %s18
      %p15 = scmp.ge.s32.totalorder %s14, 4
      %s24 = sphi 0, %s26
      %s27 = sphi 0, %s24
      %s28 = sphi 0, %s27
      %s44 = sphi 0, %s28
      %s48 = sphi 0, %s48
      %s50 = sphi 0, %s48
      %s51 = sphi 0, %s50
      %s65 = sphi 0, %s51
      %s69 = sphi 0, %s69
      %s71 = sphi 0, %s69
      %s72 = sphi 0, %s71
      %s86 = sphi 0, %s72
      %s90 = sphi 0, %s90
      %s92 = sphi 0, %s90
      %s93 = sphi 0, %s92
      %s107 = sphi 0, %s93
      %s111 = sphi 0, %s111
      %s113 = sphi 0, %s111
      %s114 = sphi 0, %s113
      %s128 = sphi 0, %s114
      %s134 = sphi 0, %s136
      %s137 = sphi 0, %s134
      %s138 = sphi 0, %s137
      %s154 = sphi 0, %s138
    $region4: #{oanblock_forward.4} parent=1 // loop_header_branch
      %17 = sbr.rel (%p15) target = $region8
    $region5: #{oanblock_forward.4} parent=1 // loop_body
      %s19 = ssub.s32 %s14, 1
      %s20 = ssub.s32 %s14, 2
      %s21 = sadd.s32 %s14, 1
      %s22 = ssub.s32 %s14, %s21
      %p23 = scmp.eq.s32.totalorder %s22, 0
      %s25 = sadd.s32 %s24, 1
      %s26 = scalar_select %p23, %s24, %s25
      %p29 = pneg %p23
      %p30 = scmp.eq.s32.totalorder %s14, 1
      %p31 = por %p29, %p30
      %p32 = scmp.ne.s32.totalorder %s24, %s27
      %p33 = scmp.eq.s32.totalorder %s14, 0
      %p34 = por %p32, %p33
      %p35 = scmp.ne.s32.totalorder %s24, %s27
      %p36 = scmp.eq.s32.totalorder %s19, 1
      %p37 = por %p35, %p36
      %p38 = scmp.ne.s32.totalorder %s27, %s28
      %p39 = scmp.eq.s32.totalorder %s19, 0
      %p40 = por %p38, %p39
      %p41 = scmp.ne.s32.totalorder %s27, %s28
      %p42 = scmp.eq.s32.totalorder %s20, 1
      %p43 = por %p41, %p42
      %p45 = scmp.ne.s32.totalorder %s28, %s44
      %p46 = scmp.eq.s32.totalorder %s20, 0
      %p47 = por %p45, %p46
      %s49 = sadd.s32 %s48, 1
      %p52 = scmp.eq.s32.totalorder %s14, 1
      %p53 = scmp.ne.s32.totalorder %s48, %s50
      %p54 = scmp.eq.s32.totalorder %s14, 0
      %p55 = por %p53, %p54
      %p56 = scmp.ne.s32.totalorder %s48, %s50
      %p57 = scmp.eq.s32.totalorder %s19, 1
      %p58 = por %p56, %p57
      %p59 = scmp.ne.s32.totalorder %s50, %s51
      %p60 = scmp.eq.s32.totalorder %s19, 0
      %p61 = por %p59, %p60
      %p62 = scmp.ne.s32.totalorder %s50, %s51
      %p63 = scmp.eq.s32.totalorder %s20, 1
      %p64 = por %p62, %p63
      %p66 = scmp.ne.s32.totalorder %s51, %s65
      %p67 = scmp.eq.s32.totalorder %s20, 0
      %p68 = por %p66, %p67
      %s70 = sadd.s32 %s69, 1
      %p73 = scmp.eq.s32.totalorder %s14, 1
      %p74 = scmp.ne.s32.totalorder %s69, %s71
      %p75 = scmp.eq.s32.totalorder %s14, 0
      %p76 = por %p74, %p75
      %p77 = scmp.ne.s32.totalorder %s69, %s71
      %p78 = scmp.eq.s32.totalorder %s19, 1
      %p79 = por %p77, %p78
      %p80 = scmp.ne.s32.totalorder %s71, %s72
      %p81 = scmp.eq.s32.totalorder %s19, 0
      %p82 = por %p80, %p81
      %p83 = scmp.ne.s32.totalorder %s71, %s72
      %p84 = scmp.eq.s32.totalorder %s20, 1
      %p85 = por %p83, %p84
      %p87 = scmp.ne.s32.totalorder %s72, %s86
      %p88 = scmp.eq.s32.totalorder %s20, 0
      %p89 = por %p87, %p88
      %s91 = sadd.s32 %s90, 1
      %p94 = scmp.eq.s32.totalorder %s14, 1
      %p95 = scmp.ne.s32.totalorder %s90, %s92
      %p96 = scmp.eq.s32.totalorder %s14, 0
      %p97 = por %p95, %p96
      %p98 = scmp.ne.s32.totalorder %s90, %s92
      %p99 = scmp.eq.s32.totalorder %s19, 1
      %p100 = por %p98, %p99
      %p101 = scmp.ne.s32.totalorder %s92, %s93
      %p102 = scmp.eq.s32.totalorder %s19, 0
      %p103 = por %p101, %p102
      %p104 = scmp.ne.s32.totalorder %s92, %s93
      %p105 = scmp.eq.s32.totalorder %s20, 1
      %p106 = por %p104, %p105
      %p108 = scmp.ne.s32.totalorder %s93, %s107
      %p109 = scmp.eq.s32.totalorder %s20, 0
      %p110 = por %p108, %p109
      %s112 = sadd.s32 %s111, 1
      %p115 = scmp.eq.s32.totalorder %s14, 1
      %p116 = scmp.ne.s32.totalorder %s111, %s113
      %p117 = scmp.eq.s32.totalorder %s14, 0
      %p118 = por %p116, %p117
      %p119 = scmp.ne.s32.totalorder %s111, %s113
      %p120 = scmp.eq.s32.totalorder %s19, 1
      %p121 = por %p119, %p120
      %p122 = scmp.ne.s32.totalorder %s113, %s114
      %p123 = scmp.eq.s32.totalorder %s19, 0
      %p124 = por %p122, %p123
      %p125 = scmp.ne.s32.totalorder %s113, %s114
      %p126 = scmp.eq.s32.totalorder %s20, 1
      %p127 = por %p125, %p126
      %p129 = scmp.ne.s32.totalorder %s114, %s128
      %p130 = scmp.eq.s32.totalorder %s20, 0
      %p131 = por %p129, %p130
      %s132 = ssub.s32 %s14, %s21
      %p133 = scmp.eq.s32.totalorder %s132, 0
      %s135 = sadd.s32 %s134, 1
      %s136 = scalar_select %p133, %s134, %s135
      %p139 = pneg %p133
      %p140 = scmp.eq.s32.totalorder %s14, 1
      %p141 = por %p139, %p140
      %p142 = scmp.ne.s32.totalorder %s134, %s137
      %p143 = scmp.eq.s32.totalorder %s14, 0
      %p144 = por %p142, %p143
      %p145 = scmp.ne.s32.totalorder %s134, %s137
      %p146 = scmp.eq.s32.totalorder %s19, 1
      %p147 = por %p145, %p146
      %p148 = scmp.ne.s32.totalorder %s137, %s138
      %p149 = scmp.eq.s32.totalorder %s19, 0
      %p150 = por %p148, %p149
      %p151 = scmp.ne.s32.totalorder %s137, %s138
      %p152 = scmp.eq.s32.totalorder %s20, 1
      %p153 = por %p151, %p152
      %p155 = scmp.ne.s32.totalorder %s138, %s154
      %p156 = scmp.eq.s32.totalorder %s20, 0
      %p157 = por %p155, %p156
      %p158 = scmp.le.s32.totalorder 1, %s14
      %p159 = scmp.lt.s32.totalorder %s14, 3
      %p160 = pnand %p158, %p159
      %p161 = pneg %p160
      // Predicated region
      $region9: #{oanblock_forward.4} parent=5 // pred_check
        _
      $region10: #{oanblock_forward.4} parent=5 // pred_check_branch
        %163 = sbr.rel (%p160) target = $region12
      $region11: #{oanblock_forward.4} parent=5 // pred_region
        %s164 = ssub.s32 %s14, 1
        // Predicated region
        $region13: #{oanblock_forward.4} parent=11 // pred_check
          %p165 = pneg %p61
        $region14: #{oanblock_forward.4} parent=11 // pred_check_branch
          %167 = sbr.rel (%p165) target = $region16
        $region15: #{oanblock_forward.4} parent=11 // pred_region
          %169 = vsyncadd [#allocation3], 0
          %s170 = sshll.u32 %s1, 4
          %s171 = int_to_ptr.hbm [resolvable:$true] %s170
          %s172 = sshll.u32 [#allocation2], 4
          %s173 = int_to_ptr.vmem [resolvable:$true] %s172
          %178 = dma.hbm_to_vmem [thread:$0]  %s171, 256, %s173, [#allocation3], 128, 128, 8
        $region16: #{oanblock_forward.4} parent=11 // pred_fallthru
          _
        // Predicated region
        $region17: #{oanblock_forward.4} parent=11 // pred_check
          %p179 = pneg %p82
        $region18: #{oanblock_forward.4} parent=11 // pred_check_branch
          %181 = sbr.rel (%p179) target = $region20
        $region19: #{oanblock_forward.4} parent=11 // pred_region
          %183 = vsyncadd [#allocation5], 0
          %s185 = sshll.u32 %s2, 4
          %s186 = int_to_ptr.hbm [resolvable:$true] %s185
          %s187 = sshll.u32 [#allocation4], 4
          %s188 = int_to_ptr.vmem [resolvable:$true] %s187
          %190 = dma.hbm_to_vmem [thread:$0]  %s186, 128, %s188, [#allocation5]
        $region20: #{oanblock_forward.4} parent=11 // pred_fallthru
          _
        // Predicated region
        $region21: #{oanblock_forward.4} parent=11 // pred_check
          %p191 = pneg %p103
        $region22: #{oanblock_forward.4} parent=11 // pred_check_branch
          %193 = sbr.rel (%p191) target = $region24
        $region23: #{oanblock_forward.4} parent=11 // pred_region
          %195 = vsyncadd [#allocation5], 0
          %s196 = sshll.u32 %s3, 4
          %s197 = int_to_ptr.hbm [resolvable:$true] %s196
          %s198 = sshll.u32 [#allocation6], 4
          %s199 = int_to_ptr.vmem [resolvable:$true] %s198
          %204 = dma.hbm_to_vmem [thread:$0]  %s197, 1024, %s199, [#allocation5], 64, 64, 4
        $region24: #{oanblock_forward.4} parent=11 // pred_fallthru
          _
        // Predicated region
        $region25: #{oanblock_forward.4} parent=11 // pred_check
          %p205 = pneg %p124
        $region26: #{oanblock_forward.4} parent=11 // pred_check_branch
          %207 = sbr.rel (%p205) target = $region28
        $region27: #{oanblock_forward.4} parent=11 // pred_region
          %209 = vsyncadd [#allocation8], 0
          %s210 = sshll.u32 %s4, 4
          %s211 = int_to_ptr.hbm [resolvable:$true] %s210
          %s212 = sshll.u32 [#allocation7], 4
          %s213 = int_to_ptr.vmem [resolvable:$true] %s212
          %218 = dma.hbm_to_vmem [thread:$0]  %s211, 128, %s213, [#allocation8], 64, 64, 4
        $region28: #{oanblock_forward.4} parent=11 // pred_fallthru
          _
      $region12: #{oanblock_forward.4} parent=5 // pred_fallthru
        _
      %p219 = scmp.lt.s32.totalorder %s14, 2
      // Predicated region
      $region29: #{oanblock_forward.4} parent=5 // pred_check
        %p220 = pneg %p219
      $region30: #{oanblock_forward.4} parent=5 // pred_check_branch
        %222 = sbr.rel (%p220) target = $region32
      $region31: #{oanblock_forward.4} parent=5 // pred_region
        // Predicated region
        $region33: #{oanblock_forward.4} parent=31 // pred_check
          %p223 = pneg %p34
        $region34: #{oanblock_forward.4} parent=31 // pred_check_branch
          %225 = sbr.rel (%p223) target = $region36
        $region35: #{oanblock_forward.4} parent=31 // pred_region
          %p226 = scmp.lt.s32.totalorder %s14, 1
          %s227 = scalar_select %p226, %s14, 1
          %s228 = smul.addr %s227, 4
          %s229 = scalar_lea.vmem %s0, %s228
        $region36: #{oanblock_forward.4} parent=31 // pred_fallthru
          _
      $region32: #{oanblock_forward.4} parent=5 // pred_fallthru
        _
      %p230 = scmp.le.s32.totalorder 1, %s14
      %p231 = scmp.lt.s32.totalorder %s14, 3
      %p232 = pnand %p230, %p231
      %p233 = pneg %p232
      // Predicated region
      $region37: #{oanblock_forward.4} parent=5 // pred_check
        _
      $region38: #{oanblock_forward.4} parent=5 // pred_check_branch
        %235 = sbr.rel (%p232) target = $region40
      $region39: #{oanblock_forward.4} parent=5 // pred_region
        %s236 = ssub.s32 %s14, 1
        // Predicated region
        $region41: #{oanblock_forward.4} parent=39 // pred_check
          %p237 = pneg %p61
        $region42: #{oanblock_forward.4} parent=39 // pred_check_branch
          %239 = sbr.rel (%p237) target = $region44
        $region43: #{oanblock_forward.4} parent=39 // pred_region
          %241 = dma.done [#allocation3], 256
        $region44: #{oanblock_forward.4} parent=39 // pred_fallthru
          _
        // Predicated region
        $region45: #{oanblock_forward.4} parent=39 // pred_check
          %p242 = pneg %p82
        $region46: #{oanblock_forward.4} parent=39 // pred_check_branch
          %244 = sbr.rel (%p242) target = $region48
        $region47: #{oanblock_forward.4} parent=39 // pred_region
          %246 = dma.done [#allocation5], 128
        $region48: #{oanblock_forward.4} parent=39 // pred_fallthru
          _
        // Predicated region
        $region49: #{oanblock_forward.4} parent=39 // pred_check
          %p247 = pneg %p103
        $region50: #{oanblock_forward.4} parent=39 // pred_check_branch
          %249 = sbr.rel (%p247) target = $region52
        $region51: #{oanblock_forward.4} parent=39 // pred_region
          %251 = dma.done [#allocation5], 1024
        $region52: #{oanblock_forward.4} parent=39 // pred_fallthru
          _
        // Predicated region
        $region53: #{oanblock_forward.4} parent=39 // pred_check
          %p252 = pneg %p124
        $region54: #{oanblock_forward.4} parent=39 // pred_check_branch
          %254 = sbr.rel (%p252) target = $region56
        $region55: #{oanblock_forward.4} parent=39 // pred_region
          %256 = dma.done [#allocation8], 128
        $region56: #{oanblock_forward.4} parent=39 // pred_fallthru
          _
        %p257 = scmp.lt.s32.totalorder %s19, 1
        %s258 = scalar_select %p257, %s19, 1
        %s259 = smul.addr %s258, 4
        %s260 = scalar_lea.vmem %s0, %s259
        %p261 = pneg %p40
        %p262 = pneg %p37
        %p263 = pneg %p61
        %p264 = pneg %p58
        %p265 = pneg %p82
        %p266 = pneg %p79
        %p267 = pneg %p103
        %p268 = pneg %p100
        %p269 = pneg %p124
        %p270 = pneg %p121
        %p271 = pneg %p150
        %p272 = pneg %p147
        %p273 = scmp.lt.s32.totalorder %s19, 1
        %s274 = scalar_select %p273, %s19, 1
        %s275 = smul.addr %s274, 4
        %s276 = scalar_lea.vmem %s5, %s275
        %p277 = scmp.lt.s32.totalorder %s19, 1
        %s278 = scalar_select %p277, %s19, 1
        %s279 = smul.addr %s278, 4
        %s280 = scalar_lea.vmem %s0, %s279
        %p281 = scmp.lt.s32.totalorder %s19, 1
        %s282 = scalar_select %p281, %s19, 1
        %s283 = smul.addr %s282, 4
        %s284 = scalar_lea.vmem %s5, %s283
        %v286 = vld [vmem:[%s280] sm:$0xf]
        %v287 = vunpack.c.l.bf16 %v286
        %v288 = vld [vmem:[#allocation2] sm:$0x1]
        %v289 = vld [vmem:[#allocation2 + $0x1] sm:$0x1]
        %v290 = vld [vmem:[#allocation2 + $0x2] sm:$0x1]
        %v291 = vld [vmem:[#allocation2 + $0x3] sm:$0x1]
        %v292 = vld [vmem:[#allocation2 + $0x4] sm:$0x1]
        %v293 = vld [vmem:[#allocation2 + $0x5] sm:$0x1]
        %v294 = vld [vmem:[#allocation4] sm:$0xff]
        %vm295 = vcmask 261120
        %v296 = vsel %vm295, %v287, 0.0
        %v297 = vrot.slane %v296, 4
        %v298 = vadd.f32 %v296, %v297
        %v299 = vrot.slane %v298, 2
        %v300 = vadd.f32 %v298, %v299
        %v301 = vrot.slane %v300, 1
        %v302 = vadd.f32 %v300, %v301
        %v303 = vrcp.pop 8.0
        %v304 = vmul.f32 8.0, %v303
        %v305 = vsub.f32 1.0, %v304
        %v306 = vmul.f32 %v303, %v305
        %v307 = vadd.f32 %v303, %v306
        %vm308 = vweird.f32 %v303
        %v309 = vsel %vm308, %v303, %v307
        %v310 = vmul.f32 %v302, %v309
        %v311 = vmul.f32 %v287, %v287
        %v312 = vsel %vm295, %v311, 0.0
        %v313 = vrot.slane %v312, 4
        %v314 = vadd.f32 %v312, %v313
        %v315 = vrot.slane %v314, 2
        %v316 = vadd.f32 %v314, %v315
        %v317 = vrot.slane %v316, 1
        %v318 = vadd.f32 %v316, %v317
        %v319 = vmul.f32 %v318, %v309
        %v320 = vmul.f32 %v310, %v310
        %v321 = vsub.f32 %v319, %v320
        %v322 = vmax.f32 %v321, 0.0
        %v323 = vsub.f32 %v287, %v310
        %v324 = vadd.f32 %v322, 0.001
        %v325 = vrsqrt.pop %v324
        %v326 = vmul.f32 %v325, %v324
        %v327 = vmul.f32 %v326, %v325
        %v328 = vmul.f32 0.5, %v327
        %v329 = vsub.f32 1.5, %v328
        %v330 = vmul.f32 %v325, %v329
        %vm331 = vweird.f32 %v324
        %vm332 = vweird.f32 %v325
        %vm333 = vmor %vm331, %vm332
        %v334 = vsel %vm333, %v325, %v330
        %v335 = vmul.f32 %v323, %v334
        %v336 = vperm.slane %v288, 0
        %v337 = vmul.f32 %v335, %v336
        %v338 = vperm.slane %v289, 0
        %v339 = vadd.f32 %v337, %v338
        %v340 = vmax.f32 %v339, 0.0
        %v341 = vld [vmem:[#allocation6] sm:$0xf]
        %v342 = vld [vmem:[#allocation6 + $0x4] sm:$0xf]
        %v343 = vld [vmem:[#allocation6 + $0x8] sm:$0xf]
        %v344 = vld [vmem:[#allocation6 + $0xc] sm:$0xf]
        %v345 = vpack.c.bf16 %v340, %v340
        %v346 = vperm.slane %v290, 0
        %v351 = vunpack.c.l.b16 %v341
        %v352 = vunpack.c.l.b16 %v342
        %v353 = vunpack.c.l.b16 %v343
        %v354 = vunpack.c.l.b16 %v344
        %v355 = vpack.c.b16 %v352, %v351
        %v356 = vpack.c.b16 %v354, %v353
        %v360 = vsel %vm295, %v345, 0
        %362 = vmatpush.bf16.msra.mxu0 0
        %363 = vmatpush.bf16.msra.mxu0 0
        %364 = vmatpush.bf16.msra.mxu0 0
        %365 = vmatpush.bf16.msra.mxu0 0
        %366 = vmatpush.bf16.msra.mxu0 0
        %367 = vmatpush.bf16.msra.mxu0 0
        %368 = vmatpush.bf16.msra.mxu0 %v356
        %369 = vmatpush.bf16.msra.mxu0 %v355
        %370 = vmatmul.bf16.gmra.mxu0 %v360
        %v371 = vpop.f32.mrf.mxu0
        %v372 = vadd.f32 %v346, %v371
        %v373 = vpop.f32.mrf.mxu0
        %374 = vdwg.mxu0
        %376 = vset.pattern.permute.xlu0 0
        %377 = vperm.xlu0 %376, %v294
        %v378 = vpop.permute.xlu0 %377
        %v380 = vmul.f32 %v372, %v378
        %381 = vset.pattern.permute.xlu0 1
        %382 = vperm.xlu0 %381, %v294
        %v383 = vpop.permute.xlu0 %382
        %v385 = vadd.f32 %v380, %v383
        %v386 = vmax.f32 %v385, 0.0
        %v387 = vld [vmem:[#allocation7] sm:$0xf]
        %v388 = vpack.c.bf16 %v386, %v386
        %vm389 = vcmask 64512
        %v391 = vsel %vm389, %v387, 0
        %vm393 = vcmask 1043456
        %v395 = vsel %vm393, %v388, 0
        %397 = vmatpush.bf16.msra.mxu0 0
        %398 = vmatpush.bf16.msra.mxu0 0
        %399 = vmatpush.bf16.msra.mxu0 0
        %400 = vmatpush.bf16.msra.mxu0 0
        %401 = vmatpush.bf16.msra.mxu0 0
        %402 = vmatpush.bf16.msra.mxu0 0
        %403 = vmatpush.bf16.msra.mxu0 0
        %404 = vmatpush.bf16.msra.mxu0 %v395
        %405 = vmatmul.bf16.gmra.mxu0 %v391
        %v406 = vpop.f32.mrf.mxu0
        %v407 = vadd.f32 0.0, %v406
        %v408 = vpop.f32.mrf.mxu0
        %409 = vdwg.mxu0
        %v410 = vadd.f32 %v372, %v407
        %411 = vset.pattern.permute.xlu0 2
        %412 = vperm.xlu0 %411, %v294
        %v413 = vpop.permute.xlu0 %412
        %v415 = vadd.f32 %v410, %v413
        %v416 = vsel %vm295, %v415, 0.0
        %v417 = vrot.slane %v416, 4
        %v418 = vadd.f32 %v416, %v417
        %v419 = vrot.slane %v418, 2
        %v420 = vadd.f32 %v418, %v419
        %v421 = vrot.slane %v420, 1
        %v422 = vadd.f32 %v420, %v421
        %v423 = vmul.f32 %v422, %v309
        %v424 = vmul.f32 %v415, %v415
        %v425 = vsel %vm295, %v424, 0.0
        %v426 = vrot.slane %v425, 4
        %v427 = vadd.f32 %v425, %v426
        %v428 = vrot.slane %v427, 2
        %v429 = vadd.f32 %v427, %v428
        %v430 = vrot.slane %v429, 1
        %v431 = vadd.f32 %v429, %v430
        %v432 = vmul.f32 %v431, %v309
        %v433 = vmul.f32 %v423, %v423
        %v434 = vsub.f32 %v432, %v433
        %v435 = vmax.f32 %v434, 0.0
        %v436 = vsub.f32 %v415, %v423
        %v437 = vadd.f32 %v435, 0.001
        %v438 = vrsqrt.pop %v437
        %v439 = vmul.f32 %v438, %v437
        %v440 = vmul.f32 %v439, %v438
        %v441 = vmul.f32 0.5, %v440
        %v442 = vsub.f32 1.5, %v441
        %v443 = vmul.f32 %v438, %v442
        %vm444 = vweird.f32 %v437
        %vm445 = vweird.f32 %v438
        %vm446 = vmor %vm444, %vm445
        %v447 = vsel %vm446, %v438, %v443
        %v448 = vmul.f32 %v436, %v447
        %v449 = vperm.slane %v291, 0
        %v450 = vmul.f32 %v448, %v449
        %v451 = vperm.slane %v292, 0
        %v452 = vadd.f32 %v450, %v451
        %v453 = vmax.f32 %v452, 0.0
        %s454 = scalar_lea.vmem [#allocation6], 16
        %v455 = vld [vmem:[%s454] sm:$0xf]
        %v456 = vld [vmem:[%s454 + $0x4] sm:$0xf]
        %v457 = vld [vmem:[%s454 + $0x8] sm:$0xf]
        %v458 = vld [vmem:[%s454 + $0xc] sm:$0xf]
        %v459 = vpack.c.bf16 %v453, %v453
        %v460 = vperm.slane %v293, 0
        %v465 = vunpack.c.l.b16 %v455
        %v466 = vunpack.c.l.b16 %v456
        %v467 = vunpack.c.l.b16 %v457
        %v468 = vunpack.c.l.b16 %v458
        %v469 = vpack.c.b16 %v466, %v465
        %v470 = vpack.c.b16 %v468, %v467
        %v474 = vsel %vm295, %v459, 0
        %476 = vmatpush.bf16.msra.mxu0 0
        %477 = vmatpush.bf16.msra.mxu0 0
        %478 = vmatpush.bf16.msra.mxu0 0
        %479 = vmatpush.bf16.msra.mxu0 0
        %480 = vmatpush.bf16.msra.mxu0 0
        %481 = vmatpush.bf16.msra.mxu0 0
        %482 = vmatpush.bf16.msra.mxu0 %v470
        %483 = vmatpush.bf16.msra.mxu0 %v469
        %484 = vmatmul.bf16.gmra.mxu0 %v474
        %v485 = vpop.f32.mrf.mxu0
        %v486 = vadd.f32 %v460, %v485
        %v487 = vpop.f32.mrf.mxu0
        %488 = vdwg.mxu0
        %v489 = vadd.f32 %v287, %v486
        %v490 = vld [vmem:[#allocation2 + $0x6] sm:$0x1]
        %v491 = vld [vmem:[#allocation2 + $0x7] sm:$0x1]
        %v492 = vld [vmem:[#allocation2 + $0x8] sm:$0x1]
        %v493 = vld [vmem:[#allocation2 + $0x9] sm:$0x1]
        %v494 = vld [vmem:[#allocation2 + $0xa] sm:$0x1]
        %v495 = vld [vmem:[#allocation2 + $0xb] sm:$0x1]
        %v496 = vsel %vm295, %v489, 0.0
        %v497 = vrot.slane %v496, 4
        %v498 = vadd.f32 %v496, %v497
        %v499 = vrot.slane %v498, 2
        %v500 = vadd.f32 %v498, %v499
        %v501 = vrot.slane %v500, 1
        %v502 = vadd.f32 %v500, %v501
        %v503 = vmul.f32 %v502, %v309
        %v504 = vmul.f32 %v489, %v489
        %v505 = vsel %vm295, %v504, 0.0
        %v506 = vrot.slane %v505, 4
        %v507 = vadd.f32 %v505, %v506
        %v508 = vrot.slane %v507, 2
        %v509 = vadd.f32 %v507, %v508
        %v510 = vrot.slane %v509, 1
        %v511 = vadd.f32 %v509, %v510
        %v512 = vmul.f32 %v511, %v309
        %v513 = vmul.f32 %v503, %v503
        %v514 = vsub.f32 %v512, %v513
        %v515 = vmax.f32 %v514, 0.0
        %v516 = vsub.f32 %v489, %v503
        %v517 = vadd.f32 %v515, 0.001
        %v518 = vrsqrt.pop %v517
        %v519 = vmul.f32 %v518, %v517
        %v520 = vmul.f32 %v519, %v518
        %v521 = vmul.f32 0.5, %v520
        %v522 = vsub.f32 1.5, %v521
        %v523 = vmul.f32 %v518, %v522
        %vm524 = vweird.f32 %v517
        %vm525 = vweird.f32 %v518
        %vm526 = vmor %vm524, %vm525
        %v527 = vsel %vm526, %v518, %v523
        %v528 = vmul.f32 %v516, %v527
        %v529 = vperm.slane %v490, 0
        %v530 = vmul.f32 %v528, %v529
        %v531 = vperm.slane %v491, 0
        %v532 = vadd.f32 %v530, %v531
        %v533 = vmax.f32 %v532, 0.0
        %s534 = scalar_lea.vmem [#allocation6], 32
        %v535 = vld [vmem:[%s534] sm:$0xf]
        %v536 = vld [vmem:[%s534 + $0x4] sm:$0xf]
        %v537 = vld [vmem:[%s534 + $0x8] sm:$0xf]
        %v538 = vld [vmem:[%s534 + $0xc] sm:$0xf]
        %v539 = vpack.c.bf16 %v533, %v533
        %v540 = vperm.slane %v492, 0
        %v545 = vunpack.c.l.b16 %v535
        %v546 = vunpack.c.l.b16 %v536
        %v547 = vunpack.c.l.b16 %v537
        %v548 = vunpack.c.l.b16 %v538
        %v549 = vpack.c.b16 %v546, %v545
        %v550 = vpack.c.b16 %v548, %v547
        %v554 = vsel %vm295, %v539, 0
        %556 = vmatpush.bf16.msra.mxu0 0
        %557 = vmatpush.bf16.msra.mxu0 0
        %558 = vmatpush.bf16.msra.mxu0 0
        %559 = vmatpush.bf16.msra.mxu0 0
        %560 = vmatpush.bf16.msra.mxu0 0
        %561 = vmatpush.bf16.msra.mxu0 0
        %562 = vmatpush.bf16.msra.mxu0 %v550
        %563 = vmatpush.bf16.msra.mxu0 %v549
        %564 = vmatmul.bf16.gmra.mxu0 %v554
        %v565 = vpop.f32.mrf.mxu0
        %v566 = vadd.f32 %v540, %v565
        %v567 = vpop.f32.mrf.mxu0
        %568 = vdwg.mxu0
        %569 = vset.pattern.permute.xlu0 3
        %570 = vperm.xlu0 %569, %v294
        %v571 = vpop.permute.xlu0 %570
        %v573 = vmul.f32 %v566, %v571
        %574 = vset.pattern.permute.xlu0 4
        %575 = vperm.xlu0 %574, %v294
        %v576 = vpop.permute.xlu0 %575
        %v578 = vadd.f32 %v573, %v576
        %v579 = vmax.f32 %v578, 0.0
        %s580 = scalar_lea.vmem [#allocation7], 4
        %v581 = vld [vmem:[%s580] sm:$0xf]
        %v582 = vpack.c.bf16 %v579, %v579
        %v584 = vsel %vm389, %v581, 0
        %v587 = vsel %vm393, %v582, 0
        %589 = vmatpush.bf16.msra.mxu0 0
        %590 = vmatpush.bf16.msra.mxu0 0
        %591 = vmatpush.bf16.msra.mxu0 0
        %592 = vmatpush.bf16.msra.mxu0 0
        %593 = vmatpush.bf16.msra.mxu0 0
        %594 = vmatpush.bf16.msra.mxu0 0
        %595 = vmatpush.bf16.msra.mxu0 0
        %596 = vmatpush.bf16.msra.mxu0 %v587
        %597 = vmatmul.bf16.gmra.mxu0 %v584
        %v598 = vpop.f32.mrf.mxu0
        %v599 = vadd.f32 0.0, %v598
        %v600 = vpop.f32.mrf.mxu0
        %601 = vdwg.mxu0
        %v602 = vadd.f32 %v566, %v599
        %603 = vset.pattern.permute.xlu0 5
        %604 = vperm.xlu0 %603, %v294
        %v605 = vpop.permute.xlu0 %604
        %v607 = vadd.f32 %v602, %v605
        %v608 = vsel %vm295, %v607, 0.0
        %v609 = vrot.slane %v608, 4
        %v610 = vadd.f32 %v608, %v609
        %v611 = vrot.slane %v610, 2
        %v612 = vadd.f32 %v610, %v611
        %v613 = vrot.slane %v612, 1
        %v614 = vadd.f32 %v612, %v613
        %v615 = vmul.f32 %v614, %v309
        %v616 = vmul.f32 %v607, %v607
        %v617 = vsel %vm295, %v616, 0.0
        %v618 = vrot.slane %v617, 4
        %v619 = vadd.f32 %v617, %v618
        %v620 = vrot.slane %v619, 2
        %v621 = vadd.f32 %v619, %v620
        %v622 = vrot.slane %v621, 1
        %v623 = vadd.f32 %v621, %v622
        %v624 = vmul.f32 %v623, %v309
        %v625 = vmul.f32 %v615, %v615
        %v626 = vsub.f32 %v624, %v625
        %v627 = vmax.f32 %v626, 0.0
        %v628 = vsub.f32 %v607, %v615
        %v629 = vadd.f32 %v627, 0.001
        %v630 = vrsqrt.pop %v629
        %v631 = vmul.f32 %v630, %v629
        %v632 = vmul.f32 %v631, %v630
        %v633 = vmul.f32 0.5, %v632
        %v634 = vsub.f32 1.5, %v633
        %v635 = vmul.f32 %v630, %v634
        %vm636 = vweird.f32 %v629
        %vm637 = vweird.f32 %v630
        %vm638 = vmor %vm636, %vm637
        %v639 = vsel %vm638, %v630, %v635
        %v640 = vmul.f32 %v628, %v639
        %v641 = vperm.slane %v493, 0
        %v642 = vmul.f32 %v640, %v641
        %v643 = vperm.slane %v494, 0
        %v644 = vadd.f32 %v642, %v643
        %v645 = vmax.f32 %v644, 0.0
        %s646 = scalar_lea.vmem [#allocation6], 48
        %v647 = vld [vmem:[%s646] sm:$0xf]
        %v648 = vld [vmem:[%s646 + $0x4] sm:$0xf]
        %v649 = vld [vmem:[%s646 + $0x8] sm:$0xf]
        %v650 = vld [vmem:[%s646 + $0xc] sm:$0xf]
        %v651 = vpack.c.bf16 %v645, %v645
        %v652 = vperm.slane %v495, 0
        %v657 = vunpack.c.l.b16 %v647
        %v658 = vunpack.c.l.b16 %v648
        %v659 = vunpack.c.l.b16 %v649
        %v660 = vunpack.c.l.b16 %v650
        %v661 = vpack.c.b16 %v658, %v657
        %v662 = vpack.c.b16 %v660, %v659
        %v666 = vsel %vm295, %v651, 0
        %668 = vmatpush.bf16.msra.mxu0 0
        %669 = vmatpush.bf16.msra.mxu0 0
        %670 = vmatpush.bf16.msra.mxu0 0
        %671 = vmatpush.bf16.msra.mxu0 0
        %672 = vmatpush.bf16.msra.mxu0 0
        %673 = vmatpush.bf16.msra.mxu0 0
        %674 = vmatpush.bf16.msra.mxu0 %v662
        %675 = vmatpush.bf16.msra.mxu0 %v661
        %676 = vmatmul.bf16.gmra.mxu0 %v666
        %v677 = vpop.f32.mrf.mxu0
        %v678 = vadd.f32 %v652, %v677
        %v679 = vpop.f32.mrf.mxu0
        %680 = vdwg.mxu0
        %v681 = vadd.f32 %v489, %v678
        %v682 = vpack.c.bf16 %v681, %v681
        %vm683 = vcmask 257024
        %684 = vst.msk [vmem:[%s284] sm:$0xf] %vm683, %v682
        %p685 = scmp.lt.s32.totalorder %s19, 1
        %s686 = scalar_select %p685, %s19, 1
        %s687 = smul.addr %s686, 4
        %s688 = scalar_lea.vmem %s5, %s687
        // Predicated region
        $region57: #{oanblock_forward.4} parent=39 // pred_check
          %p689 = pneg %p147
        $region58: #{oanblock_forward.4} parent=39 // pred_check_branch
          %691 = sbr.rel (%p689) target = $region60
        $region59: #{oanblock_forward.4} parent=39 // pred_region
          _
        $region60: #{oanblock_forward.4} parent=39 // pred_fallthru
          _
      $region40: #{oanblock_forward.4} parent=5 // pred_fallthru
        _
      %p692 = scmp.le.s32.totalorder 2, %s14
      // Predicated region
      $region61: #{oanblock_forward.4} parent=5 // pred_check
        %p693 = pneg %p692
      $region62: #{oanblock_forward.4} parent=5 // pred_check_branch
        %695 = sbr.rel (%p693) target = $region64
      $region63: #{oanblock_forward.4} parent=5 // pred_region
        %s696 = ssub.s32 %s14, 2
        // Predicated region
        $region65: #{oanblock_forward.4} parent=63 // pred_check
          %p697 = pneg %p153
        $region66: #{oanblock_forward.4} parent=63 // pred_check_branch
          %699 = sbr.rel (%p697) target = $region68
        $region67: #{oanblock_forward.4} parent=63 // pred_region
          %p700 = scmp.lt.s32.totalorder %s20, 1
          %s701 = scalar_select %p700, %s20, 1
          %s702 = smul.addr %s701, 4
          %s703 = scalar_lea.vmem %s5, %s702
        $region68: #{oanblock_forward.4} parent=63 // pred_fallthru
          _
      $region64: #{oanblock_forward.4} parent=5 // pred_fallthru
        _
    $region6: #{oanblock_forward.4} parent=1 // loop_footer
      %s18 = sadd.s32 1, %s14
    $region7: #{oanblock_forward.4} parent=1 // loop_footer_branch
      %13 = sbr.rel target = $region3
    $region8: #{oanblock_forward.4} parent=1 // loop_exit
      _
    %704 = vsyncpa [#allocation3], 1
    %s705 = scalar_lea.sflag [#allocation3], 1
    %706 = vsyncpa %s705, 1
    %707 = vsyncpa [#allocation5], 1
    %708 = vsyncpa [#allocation8], 1

// kernel: oanblock_forward.5
$region0: #{oanblock_forward.5}
  #allocation0 [shape = 'u32[]', space=smem, size = 0x4, offset = 0x4, fixed_abs, tag = 'smem constant byte address 0x4 - core index']
  #allocation1 [shape = 'u32[72,128]{1,0:T(1,128)}', space=vmem, size = 0x9000, scoped, tag = 'internal scratch']
  %s0 = inlined_call_operand.vmem [shape: bf16[2,16,32], index: 0, kind: input, shape index: {}]
  %s1 = inlined_call_operand.vmem [shape: bf16[2,8,32], index: 1, kind: input, shape index: {}]
  %s2 = inlined_call_operand.hbm [shape: f32[15,32], index: 2, kind: input, shape index: {}]
  %s3 = inlined_call_operand.hbm [shape: f32[2,64], index: 3, kind: input, shape index: {}]
  %s4 = inlined_call_operand.vmem [shape: bf16[32,8], index: 4, kind: input, shape index: {}]
  %s5 = inlined_call_operand.hbm [shape: f32[1,8], index: 5, kind: input, shape index: {}]
  %s6 = inlined_call_operand.vmem [shape: bf16[64,32], index: 6, kind: input, shape index: {}]
  %s7 = inlined_call_operand.hbm [shape: bf16[5,32,32], index: 7, kind: input, shape index: {}]
  %s8 = inlined_call_operand.hbm [shape: f32[2,1,16], index: 8, kind: output, shape index: {}]
  %s9 = sld [smem:[#allocation0]]
  $region81: #{oanblock_forward.5} parent=0
    _
  %s11 = ssub.s32 1, %s9
  %s12 = scalar_select 0, %s11, %s9
  $region1: #{oanblock_forward.5} parent=0
    #allocation2 [shape = 'u8[8192]{0}', space=vmem, size = 0x2000, scoped, tag = 'input window, operand 2, single buffered']
    #allocation3 [shape = 's32[2]{0}', space=sflag, size = 0x8, scoped, tag = 'scoped memory for oanblock_forward.5']
    #allocation4 [shape = 's32[2]{0}', space=sflag, size = 0x8, scoped, tag = 'scoped memory for oanblock_forward.5']
    #allocation5 [shape = 'u8[1024]{0}', space=vmem, size = 0x400, scoped, tag = 'input window, operand 3, single buffered']
    #allocation6 [shape = 's32[1]{0}', space=sflag, size = 0x4, scoped, tag = 'scoped memory for oanblock_forward.5']
    #allocation7 [shape = 'u8[512]{0}', space=vmem, size = 0x400, scoped, tag = 'input window, operand 5, single buffered']
    #allocation8 [shape = 'u8[40960]{0}', space=vmem, size = 0xa000, scoped, tag = 'input window, operand 7, single buffered']
    #allocation9 [shape = 's32[1]{0}', space=sflag, size = 0x4, scoped, tag = 'scoped memory for oanblock_forward.5']
    #allocation10 [shape = 'u8[1024]{0}', space=vmem, size = 0x400, scoped, tag = 'output window, operand 0']
    %13 = vsyncpa [#allocation3], 0
    %14 = vsyncpa [#allocation6], 0
    %15 = vsyncpa [#allocation9], 0
    %16 = vsyncpa [#allocation4], 0
    %s17 = scalar_lea.sflag [#allocation4], 1
    %18 = vsyncpa %s17, 0
    loop: start=0, step=1, limit=4
    $region2: #{oanblock_forward.5} parent=1 // loop_pre_header
      _
    $region3: #{oanblock_forward.5} parent=1 // loop_header
      %s20 = sphi 0, %s24
      %p21 = scmp.ge.s32.totalorder %s20, 4
      %s30 = sphi 0, %s32
      %s33 = sphi 0, %s30
      %s34 = sphi 0, %s33
      %s50 = sphi 0, %s34
      %s56 = sphi 0, %s58
      %s59 = sphi 0, %s56
      %s60 = sphi 0, %s59
      %s76 = sphi 0, %s60
      %s80 = sphi 0, %s80
      %s82 = sphi 0, %s80
      %s83 = sphi 0, %s82
      %s97 = sphi 0, %s83
      %s101 = sphi 0, %s101
      %s103 = sphi 0, %s101
      %s104 = sphi 0, %s103
      %s118 = sphi 0, %s104
      %s122 = sphi 0, %s122
      %s124 = sphi 0, %s122
      %s125 = sphi 0, %s124
      %s139 = sphi 0, %s125
      %s143 = sphi 0, %s143
      %s145 = sphi 0, %s143
      %s146 = sphi 0, %s145
      %s160 = sphi 0, %s146
      %s164 = sphi 0, %s164
      %s166 = sphi 0, %s164
      %s167 = sphi 0, %s166
      %s181 = sphi 0, %s167
      %s185 = sphi 0, %s185
      %s187 = sphi 0, %s185
      %s188 = sphi 0, %s187
      %s202 = sphi 0, %s188
      %s208 = sphi 0, %s210
      %s211 = sphi 0, %s208
      %s212 = sphi 0, %s211
      %s228 = sphi 0, %s212
    $region4: #{oanblock_forward.5} parent=1 // loop_header_branch
      %23 = sbr.rel (%p21) target = $region8
    $region5: #{oanblock_forward.5} parent=1 // loop_body
      %s25 = ssub.s32 %s20, 1
      %s26 = ssub.s32 %s20, 2
      %s27 = sadd.s32 %s20, 1
      %s28 = ssub.s32 %s20, %s27
      %p29 = scmp.eq.s32.totalorder %s28, 0
      %s31 = sadd.s32 %s30, 1
      %s32 = scalar_select %p29, %s30, %s31
      %p35 = pneg %p29
      %p36 = scmp.eq.s32.totalorder %s20, 1
      %p37 = por %p35, %p36
      %p38 = scmp.ne.s32.totalorder %s30, %s33
      %p39 = scmp.eq.s32.totalorder %s20, 0
      %p40 = por %p38, %p39
      %p41 = scmp.ne.s32.totalorder %s30, %s33
      %p42 = scmp.eq.s32.totalorder %s25, 1
      %p43 = por %p41, %p42
      %p44 = scmp.ne.s32.totalorder %s33, %s34
      %p45 = scmp.eq.s32.totalorder %s25, 0
      %p46 = por %p44, %p45
      %p47 = scmp.ne.s32.totalorder %s33, %s34
      %p48 = scmp.eq.s32.totalorder %s26, 1
      %p49 = por %p47, %p48
      %p51 = scmp.ne.s32.totalorder %s34, %s50
      %p52 = scmp.eq.s32.totalorder %s26, 0
      %p53 = por %p51, %p52
      %s54 = ssub.s32 %s20, %s27
      %p55 = scmp.eq.s32.totalorder %s54, 0
      %s57 = sadd.s32 %s56, 1
      %s58 = scalar_select %p55, %s56, %s57
      %p61 = pneg %p55
      %p62 = scmp.eq.s32.totalorder %s20, 1
      %p63 = por %p61, %p62
      %p64 = scmp.ne.s32.totalorder %s56, %s59
      %p65 = scmp.eq.s32.totalorder %s20, 0
      %p66 = por %p64, %p65
      %p67 = scmp.ne.s32.totalorder %s56, %s59
      %p68 = scmp.eq.s32.totalorder %s25, 1
      %p69 = por %p67, %p68
      %p70 = scmp.ne.s32.totalorder %s59, %s60
      %p71 = scmp.eq.s32.totalorder %s25, 0
      %p72 = por %p70, %p71
      %p73 = scmp.ne.s32.totalorder %s59, %s60
      %p74 = scmp.eq.s32.totalorder %s26, 1
      %p75 = por %p73, %p74
      %p77 = scmp.ne.s32.totalorder %s60, %s76
      %p78 = scmp.eq.s32.totalorder %s26, 0
      %p79 = por %p77, %p78
      %s81 = sadd.s32 %s80, 1
      %p84 = scmp.eq.s32.totalorder %s20, 1
      %p85 = scmp.ne.s32.totalorder %s80, %s82
      %p86 = scmp.eq.s32.totalorder %s20, 0
      %p87 = por %p85, %p86
      %p88 = scmp.ne.s32.totalorder %s80, %s82
      %p89 = scmp.eq.s32.totalorder %s25, 1
      %p90 = por %p88, %p89
      %p91 = scmp.ne.s32.totalorder %s82, %s83
      %p92 = scmp.eq.s32.totalorder %s25, 0
      %p93 = por %p91, %p92
      %p94 = scmp.ne.s32.totalorder %s82, %s83
      %p95 = scmp.eq.s32.totalorder %s26, 1
      %p96 = por %p94, %p95
      %p98 = scmp.ne.s32.totalorder %s83, %s97
      %p99 = scmp.eq.s32.totalorder %s26, 0
      %p100 = por %p98, %p99
      %s102 = sadd.s32 %s101, 1
      %p105 = scmp.eq.s32.totalorder %s20, 1
      %p106 = scmp.ne.s32.totalorder %s101, %s103
      %p107 = scmp.eq.s32.totalorder %s20, 0
      %p108 = por %p106, %p107
      %p109 = scmp.ne.s32.totalorder %s101, %s103
      %p110 = scmp.eq.s32.totalorder %s25, 1
      %p111 = por %p109, %p110
      %p112 = scmp.ne.s32.totalorder %s103, %s104
      %p113 = scmp.eq.s32.totalorder %s25, 0
      %p114 = por %p112, %p113
      %p115 = scmp.ne.s32.totalorder %s103, %s104
      %p116 = scmp.eq.s32.totalorder %s26, 1
      %p117 = por %p115, %p116
      %p119 = scmp.ne.s32.totalorder %s104, %s118
      %p120 = scmp.eq.s32.totalorder %s26, 0
      %p121 = por %p119, %p120
      %s123 = sadd.s32 %s122, 1
      %p126 = scmp.eq.s32.totalorder %s20, 1
      %p127 = scmp.ne.s32.totalorder %s122, %s124
      %p128 = scmp.eq.s32.totalorder %s20, 0
      %p129 = por %p127, %p128
      %p130 = scmp.ne.s32.totalorder %s122, %s124
      %p131 = scmp.eq.s32.totalorder %s25, 1
      %p132 = por %p130, %p131
      %p133 = scmp.ne.s32.totalorder %s124, %s125
      %p134 = scmp.eq.s32.totalorder %s25, 0
      %p135 = por %p133, %p134
      %p136 = scmp.ne.s32.totalorder %s124, %s125
      %p137 = scmp.eq.s32.totalorder %s26, 1
      %p138 = por %p136, %p137
      %p140 = scmp.ne.s32.totalorder %s125, %s139
      %p141 = scmp.eq.s32.totalorder %s26, 0
      %p142 = por %p140, %p141
      %s144 = sadd.s32 %s143, 1
      %p147 = scmp.eq.s32.totalorder %s20, 1
      %p148 = scmp.ne.s32.totalorder %s143, %s145
      %p149 = scmp.eq.s32.totalorder %s20, 0
      %p150 = por %p148, %p149
      %p151 = scmp.ne.s32.totalorder %s143, %s145
      %p152 = scmp.eq.s32.totalorder %s25, 1
      %p153 = por %p151, %p152
      %p154 = scmp.ne.s32.totalorder %s145, %s146
      %p155 = scmp.eq.s32.totalorder %s25, 0
      %p156 = por %p154, %p155
      %p157 = scmp.ne.s32.totalorder %s145, %s146
      %p158 = scmp.eq.s32.totalorder %s26, 1
      %p159 = por %p157, %p158
      %p161 = scmp.ne.s32.totalorder %s146, %s160
      %p162 = scmp.eq.s32.totalorder %s26, 0
      %p163 = por %p161, %p162
      %s165 = sadd.s32 %s164, 1
      %p168 = scmp.eq.s32.totalorder %s20, 1
      %p169 = scmp.ne.s32.totalorder %s164, %s166
      %p170 = scmp.eq.s32.totalorder %s20, 0
      %p171 = por %p169, %p170
      %p172 = scmp.ne.s32.totalorder %s164, %s166
      %p173 = scmp.eq.s32.totalorder %s25, 1
      %p174 = por %p172, %p173
      %p175 = scmp.ne.s32.totalorder %s166, %s167
      %p176 = scmp.eq.s32.totalorder %s25, 0
      %p177 = por %p175, %p176
      %p178 = scmp.ne.s32.totalorder %s166, %s167
      %p179 = scmp.eq.s32.totalorder %s26, 1
      %p180 = por %p178, %p179
      %p182 = scmp.ne.s32.totalorder %s167, %s181
      %p183 = scmp.eq.s32.totalorder %s26, 0
      %p184 = por %p182, %p183
      %s186 = sadd.s32 %s185, 1
      %p189 = scmp.eq.s32.totalorder %s20, 1
      %p190 = scmp.ne.s32.totalorder %s185, %s187
      %p191 = scmp.eq.s32.totalorder %s20, 0
      %p192 = por %p190, %p191
      %p193 = scmp.ne.s32.totalorder %s185, %s187
      %p194 = scmp.eq.s32.totalorder %s25, 1
      %p195 = por %p193, %p194
      %p196 = scmp.ne.s32.totalorder %s187, %s188
      %p197 = scmp.eq.s32.totalorder %s25, 0
      %p198 = por %p196, %p197
      %p199 = scmp.ne.s32.totalorder %s187, %s188
      %p200 = scmp.eq.s32.totalorder %s26, 1
      %p201 = por %p199, %p200
      %p203 = scmp.ne.s32.totalorder %s188, %s202
      %p204 = scmp.eq.s32.totalorder %s26, 0
      %p205 = por %p203, %p204
      %s206 = ssub.s32 %s20, %s27
      %p207 = scmp.eq.s32.totalorder %s206, 0
      %s209 = sadd.s32 %s208, 1
      %s210 = scalar_select %p207, %s208, %s209
      %p213 = pneg %p207
      %p214 = scmp.eq.s32.totalorder %s20, 1
      %p215 = por %p213, %p214
      %p216 = scmp.ne.s32.totalorder %s208, %s211
      %p217 = scmp.eq.s32.totalorder %s20, 0
      %p218 = por %p216, %p217
      %p219 = scmp.ne.s32.totalorder %s208, %s211
      %p220 = scmp.eq.s32.totalorder %s25, 1
      %p221 = por %p219, %p220
      %p222 = scmp.ne.s32.totalorder %s211, %s212
      %p223 = scmp.eq.s32.totalorder %s25, 0
      %p224 = por %p222, %p223
      %p225 = scmp.ne.s32.totalorder %s211, %s212
      %p226 = scmp.eq.s32.totalorder %s26, 1
      %p227 = por %p225, %p226
      %p229 = scmp.ne.s32.totalorder %s212, %s228
      %p230 = scmp.eq.s32.totalorder %s26, 0
      %p231 = por %p229, %p230
      %p232 = scmp.le.s32.totalorder 1, %s20
      %p233 = scmp.lt.s32.totalorder %s20, 3
      %p234 = pnand %p232, %p233
      %p235 = pneg %p234
      // Predicated region
      $region9: #{oanblock_forward.5} parent=5 // pred_check
        _
      $region10: #{oanblock_forward.5} parent=5 // pred_check_branch
        %237 = sbr.rel (%p234) target = $region12
      $region11: #{oanblock_forward.5} parent=5 // pred_region
        %s238 = ssub.s32 %s20, 1
        // Predicated region
        $region13: #{oanblock_forward.5} parent=11 // pred_check
          %p239 = pneg %p93
        $region14: #{oanblock_forward.5} parent=11 // pred_check_branch
          %241 = sbr.rel (%p239) target = $region16
        $region15: #{oanblock_forward.5} parent=11 // pred_region
          %243 = vsyncadd [#allocation3], 0
          %s244 = sshll.u32 %s2, 4
          %s245 = int_to_ptr.hbm [resolvable:$true] %s244
          %s246 = sshll.u32 [#allocation2], 4
          %s247 = int_to_ptr.vmem [resolvable:$true] %s246
          %252 = dma.hbm_to_vmem [thread:$0]  %s245, 256, %s247, [#allocation3], 128, 128, 8
        $region16: #{oanblock_forward.5} parent=11 // pred_fallthru
          _
        // Predicated region
        $region17: #{oanblock_forward.5} parent=11 // pred_check
          %p253 = pneg %p114
        $region18: #{oanblock_forward.5} parent=11 // pred_check_branch
          %255 = sbr.rel (%p253) target = $region20
        $region19: #{oanblock_forward.5} parent=11 // pred_region
          %257 = vsyncadd [#allocation6], 0
          %s259 = sshll.u32 %s3, 4
          %s260 = int_to_ptr.hbm [resolvable:$true] %s259
          %s261 = sshll.u32 [#allocation5], 4
          %s262 = int_to_ptr.vmem [resolvable:$true] %s261
          %264 = dma.hbm_to_vmem [thread:$0]  %s260, 32, %s262, [#allocation6]
        $region20: #{oanblock_forward.5} parent=11 // pred_fallthru
          _
        // Predicated region
        $region21: #{oanblock_forward.5} parent=11 // pred_check
          %p265 = pneg %p135
        $region22: #{oanblock_forward.5} parent=11 // pred_check_branch
          %267 = sbr.rel (%p265) target = $region24
        $region23: #{oanblock_forward.5} parent=11 // pred_region
          _
        $region24: #{oanblock_forward.5} parent=11 // pred_fallthru
          _
        // Predicated region
        $region25: #{oanblock_forward.5} parent=11 // pred_check
          %p268 = pneg %p156
        $region26: #{oanblock_forward.5} parent=11 // pred_check_branch
          %270 = sbr.rel (%p268) target = $region28
        $region27: #{oanblock_forward.5} parent=11 // pred_region
          %272 = vsyncadd [#allocation6], 0
          %s274 = sshll.u32 %s5, 4
          %s275 = int_to_ptr.hbm [resolvable:$true] %s274
          %s276 = sshll.u32 [#allocation7], 4
          %s277 = int_to_ptr.vmem [resolvable:$true] %s276
          %279 = dma.hbm_to_vmem [thread:$0]  %s275, 16, %s277, [#allocation6]
        $region28: #{oanblock_forward.5} parent=11 // pred_fallthru
          _
        // Predicated region
        $region29: #{oanblock_forward.5} parent=11 // pred_check
          %p280 = pneg %p177
        $region30: #{oanblock_forward.5} parent=11 // pred_check_branch
          %282 = sbr.rel (%p280) target = $region32
        $region31: #{oanblock_forward.5} parent=11 // pred_region
          _
        $region32: #{oanblock_forward.5} parent=11 // pred_fallthru
          _
        // Predicated region
        $region33: #{oanblock_forward.5} parent=11 // pred_check
          %p283 = pneg %p198
        $region34: #{oanblock_forward.5} parent=11 // pred_check_branch
          %285 = sbr.rel (%p283) target = $region36
        $region35: #{oanblock_forward.5} parent=11 // pred_region
          %287 = vsyncadd [#allocation9], 0
          %s288 = sshll.u32 %s7, 4
          %s289 = int_to_ptr.hbm [resolvable:$true] %s288
          %s290 = sshll.u32 [#allocation8], 4
          %s291 = int_to_ptr.vmem [resolvable:$true] %s290
          %296 = dma.hbm_to_vmem [thread:$0]  %s289, 1280, %s291, [#allocation9], 64, 64, 4
        $region36: #{oanblock_forward.5} parent=11 // pred_fallthru
          _
      $region12: #{oanblock_forward.5} parent=5 // pred_fallthru
        _
      %p297 = scmp.lt.s32.totalorder %s20, 2
      // Predicated region
      $region37: #{oanblock_forward.5} parent=5 // pred_check
        %p298 = pneg %p297
      $region38: #{oanblock_forward.5} parent=5 // pred_check_branch
        %300 = sbr.rel (%p298) target = $region40
      $region39: #{oanblock_forward.5} parent=5 // pred_region
        // Predicated region
        $region41: #{oanblock_forward.5} parent=39 // pred_check
          %p301 = pneg %p40
        $region42: #{oanblock_forward.5} parent=39 // pred_check_branch
          %303 = sbr.rel (%p301) target = $region44
        $region43: #{oanblock_forward.5} parent=39 // pred_region
          %p304 = scmp.lt.s32.totalorder %s20, 1
          %s305 = scalar_select %p304, %s20, 1
          %s306 = smul.addr %s305, 2
          %s307 = smul.addr %s306, 4
          %s308 = scalar_lea.vmem %s0, %s307
        $region44: #{oanblock_forward.5} parent=39 // pred_fallthru
          _
        // Predicated region
        $region45: #{oanblock_forward.5} parent=39 // pred_check
          %p309 = pneg %p66
        $region46: #{oanblock_forward.5} parent=39 // pred_check_branch
          %311 = sbr.rel (%p309) target = $region48
        $region47: #{oanblock_forward.5} parent=39 // pred_region
          %p312 = scmp.lt.s32.totalorder %s20, 1
          %s313 = scalar_select %p312, %s20, 1
          %s314 = smul.addr %s313, 4
          %s315 = scalar_lea.vmem %s1, %s314
        $region48: #{oanblock_forward.5} parent=39 // pred_fallthru
          _
      $region40: #{oanblock_forward.5} parent=5 // pred_fallthru
        _
      %p316 = scmp.le.s32.totalorder 1, %s20
      %p317 = scmp.lt.s32.totalorder %s20, 3
      %p318 = pnand %p316, %p317
      %p319 = pneg %p318
      // Predicated region
      $region49: #{oanblock_forward.5} parent=5 // pred_check
        _
      $region50: #{oanblock_forward.5} parent=5 // pred_check_branch
        %321 = sbr.rel (%p318) target = $region52
      $region51: #{oanblock_forward.5} parent=5 // pred_region
        %s322 = ssub.s32 %s20, 1
        // Predicated region
        $region53: #{oanblock_forward.5} parent=51 // pred_check
          %p323 = pneg %p93
        $region54: #{oanblock_forward.5} parent=51 // pred_check_branch
          %325 = sbr.rel (%p323) target = $region56
        $region55: #{oanblock_forward.5} parent=51 // pred_region
          %327 = dma.done [#allocation3], 256
        $region56: #{oanblock_forward.5} parent=51 // pred_fallthru
          _
        // Predicated region
        $region57: #{oanblock_forward.5} parent=51 // pred_check
          %p328 = pneg %p114
        $region58: #{oanblock_forward.5} parent=51 // pred_check_branch
          %330 = sbr.rel (%p328) target = $region60
        $region59: #{oanblock_forward.5} parent=51 // pred_region
          %332 = dma.done [#allocation6], 32
        $region60: #{oanblock_forward.5} parent=51 // pred_fallthru
          _
        // Predicated region
        $region61: #{oanblock_forward.5} parent=51 // pred_check
          %p333 = pneg %p156
        $region62: #{oanblock_forward.5} parent=51 // pred_check_branch
          %335 = sbr.rel (%p333) target = $region64
        $region63: #{oanblock_forward.5} parent=51 // pred_region
          %337 = dma.done [#allocation6], 16
        $region64: #{oanblock_forward.5} parent=51 // pred_fallthru
          _
        // Predicated region
        $region65: #{oanblock_forward.5} parent=51 // pred_check
          %p338 = pneg %p198
        $region66: #{oanblock_forward.5} parent=51 // pred_check_branch
          %340 = sbr.rel (%p338) target = $region68
        $region67: #{oanblock_forward.5} parent=51 // pred_region
          %342 = dma.done [#allocation9], 1280
        $region68: #{oanblock_forward.5} parent=51 // pred_fallthru
          _
        %p343 = scmp.lt.s32.totalorder %s25, 1
        %s344 = scalar_select %p343, %s25, 1
        %s345 = smul.addr %s344, 2
        %s346 = smul.addr %s345, 4
        %s347 = scalar_lea.vmem %s0, %s346
        %p348 = pneg %p46
        %p349 = pneg %p43
        %p350 = scmp.lt.s32.totalorder %s25, 1
        %s351 = scalar_select %p350, %s25, 1
        %s352 = smul.addr %s351, 4
        %s353 = scalar_lea.vmem %s1, %s352
        %p354 = pneg %p72
        %p355 = pneg %p69
        %p356 = pneg %p93
        %p357 = pneg %p90
        %p358 = pneg %p114
        %p359 = pneg %p111
        %p360 = pneg %p135
        %p361 = pneg %p132
        %p362 = pneg %p156
        %p363 = pneg %p153
        %p364 = pneg %p177
        %p365 = pneg %p174
        %p366 = pneg %p198
        %p367 = pneg %p195
        %p368 = pneg %p224
        %p369 = pneg %p221
        %s370 = sand.u32 %s211, 1
        %s371 = scalar_lea.sflag [#allocation4], %s370
        %s372 = sand.u32 %s211, 1
        %s373 = scalar_lea.vmem [#allocation10], %s372
        %p374 = scmp.lt.s32.totalorder %s25, 1
        %s375 = scalar_select %p374, %s25, 1
        %s376 = smul.addr %s375, 2
        %s377 = smul.addr %s376, 4
        %s378 = scalar_lea.vmem %s0, %s377
        %p379 = scmp.lt.s32.totalorder %s25, 1
        %s380 = scalar_select %p379, %s25, 1
        %s381 = smul.addr %s380, 4
        %s382 = scalar_lea.vmem %s1, %s381
        %v384 = vld [vmem:[%s378] sm:$0xf]
        %v385 = vld [vmem:[%s378 + $0x4] sm:$0xf]
        %v386 = vunpack.c.l.bf16 %v384
        %v387 = vunpack.c.l.bf16 %v385
        %v388 = vld [vmem:[#allocation2] sm:$0x1]
        %v389 = vld [vmem:[#allocation2 + $0x1] sm:$0x1]
        %vm390 = vcmask 261120
        %v391 = vsel %vm390, %v386, 0.0
        %v392 = vsel %vm390, %v387, 0.0
        %v393 = vadd.f32 %v391, %v392
        %v394 = vrot.slane %v393, 4
        %v395 = vadd.f32 %v393, %v394
        %v396 = vrot.slane %v395, 2
        %v397 = vadd.f32 %v395, %v396
        %v398 = vrot.slane %v397, 1
        %v399 = vadd.f32 %v397, %v398
        %v400 = vrcp.pop 16.0
        %v401 = vmul.f32 16.0, %v400
        %v402 = vsub.f32 1.0, %v401
        %v403 = vmul.f32 %v400, %v402
        %v404 = vadd.f32 %v400, %v403
        %vm405 = vweird.f32 %v400
        %v406 = vsel %vm405, %v400, %v404
        %v407 = vmul.f32 %v399, %v406
        %v408 = vmul.f32 %v386, %v386
        %v409 = vmul.f32 %v387, %v387
        %v410 = vsel %vm390, %v408, 0.0
        %v411 = vsel %vm390, %v409, 0.0
        %v412 = vadd.f32 %v410, %v411
        %v413 = vrot.slane %v412, 4
        %v414 = vadd.f32 %v412, %v413
        %v415 = vrot.slane %v414, 2
        %v416 = vadd.f32 %v414, %v415
        %v417 = vrot.slane %v416, 1
        %v418 = vadd.f32 %v416, %v417
        %v419 = vmul.f32 %v418, %v406
        %v420 = vmul.f32 %v407, %v407
        %v421 = vsub.f32 %v419, %v420
        %v422 = vmax.f32 %v421, 0.0
        %v423 = vsub.f32 %v386, %v407
        %v424 = vsub.f32 %v387, %v407
        %v425 = vadd.f32 %v422, 0.001
        %v426 = vrsqrt.pop %v425
        %v427 = vmul.f32 %v426, %v425
        %v428 = vmul.f32 %v427, %v426
        %v429 = vmul.f32 0.5, %v428
        %v430 = vsub.f32 1.5, %v429
        %v431 = vmul.f32 %v426, %v430
        %vm432 = vweird.f32 %v425
        %vm433 = vweird.f32 %v426
        %vm434 = vmor %vm432, %vm433
        %v435 = vsel %vm434, %v426, %v431
        %v436 = vmul.f32 %v423, %v435
        %v437 = vmul.f32 %v424, %v435
        %v438 = vperm.slane %v388, 0
        %v439 = vmul.f32 %v436, %v438
        %v440 = vmul.f32 %v437, %v438
        %v441 = vperm.slane %v389, 0
        %v442 = vadd.f32 %v439, %v441
        %v443 = vadd.f32 %v440, %v441
        %v444 = vmax.f32 %v442, 0.0
        %v445 = vmax.f32 %v443, 0.0
        %v446 = vld [vmem:[%s4] sm:$0xf]
        %v447 = vld [vmem:[%s4 + $0x4] sm:$0xf]
        %v448 = vld [vmem:[%s4 + $0x8] sm:$0xf]
        %v449 = vld [vmem:[%s4 + $0xc] sm:$0xf]
        %v450 = vpack.c.bf16 %v445, %v444
        %v451 = vld [vmem:[#allocation7] sm:$0x1]
        %v453 = vperm.slane %v451, 0
        %v459 = vunpack.c.l.b16 %v446
        %v460 = vunpack.c.l.b16 %v447
        %v461 = vunpack.c.l.b16 %v448
        %v462 = vunpack.c.l.b16 %v449
        %v463 = vpack.c.b16 %v460, %v459
        %v464 = vpack.c.b16 %v462, %v461
        %v468 = vsel %vm390, %v450, 0
        %470 = vmatpush.bf16.msra.mxu0 0
        %471 = vmatpush.bf16.msra.mxu0 0
        %472 = vmatpush.bf16.msra.mxu0 0
        %473 = vmatpush.bf16.msra.mxu0 0
        %474 = vmatpush.bf16.msra.mxu0 0
        %475 = vmatpush.bf16.msra.mxu0 0
        %476 = vmatpush.bf16.msra.mxu0 %v464
        %477 = vmatpush.bf16.msra.mxu0 %v463
        %478 = vmatmul.bf16.gmra.mxu0 %v468
        %v479 = vpop.f32.mrf.mxu0
        %v480 = vadd.f32 %v453, %v479
        %v481 = vpop.f32.mrf.mxu0
        %v482 = vadd.f32 %v453, %v481
        %483 = vdwg.mxu0
        %vm484 = vcmask 64512
        %v485 = vsel %vm484, %v480, -inf
        %486 = vmax.xlane.f32.xlu0 %v485
        %v487 = vpop.xlane.xlu0 %486
        %v488 = vsel %vm484, %v482, -inf
        %489 = vmax.xlane.f32.xlu0 %v488
        %v490 = vpop.xlane.xlu0 %489
        %v491 = vsub.f32 %v480, %v487
        %v492 = vsub.f32 %v482, %v490
        %v493 = vmul.f32 %v491, 1.442695
        %v494 = vpow.pop %v493
        %v495 = vmul.f32 %v492, 1.442695
        %v496 = vpow.pop %v495
        %v497 = vsel %vm484, %v494, 0.0
        %498 = vadd.xlane.f32.xlu0 %v497
        %v499 = vpop.xlane.xlu0 %498
        %v500 = vsel %vm484, %v496, 0.0
        %501 = vadd.xlane.f32.xlu0 %v500
        %v502 = vpop.xlane.xlu0 %501
        %v503 = vrcp.pop %v499
        %v504 = vmul.f32 %v499, %v503
        %v505 = vsub.f32 1.0, %v504
        %v506 = vmul.f32 %v503, %v505
        %v507 = vadd.f32 %v503, %v506
        %vm508 = vweird.f32 %v499
        %vm509 = vweird.f32 %v503
        %vm510 = vmor %vm508, %vm509
        %v511 = vsel %vm510, %v503, %v507
        %v512 = vand.u32 2147483647, %v499
        %vm513 = vcmp.eq.f32.partialorder %v512, 8.507059e+37
        %v514 = vand.u32 %v499, 2147483648
        %v515 = vor.u32 1.1754944e-38, %v514
        %v516 = vsel %vm513, %v515, %v511
        %v517 = vmul.f32 %v494, %v516
        %v518 = vrcp.pop %v502
        %v519 = vmul.f32 %v502, %v518
        %v520 = vsub.f32 1.0, %v519
        %v521 = vmul.f32 %v518, %v520
        %v522 = vadd.f32 %v518, %v521
        %vm523 = vweird.f32 %v502
        %vm524 = vweird.f32 %v518
        %vm525 = vmor %vm523, %vm524
        %v526 = vsel %vm525, %v518, %v522
        %v527 = vand.u32 2147483647, %v502
        %vm528 = vcmp.eq.f32.partialorder %v527, 8.507059e+37
        %v529 = vand.u32 %v502, 2147483648
        %v530 = vor.u32 1.1754944e-38, %v529
        %v531 = vsel %vm528, %v530, %v526
        %v532 = vmul.f32 %v496, %v531
        %v533 = vld [vmem:[%s382] sm:$0xf]
        %v534 = vpack.c.bf16 %v532, %v517
        %v536 = vsel %vm484, %v534, 0
        %vm538 = vcmask 1043456
        %v540 = vsel %vm538, %v533, 0
        %542 = vmatpush.bf16.msra.mxu0 0
        %543 = vmatpush.bf16.msra.mxu0 0
        %544 = vmatpush.bf16.msra.mxu0 0
        %545 = vmatpush.bf16.msra.mxu0 0
        %546 = vmatpush.bf16.msra.mxu0 0
        %547 = vmatpush.bf16.msra.mxu0 0
        %548 = vmatpush.bf16.msra.mxu0 0
        %549 = vmatpush.bf16.msra.mxu0 %v540
        %550 = vmatmul.bf16.gmra.mxu0 %v536
        %v551 = vpop.f32.mrf.mxu0
        %v552 = vadd.f32 0.0, %v551
        %v553 = vpop.f32.mrf.mxu0
        %v554 = vadd.f32 0.0, %v553
        %555 = vdwg.mxu0
        %v556 = vld [vmem:[#allocation5] sm:$0x1]
        %v557 = vld [vmem:[#allocation5 + $0x1] sm:$0x1]
        %v558 = vperm.slane %v556, 0
        %v559 = vmul.f32 %v436, %v558
        %v560 = vmul.f32 %v437, %v558
        %v561 = vperm.slane %v557, 0
        %v562 = vadd.f32 %v559, %v561
        %v563 = vadd.f32 %v560, %v561
        %v564 = vmax.f32 %v562, 0.0
        %v565 = vmax.f32 %v563, 0.0
        %v566 = vsel %vm390, %v552, 0.0
        %v567 = vsel %vm390, %v554, 0.0
        %v568 = vadd.f32 %v566, %v567
        %v569 = vrot.slane %v568, 4
        %v570 = vadd.f32 %v568, %v569
        %v571 = vrot.slane %v570, 2
        %v572 = vadd.f32 %v570, %v571
        %v573 = vrot.slane %v572, 1
        %v574 = vadd.f32 %v572, %v573
        %v575 = vmul.f32 %v574, %v406
        %v576 = vmul.f32 %v552, %v552
        %v577 = vmul.f32 %v554, %v554
        %v578 = vsel %vm390, %v576, 0.0
        %v579 = vsel %vm390, %v577, 0.0
        %v580 = vadd.f32 %v578, %v579
        %v581 = vrot.slane %v580, 4
        %v582 = vadd.f32 %v580, %v581
        %v583 = vrot.slane %v582, 2
        %v584 = vadd.f32 %v582, %v583
        %v585 = vrot.slane %v584, 1
        %v586 = vadd.f32 %v584, %v585
        %v587 = vmul.f32 %v586, %v406
        %v588 = vmul.f32 %v575, %v575
        %v589 = vsub.f32 %v587, %v588
        %v590 = vmax.f32 %v589, 0.0
        %v591 = vsub.f32 %v552, %v575
        %v592 = vsub.f32 %v554, %v575
        %v593 = vadd.f32 %v590, 0.001
        %v594 = vrsqrt.pop %v593
        %v595 = vmul.f32 %v594, %v593
        %v596 = vmul.f32 %v595, %v594
        %v597 = vmul.f32 0.5, %v596
        %v598 = vsub.f32 1.5, %v597
        %v599 = vmul.f32 %v594, %v598
        %vm600 = vweird.f32 %v593
        %vm601 = vweird.f32 %v594
        %vm602 = vmor %vm600, %vm601
        %v603 = vsel %vm602, %v594, %v599
        %v604 = vmul.f32 %v591, %v603
        %v605 = vmul.f32 %v592, %v603
        %607 = vrot.lane.b32.xlu0 %v558, 96
        %v608 = vpop.permute.xlu0 %607
        %v610 = vmul.f32 %v604, %v608
        %v611 = vmul.f32 %v605, %v608
        %613 = vrot.lane.b32.xlu0 %v561, 96
        %v614 = vpop.permute.xlu0 %613
        %v616 = vadd.f32 %v610, %v614
        %v617 = vadd.f32 %v611, %v614
        %v618 = vmax.f32 %v616, 0.0
        %v619 = vmax.f32 %v617, 0.0
        %622 = vrot.lane.b32.xlu0 %v618, 32
        %v623 = vpop.permute.xlu0 %622
        %624 = vrot.lane.b32.xlu0 %v619, 32
        %v625 = vpop.permute.xlu0 %624
        %v628 = vsel %vm390, %v564, %v623
        %v629 = vsel %vm390, %v565, %v625
        %v630 = vld [vmem:[#allocation2 + $0x2] sm:$0x1]
        %v631 = vld [vmem:[#allocation2 + $0x3] sm:$0x1]
        %v632 = vld [vmem:[#allocation2 + $0x4] sm:$0x1]
        %v633 = vld [vmem:[#allocation2 + $0x5] sm:$0x1]
        %v634 = vld [vmem:[#allocation2 + $0x6] sm:$0x1]
        %v635 = vld [vmem:[%s6] sm:$0xf]
        %v636 = vld [vmem:[%s6 + $0x4] sm:$0xf]
        %v637 = vld [vmem:[%s6 + $0x8] sm:$0xf]
        %v638 = vld [vmem:[%s6 + $0xc] sm:$0xf]
        %v639 = vld [vmem:[%s6 + $0x10] sm:$0xf]
        %v640 = vld [vmem:[%s6 + $0x14] sm:$0xf]
        %v641 = vld [vmem:[%s6 + $0x18] sm:$0xf]
        %v642 = vld [vmem:[%s6 + $0x1c] sm:$0xf]
        %v643 = vpack.c.bf16 %v629, %v628
        %v644 = vperm.slane %v630, 0
        %v653 = vunpack.c.l.b16 %v635
        %v654 = vunpack.c.l.b16 %v636
        %v655 = vunpack.c.l.b16 %v637
        %v656 = vunpack.c.l.b16 %v638
        %v657 = vunpack.c.l.b16 %v639
        %v658 = vunpack.c.l.b16 %v640
        %v659 = vunpack.c.l.b16 %v641
        %v660 = vunpack.c.l.b16 %v642
        %v661 = vpack.c.b16 %v654, %v653
        %v662 = vpack.c.b16 %v656, %v655
        %v663 = vpack.c.b16 %v658, %v657
        %v664 = vpack.c.b16 %v660, %v659
        %vm669 = vcmask 523264
        %v671 = vsel %vm669, %v643, 0
        %673 = vmatpush.bf16.msra.mxu0 0
        %674 = vmatpush.bf16.msra.mxu0 0
        %675 = vmatpush.bf16.msra.mxu0 0
        %676 = vmatpush.bf16.msra.mxu0 0
        %677 = vmatpush.bf16.msra.mxu0 %v664
        %678 = vmatpush.bf16.msra.mxu0 %v663
        %679 = vmatpush.bf16.msra.mxu0 %v662
        %680 = vmatpush.bf16.msra.mxu0 %v661
        %681 = vmatmul.bf16.gmra.mxu0 %v671
        %v682 = vpop.f32.mrf.mxu0
        %v683 = vadd.f32 %v644, %v682
        %v684 = vpop.f32.mrf.mxu0
        %v685 = vadd.f32 %v644, %v684
        %686 = vdwg.mxu0
        %v687 = vsel %vm390, %v683, 0.0
        %v688 = vsel %vm390, %v685, 0.0
        %v689 = vadd.f32 %v687, %v688
        %v690 = vrot.slane %v689, 4
        %v691 = vadd.f32 %v689, %v690
        %v692 = vrot.slane %v691, 2
        %v693 = vadd.f32 %v691, %v692
        %v694 = vrot.slane %v693, 1
        %v695 = vadd.f32 %v693, %v694
        %v696 = vmul.f32 %v695, %v406
        %v697 = vmul.f32 %v683, %v683
        %v698 = vmul.f32 %v685, %v685
        %v699 = vsel %vm390, %v697, 0.0
        %v700 = vsel %vm390, %v698, 0.0
        %v701 = vadd.f32 %v699, %v700
        %v702 = vrot.slane %v701, 4
        %v703 = vadd.f32 %v701, %v702
        %v704 = vrot.slane %v703, 2
        %v705 = vadd.f32 %v703, %v704
        %v706 = vrot.slane %v705, 1
        %v707 = vadd.f32 %v705, %v706
        %v708 = vmul.f32 %v707, %v406
        %v709 = vmul.f32 %v696, %v696
        %v710 = vsub.f32 %v708, %v709
        %v711 = vmax.f32 %v710, 0.0
        %v712 = vsub.f32 %v683, %v696
        %v713 = vsub.f32 %v685, %v696
        %v714 = vadd.f32 %v711, 0.001
        %v715 = vrsqrt.pop %v714
        %v716 = vmul.f32 %v715, %v714
        %v717 = vmul.f32 %v716, %v715
        %v718 = vmul.f32 0.5, %v717
        %v719 = vsub.f32 1.5, %v718
        %v720 = vmul.f32 %v715, %v719
        %vm721 = vweird.f32 %v714
        %vm722 = vweird.f32 %v715
        %vm723 = vmor %vm721, %vm722
        %v724 = vsel %vm723, %v715, %v720
        %v725 = vmul.f32 %v712, %v724
        %v726 = vmul.f32 %v713, %v724
        %v727 = vperm.slane %v631, 0
        %v728 = vmul.f32 %v725, %v727
        %v729 = vmul.f32 %v726, %v727
        %v730 = vperm.slane %v632, 0
        %v731 = vadd.f32 %v728, %v730
        %v732 = vadd.f32 %v729, %v730
        %v733 = vmax.f32 %v731, 0.0
        %v734 = vmax.f32 %v732, 0.0
        %v735 = vld [vmem:[#allocation8] sm:$0xf]
        %v736 = vld [vmem:[#allocation8 + $0x4] sm:$0xf]
        %v737 = vld [vmem:[#allocation8 + $0x8] sm:$0xf]
        %v738 = vld [vmem:[#allocation8 + $0xc] sm:$0xf]
        %v739 = vpack.c.bf16 %v734, %v733
        %v740 = vperm.slane %v633, 0
        %v745 = vunpack.c.l.b16 %v735
        %v746 = vunpack.c.l.b16 %v736
        %v747 = vunpack.c.l.b16 %v737
        %v748 = vunpack.c.l.b16 %v738
        %v749 = vpack.c.b16 %v746, %v745
        %v750 = vpack.c.b16 %v748, %v747
        %v754 = vsel %vm390, %v739, 0
        %756 = vmatpush.bf16.msra.mxu0 0
        %757 = vmatpush.bf16.msra.mxu0 0
        %758 = vmatpush.bf16.msra.mxu0 0
        %759 = vmatpush.bf16.msra.mxu0 0
        %760 = vmatpush.bf16.msra.mxu0 0
        %761 = vmatpush.bf16.msra.mxu0 0
        %762 = vmatpush.bf16.msra.mxu0 %v750
        %763 = vmatpush.bf16.msra.mxu0 %v749
        %764 = vmatmul.bf16.gmra.mxu0 %v754
        %v765 = vpop.f32.mrf.mxu0
        %v766 = vadd.f32 %v740, %v765
        %v767 = vpop.f32.mrf.mxu0
        %v768 = vadd.f32 %v740, %v767
        %769 = vdwg.mxu0
        %s770 = scalar_lea.vmem [#allocation8], 16
        %v771 = vld [vmem:[%s770] sm:$0xf]
        %v772 = vld [vmem:[%s770 + $0x4] sm:$0xf]
        %v773 = vld [vmem:[%s770 + $0x8] sm:$0xf]
        %v774 = vld [vmem:[%s770 + $0xc] sm:$0xf]
        %s775 = scalar_lea.vmem [#allocation8], 32
        %v776 = vld [vmem:[%s775] sm:$0xf]
        %v777 = vld [vmem:[%s775 + $0x4] sm:$0xf]
        %v778 = vld [vmem:[%s775 + $0x8] sm:$0xf]
        %v779 = vld [vmem:[%s775 + $0xc] sm:$0xf]
        %v780 = vpack.c.bf16 %v554, %v552
        %v785 = vunpack.c.l.b16 %v776
        %v786 = vunpack.c.l.b16 %v777
        %v787 = vunpack.c.l.b16 %v778
        %v788 = vunpack.c.l.b16 %v779
        %v789 = vpack.c.b16 %v786, %v785
        %v790 = vpack.c.b16 %v788, %v787
        %v794 = vsel %vm390, %v780, 0
        %796 = vmatpush.bf16.msra.mxu0 0
        %797 = vmatpush.bf16.msra.mxu0 0
        %798 = vmatpush.bf16.msra.mxu0 0
        %799 = vmatpush.bf16.msra.mxu0 0
        %800 = vmatpush.bf16.msra.mxu0 0
        %801 = vmatpush.bf16.msra.mxu0 0
        %802 = vmatpush.bf16.msra.mxu0 %v790
        %803 = vmatpush.bf16.msra.mxu0 %v789
        %804 = vmatmul.bf16.gmra.mxu0 %v794
        %v805 = vpop.f32.mrf.mxu0
        %v806 = vadd.f32 0.0, %v805
        %v807 = vpop.f32.mrf.mxu0
        %v808 = vadd.f32 0.0, %v807
        %809 = vdwg.mxu0
        %v812 = vunpack.c.l.b16 %v384
        %v813 = vunpack.c.l.b16 %v385
        %v814 = vpack.c.b16 %v813, %v812
        %v819 = vunpack.c.l.b16 %v771
        %v820 = vunpack.c.l.b16 %v772
        %v821 = vunpack.c.l.b16 %v773
        %v822 = vunpack.c.l.b16 %v774
        %v823 = vpack.c.b16 %v820, %v819
        %v824 = vpack.c.b16 %v822, %v821
        %v828 = vsel %vm390, %v814, 0
        %830 = vmatpush.bf16.msra.mxu0 0
        %831 = vmatpush.bf16.msra.mxu0 0
        %832 = vmatpush.bf16.msra.mxu0 0
        %833 = vmatpush.bf16.msra.mxu0 0
        %834 = vmatpush.bf16.msra.mxu0 0
        %835 = vmatpush.bf16.msra.mxu0 0
        %836 = vmatpush.bf16.msra.mxu0 %v824
        %837 = vmatpush.bf16.msra.mxu0 %v823
        %838 = vmatmul.bf16.gmra.mxu0 %v828
        %v839 = vpop.f32.mrf.mxu0
        %v840 = vadd.f32 %v806, %v839
        %v841 = vpop.f32.mrf.mxu0
        %v842 = vadd.f32 %v808, %v841
        %843 = vdwg.mxu0
        %v844 = vperm.slane %v634, 0
        %v845 = vadd.f32 %v840, %v844
        %v846 = vadd.f32 %v842, %v844
        %v847 = vadd.f32 %v766, %v845
        %v848 = vadd.f32 %v768, %v846
        %v849 = vld [vmem:[#allocation2 + $0x7] sm:$0x1]
        %v850 = vld [vmem:[#allocation2 + $0x8] sm:$0x1]
        %v851 = vld [vmem:[#allocation2 + $0x9] sm:$0x1]
        %v852 = vld [vmem:[#allocation2 + $0xa] sm:$0x1]
        %v853 = vld [vmem:[#allocation2 + $0xb] sm:$0x1]
        %v854 = vld [vmem:[#allocation2 + $0xc] sm:$0x1]
        %v855 = vsel %vm390, %v847, 0.0
        %v856 = vsel %vm390, %v848, 0.0
        %v857 = vadd.f32 %v855, %v856
        %v858 = vrot.slane %v857, 4
        %v859 = vadd.f32 %v857, %v858
        %v860 = vrot.slane %v859, 2
        %v861 = vadd.f32 %v859, %v860
        %v862 = vrot.slane %v861, 1
        %v863 = vadd.f32 %v861, %v862
        %v864 = vmul.f32 %v863, %v406
        %v865 = vmul.f32 %v847, %v847
        %v866 = vmul.f32 %v848, %v848
        %v867 = vsel %vm390, %v865, 0.0
        %v868 = vsel %vm390, %v866, 0.0
        %v869 = vadd.f32 %v867, %v868
        %v870 = vrot.slane %v869, 4
        %v871 = vadd.f32 %v869, %v870
        %v872 = vrot.slane %v871, 2
        %v873 = vadd.f32 %v871, %v872
        %v874 = vrot.slane %v873, 1
        %v875 = vadd.f32 %v873, %v874
        %v876 = vmul.f32 %v875, %v406
        %v877 = vmul.f32 %v864, %v864
        %v878 = vsub.f32 %v876, %v877
        %v879 = vmax.f32 %v878, 0.0
        %v880 = vsub.f32 %v847, %v864
        %v881 = vsub.f32 %v848, %v864
        %v882 = vadd.f32 %v879, 0.001
        %v883 = vrsqrt.pop %v882
        %v884 = vmul.f32 %v883, %v882
        %v885 = vmul.f32 %v884, %v883
        %v886 = vmul.f32 0.5, %v885
        %v887 = vsub.f32 1.5, %v886
        %v888 = vmul.f32 %v883, %v887
        %vm889 = vweird.f32 %v882
        %vm890 = vweird.f32 %v883
        %vm891 = vmor %vm889, %vm890
        %v892 = vsel %vm891, %v883, %v888
        %v893 = vmul.f32 %v880, %v892
        %v894 = vmul.f32 %v881, %v892
        %v895 = vperm.slane %v849, 0
        %v896 = vmul.f32 %v893, %v895
        %v897 = vmul.f32 %v894, %v895
        %v898 = vperm.slane %v850, 0
        %v899 = vadd.f32 %v896, %v898
        %v900 = vadd.f32 %v897, %v898
        %v901 = vmax.f32 %v899, 0.0
        %v902 = vmax.f32 %v900, 0.0
        %s903 = scalar_lea.vmem [#allocation8], 48
        %v904 = vld [vmem:[%s903] sm:$0xf]
        %v905 = vld [vmem:[%s903 + $0x4] sm:$0xf]
        %v906 = vld [vmem:[%s903 + $0x8] sm:$0xf]
        %v907 = vld [vmem:[%s903 + $0xc] sm:$0xf]
        %v908 = vpack.c.bf16 %v902, %v901
        %v909 = vperm.slane %v851, 0
        %v914 = vunpack.c.l.b16 %v904
        %v915 = vunpack.c.l.b16 %v905
        %v916 = vunpack.c.l.b16 %v906
        %v917 = vunpack.c.l.b16 %v907
        %v918 = vpack.c.b16 %v915, %v914
        %v919 = vpack.c.b16 %v917, %v916
        %v923 = vsel %vm390, %v908, 0
        %925 = vmatpush.bf16.msra.mxu0 0
        %926 = vmatpush.bf16.msra.mxu0 0
        %927 = vmatpush.bf16.msra.mxu0 0
        %928 = vmatpush.bf16.msra.mxu0 0
        %929 = vmatpush.bf16.msra.mxu0 0
        %930 = vmatpush.bf16.msra.mxu0 0
        %931 = vmatpush.bf16.msra.mxu0 %v919
        %932 = vmatpush.bf16.msra.mxu0 %v918
        %933 = vmatmul.bf16.gmra.mxu0 %v923
        %v934 = vpop.f32.mrf.mxu0
        %v935 = vadd.f32 %v909, %v934
        %v936 = vpop.f32.mrf.mxu0
        %v937 = vadd.f32 %v909, %v936
        %938 = vdwg.mxu0
        %v939 = vsel %vm390, %v935, 0.0
        %v940 = vsel %vm390, %v937, 0.0
        %v941 = vadd.f32 %v939, %v940
        %v942 = vrot.slane %v941, 4
        %v943 = vadd.f32 %v941, %v942
        %v944 = vrot.slane %v943, 2
        %v945 = vadd.f32 %v943, %v944
        %v946 = vrot.slane %v945, 1
        %v947 = vadd.f32 %v945, %v946
        %v948 = vmul.f32 %v947, %v406
        %v949 = vmul.f32 %v935, %v935
        %v950 = vmul.f32 %v937, %v937
        %v951 = vsel %vm390, %v949, 0.0
        %v952 = vsel %vm390, %v950, 0.0
        %v953 = vadd.f32 %v951, %v952
        %v954 = vrot.slane %v953, 4
        %v955 = vadd.f32 %v953, %v954
        %v956 = vrot.slane %v955, 2
        %v957 = vadd.f32 %v955, %v956
        %v958 = vrot.slane %v957, 1
        %v959 = vadd.f32 %v957, %v958
        %v960 = vmul.f32 %v959, %v406
        %v961 = vmul.f32 %v948, %v948
        %v962 = vsub.f32 %v960, %v961
        %v963 = vmax.f32 %v962, 0.0
        %v964 = vsub.f32 %v935, %v948
        %v965 = vsub.f32 %v937, %v948
        %v966 = vadd.f32 %v963, 0.001
        %v967 = vrsqrt.pop %v966
        %v968 = vmul.f32 %v967, %v966
        %v969 = vmul.f32 %v968, %v967
        %v970 = vmul.f32 0.5, %v969
        %v971 = vsub.f32 1.5, %v970
        %v972 = vmul.f32 %v967, %v971
        %vm973 = vweird.f32 %v966
        %vm974 = vweird.f32 %v967
        %vm975 = vmor %vm973, %vm974
        %v976 = vsel %vm975, %v967, %v972
        %v977 = vmul.f32 %v964, %v976
        %v978 = vmul.f32 %v965, %v976
        %v979 = vperm.slane %v852, 0
        %v980 = vmul.f32 %v977, %v979
        %v981 = vmul.f32 %v978, %v979
        %v982 = vperm.slane %v853, 0
        %v983 = vadd.f32 %v980, %v982
        %v984 = vadd.f32 %v981, %v982
        %v985 = vmax.f32 %v983, 0.0
        %v986 = vmax.f32 %v984, 0.0
        %s987 = scalar_lea.vmem [#allocation8], 64
        %v988 = vld [vmem:[%s987] sm:$0xf]
        %v989 = vld [vmem:[%s987 + $0x4] sm:$0xf]
        %v990 = vld [vmem:[%s987 + $0x8] sm:$0xf]
        %v991 = vld [vmem:[%s987 + $0xc] sm:$0xf]
        %v992 = vpack.c.bf16 %v986, %v985
        %v993 = vperm.slane %v854, 0
        %v998 = vunpack.c.l.b16 %v988
        %v999 = vunpack.c.l.b16 %v989
        %v1000 = vunpack.c.l.b16 %v990
        %v1001 = vunpack.c.l.b16 %v991
        %v1002 = vpack.c.b16 %v999, %v998
        %v1003 = vpack.c.b16 %v1001, %v1000
        %v1007 = vsel %vm390, %v992, 0
        %1009 = vmatpush.bf16.msra.mxu0 0
        %1010 = vmatpush.bf16.msra.mxu0 0
        %1011 = vmatpush.bf16.msra.mxu0 0
        %1012 = vmatpush.bf16.msra.mxu0 0
        %1013 = vmatpush.bf16.msra.mxu0 0
        %1014 = vmatpush.bf16.msra.mxu0 0
        %1015 = vmatpush.bf16.msra.mxu0 %v1003
        %1016 = vmatpush.bf16.msra.mxu0 %v1002
        %1017 = vmatmul.bf16.gmra.mxu0 %v1007
        %v1018 = vpop.f32.mrf.mxu0
        %v1019 = vadd.f32 %v993, %v1018
        %v1020 = vpop.f32.mrf.mxu0
        %v1021 = vadd.f32 %v993, %v1020
        %1022 = vdwg.mxu0
        %v1023 = vadd.f32 %v847, %v1019
        %v1024 = vadd.f32 %v848, %v1021
        %v1025 = vld [vmem:[#allocation2 + $0xd] sm:$0x1]
        %v1026 = vld [vmem:[#allocation2 + $0xe] sm:$0x1]
        %1028 = vset.pattern.permute.xlu0 0
        %1029 = vperm.xlu0 %1028, %v1026
        %v1030 = vpop.permute.xlu0 %1029
        %v1033 = vsel %vm390, %v1025, 0
        %v1036 = vsel %vm390, %v1023, 0
        %v1039 = vsel %vm390, %v1024, 0
        %1041 = vmatpush.xpose.msra.mxu0 0.0
        %1042 = vmatpush.xpose.msra.mxu0 0.0
        %1043 = vmatpush.xpose.msra.mxu0 0.0
        %1044 = vmatpush.xpose.msra.mxu0 0.0
        %1045 = vmatpush.xpose.msra.mxu0 0.0
        %1046 = vmatpush.xpose.msra.mxu0 0.0
        %1047 = vmatpush.xpose.msra.mxu0 0.0
        %1048 = vmatpush.xpose.msra.mxu0 0.0
        %1049 = vmatpush.xpose.msra.mxu0 0.0
        %1050 = vmatpush.xpose.msra.mxu0 0.0
        %1051 = vmatpush.xpose.msra.mxu0 0.0
        %1052 = vmatpush.xpose.msra.mxu0 0.0
        %1053 = vmatpush.xpose.msra.mxu0 0.0
        %1054 = vmatpush.xpose.msra.mxu0 0.0
        %1055 = vmatpush.xpose.msra.mxu0 %v1039
        %1056 = vmatpush.xpose.msra.mxu0 %v1036
        %1057 = vmatmul.f32.gmra.mxu0 %v1033
        %v1058 = vpop.f32.mrf.mxu0
        %v1059 = vadd.f32 %v1030, %v1058
        %1060 = vdwg.mxu0
        %vm1061 = vcmask 122880
        %1062 = vst.msk [vmem:[%s373] sm:$0x1] %vm1061, %v1059
        %s1063 = sand.u32 %s211, 1
        %s1064 = scalar_lea.sflag [#allocation4], %s1063
        %s1065 = sand.u32 %s211, 1
        %s1066 = scalar_lea.vmem [#allocation10], %s1065
        // Predicated region
        $region69: #{oanblock_forward.5} parent=51 // pred_check
          %p1067 = pneg %p221
        $region70: #{oanblock_forward.5} parent=51 // pred_check_branch
          %1069 = sbr.rel (%p1067) target = $region72
        $region71: #{oanblock_forward.5} parent=51 // pred_region
          %1071 = vsyncadd %s1064, 0
          %s1072 = scalar_lea.hbm %s8, %s25
          %s1074 = sshll.u32 %s1066, 4
          %s1075 = int_to_ptr.vmem [resolvable:$true] %s1074
          %s1076 = sshll.u32 %s1072, 4
          %s1077 = int_to_ptr.hbm [resolvable:$true] %s1076
          %1079 = dma.vmem_to_hbm [thread:$0]  %s1075, 16, %s1077, %s1064
        $region72: #{oanblock_forward.5} parent=51 // pred_fallthru
          _
      $region52: #{oanblock_forward.5} parent=5 // pred_fallthru
        _
      %p1080 = scmp.le.s32.totalorder 2, %s20
      // Predicated region
      $region73: #{oanblock_forward.5} parent=5 // pred_check
        %p1081 = pneg %p1080
      $region74: #{oanblock_forward.5} parent=5 // pred_check_branch
        %1083 = sbr.rel (%p1081) target = $region76
      $region75: #{oanblock_forward.5} parent=5 // pred_region
        %s1084 = ssub.s32 %s20, 2
        // Predicated region
        $region77: #{oanblock_forward.5} parent=75 // pred_check
          %p1085 = pneg %p227
        $region78: #{oanblock_forward.5} parent=75 // pred_check_branch
          %1087 = sbr.rel (%p1085) target = $region80
        $region79: #{oanblock_forward.5} parent=75 // pred_region
          %s1088 = sand.u32 %s212, 1
          %s1089 = scalar_lea.sflag [#allocation4], %s1088
          %s1090 = sand.u32 %s212, 1
          %s1091 = scalar_lea.vmem [#allocation10], %s1090
          %1093 = dma.done %s1089, 16
        $region80: #{oanblock_forward.5} parent=75 // pred_fallthru
          _
      $region76: #{oanblock_forward.5} parent=5 // pred_fallthru
        _
    $region6: #{oanblock_forward.5} parent=1 // loop_footer
      %s24 = sadd.s32 1, %s20
    $region7: #{oanblock_forward.5} parent=1 // loop_footer_branch
      %19 = sbr.rel target = $region3
    $region8: #{oanblock_forward.5} parent=1 // loop_exit
      _
    %1094 = vsyncpa [#allocation3], 1
    %s1095 = scalar_lea.sflag [#allocation3], 1
    %1096 = vsyncpa %s1095, 1
    %1097 = vsyncpa [#allocation6], 1
    %1098 = vsyncpa [#allocation9], 1
    %1099 = vsyncpa [#allocation4], 1
    %s1100 = scalar_lea.sflag [#allocation4], 1
    %1101 = vsyncpa %s1100, 1

</llo_original>
